<compile_context>
chip_gen: v5e
topology: v5e:2x2
jax: 0.10.0
libtpu: 0.0.40
codegen_flags: <defaults>
</compile_context>

<pallas_src>
import functools

import jax
import jax.numpy as jnp
import numpy as np
from jax.experimental import pallas as pl
from jax.experimental.pallas import tpu as pltpu

EPS = 1e-5  # nn.GroupNorm default eps


# ---------------------- fused per-path Pallas kernel ----------------------

def _bsrnn_path_kernel(z_ref, p_ref, gnw_ref, gnb_ref,
                       wih_ref, bih_ref, whhf_ref, whhb_ref,
                       wof_ref, wob_ref, bo_ref,
                       o_ref,
                       xp_scr, hf_scr, hb_scr):
    """GroupNorm -> biLSTM -> Linear + residual on one (T, tb, N) sample tile.

    z_ref   : (T, tb, N)  raw input (also the residual), time-major
    p_ref   : (N, N)      group-averaging matrix (includes 1/(cpg*T))
    gnw/gnb : (1, N)      GroupNorm affine
    wih_ref : (N, 8H)     [fwd | bwd] x [i, f, g, o] input projections
    bih_ref : (1, 8H)     combined b_ih + b_hh, same layout
    whhf/whhb: (H, 4H)    recurrent weights per direction
    wof/wob : (H, N)      output Linear weight split into fwd / bwd halves
    bo_ref  : (1, N)      output Linear bias
    o_ref   : (T, tb, N)  Linear(biLSTM(GroupNorm(z))) + z
    """
    T, TB, N = z_ref.shape
    H4 = whhf_ref.shape[1]
    H = H4 // 4
    f32 = jnp.float32
    sdt = xp_scr.dtype  # scratch storage dtype (f32 or bf16); compute stays f32

    # ---- GroupNorm statistics: two-pass (mean, then centered variance) ----
    z = z_ref[...].astype(f32)                                  # (T, TB, N)
    P = p_ref[...]
    mean_c = jnp.dot(jnp.sum(z, axis=0), P, preferred_element_type=f32)  # (TB, N)
    zc = z - mean_c[None]
    var_c = jnp.dot(jnp.sum(zc * zc, axis=0), P, preferred_element_type=f32)
    scale = jax.lax.rsqrt(var_c + EPS) * gnw_ref[...]           # (TB, N)
    shift = gnb_ref[...] - mean_c * scale                       # (TB, N)

    # ---- fused GroupNorm apply + ONE big input-projection matmul ----
    xn2d = (z * scale[None] + shift[None]).reshape(T * TB, N)
    xp2d = jnp.dot(xn2d, wih_ref[...].astype(f32),
                   preferred_element_type=f32) + bih_ref[...]
    xp_scr[...] = xp2d.reshape(T, TB, 2 * H4).astype(sdt)

    # ---- bidirectional recurrence (fwd and bwd interleaved) ----
    whh_f = whhf_ref[...].astype(f32)
    whh_b = whhb_ref[...].astype(f32)
    h0 = jnp.zeros((TB, H), f32)
    unroll = True if T <= 32 else 4   # don't fully unroll long recurrences

    def step(t, carry):
        h_f, c_f, h_b, c_b = carry
        tr = T - 1 - t
        # forward direction, timestep t
        g_f = (xp_scr[t][:, :H4].astype(f32)
               + jnp.dot(h_f, whh_f, preferred_element_type=f32))
        # backward direction, mirrored timestep (no reversed copy materialized)
        g_b = (xp_scr[tr][:, H4:].astype(f32)
               + jnp.dot(h_b, whh_b, preferred_element_type=f32))
        i_f = jax.nn.sigmoid(g_f[:, 0 * H:1 * H])
        f_f = jax.nn.sigmoid(g_f[:, 1 * H:2 * H])
        gg_f = jnp.tanh(g_f[:, 2 * H:3 * H])
        o_f = jax.nn.sigmoid(g_f[:, 3 * H:4 * H])
        c_f = f_f * c_f + i_f * gg_f
        h_f = o_f * jnp.tanh(c_f)
        hf_scr[t] = h_f.astype(sdt)
        i_b = jax.nn.sigmoid(g_b[:, 0 * H:1 * H])
        f_b = jax.nn.sigmoid(g_b[:, 1 * H:2 * H])
        gg_b = jnp.tanh(g_b[:, 2 * H:3 * H])
        o_b = jax.nn.sigmoid(g_b[:, 3 * H:4 * H])
        c_b = f_b * c_b + i_b * gg_b
        h_b = o_b * jnp.tanh(c_b)
        hb_scr[tr] = h_b.astype(sdt)
        return h_f, c_f, h_b, c_b

    jax.lax.fori_loop(0, T, step, (h0, h0, h0, h0), unroll=unroll)

    # ---- batched output Linear + bias + residual over ALL timesteps ----
    hf2d = hf_scr[...].astype(f32).reshape(T * TB, H)
    hb2d = hb_scr[...].astype(f32).reshape(T * TB, H)
    out = (jnp.dot(hf2d, wof_ref[...].astype(f32), preferred_element_type=f32)
           + jnp.dot(hb2d, wob_ref[...].astype(f32), preferred_element_type=f32)
           + bo_ref[...] + z.reshape(T * TB, N))
    o_ref[...] = out.reshape(T, TB, N).astype(o_ref.dtype)


# ------------------------------ tile planning -------------------------------

def _group_avg_matrix(N, groups, L):
    cpg = N // groups
    gid = np.arange(N) // cpg
    return jnp.asarray((gid[:, None] == gid[None, :]).astype(np.float32)
                       / float(cpg * L))


def _vmem_capacity_bytes():
    try:
        info = pltpu.get_tpu_info()
        for attr in ("vmem_capacity_bytes", "vmem_size_bytes", "vmem_bytes"):
            v = getattr(info, attr, None)
            if v:
                return int(v)
    except Exception:
        pass
    return 64 * 1024 * 1024   # conservative fallback: v7x per-TensorCore VMEM


def _plan_path(Bp, L, N, H, cap):
    """VMEM-budget-aware (tb, Bp_pad, scratch_dtype, vmem_limit_bytes)."""
    H4 = 4 * H
    budget = int(0.65 * cap)                 # headroom for compiler temps/spills
    # constant-index weight blocks (default double-buffered, f32)
    weight_bytes = 2 * 4 * (N * N + N * 2 * H4 + 2 * H4
                            + 2 * H * H4 + 2 * H * N + 3 * N)

    def rows_that_fit(itemsize):
        per_row = (2 * 2 * L * N * 4          # double-buffered z-in + o-out blocks (f32)
                   + L * 2 * H4 * itemsize    # xp_scr (hoisted input projections)
                   + 2 * L * H * itemsize)    # hf_scr + hb_scr
        return max((budget - weight_bytes) // per_row, 0)

    scratch_dtype = jnp.float32
    fit = rows_that_fit(4)
    if fit < 64:                              # f32 scratch too fat -> bf16 storage
        scratch_dtype = jnp.bfloat16
        fit = rows_that_fit(2)

    tb = int(max(8, min(fit - fit % 8, 256)))
    # guarantee >= 2 sample tiles (pipelining + v7x dual-TensorCore sharding)
    half = -(-Bp // 2)
    half = -(-half // 8) * 8
    tb = min(tb, max(8, half))
    Bp_pad = max(2 * tb, -(-Bp // tb) * tb)

    vmem_limit = int(max(32 * 2 ** 20, min(0.85 * cap, 110 * 2 ** 20)))
    return tb, Bp_pad, scratch_dtype, vmem_limit


# ------------------------------ kernel wrapper ------------------------------

def fused_path_pallas(z_tm, gn_w, gn_b, lstm, W_out, b_out, groups):
    # z_tm: (L, Bp, N) time-major. Returns Linear(biLSTM(GroupNorm(z))) + z.
    L, Bp, N = z_tm.shape
    H4 = lstm["whh_f"].shape[1]
    H = H4 // 4

    cap = _vmem_capacity_bytes()
    tb, Bp_pad, sdt, vmem_limit = _plan_path(Bp, L, N, H, cap)

    z_in = z_tm
    if Bp_pad != Bp:
        z_in = jnp.pad(z_tm, ((0, 0), (0, Bp_pad - Bp), (0, 0)))

    P = _group_avg_matrix(N, groups, L)
    wih_cat = jnp.concatenate([lstm["wih_f"], lstm["wih_b"]], axis=1)   # (N, 8H)
    bih_cat = jnp.concatenate([lstm["b_f"], lstm["b_b"]], axis=1)       # (1, 8H)
    w_out_f = W_out[:H]                                                 # (H, N)
    w_out_b = W_out[H:]                                                 # (H, N)

    const = lambda i: (0, 0)
    out = pl.pallas_call(
        _bsrnn_path_kernel,
        out_shape=jax.ShapeDtypeStruct((L, Bp_pad, N), jnp.float32),
        grid=(Bp_pad // tb,),
        in_specs=[
            pl.BlockSpec((L, tb, N), lambda i: (0, i, 0)),   # z (input + residual)
            pl.BlockSpec((N, N), const),                     # group-averaging matrix
            pl.BlockSpec((1, N), const),                     # GroupNorm weight
            pl.BlockSpec((1, N), const),                     # GroupNorm bias
            pl.BlockSpec((N, 2 * H4), const),                # W_ih fwd|bwd fused
            pl.BlockSpec((1, 2 * H4), const),                # b_ih+b_hh fused
            pl.BlockSpec((H, H4), const),                    # W_hh fwd
            pl.BlockSpec((H, H4), const),                    # W_hh bwd
            pl.BlockSpec((H, N), const),                     # W_out fwd half
            pl.BlockSpec((H, N), const),                     # W_out bwd half
            pl.BlockSpec((1, N), const),                     # b_out
        ],
        out_specs=pl.BlockSpec((L, tb, N), lambda i: (0, i, 0)),
        scratch_shapes=[
            pltpu.VMEM((L, tb, 2 * H4), sdt),                # hoisted input projections
            pltpu.VMEM((L, tb, H), sdt),                     # forward hidden states
            pltpu.VMEM((L, tb, H), sdt),                     # backward hidden states
        ],
        compiler_params=pltpu.CompilerParams(
            dimension_semantics=("parallel",),
            vmem_limit_bytes=vmem_limit),
    )(z_in, P, gn_w.reshape(1, N), gn_b.reshape(1, N),
      wih_cat, bih_cat, lstm["whh_f"], lstm["whh_b"],
      w_out_f, w_out_b, b_out.reshape(1, N))

    if Bp_pad != Bp:
        out = out[:, :Bp]
    return out


# ------------------------------ model (Pallas) ------------------------------

def block_forward_pallas(Zt, p, groups):
    # Zt: (T, B, K, N) time-major seq-path layout. Returns (T, B, K, N).
    T, B, K, N = Zt.shape
    # ---- sequence (time) path: samples = (b k), steps = t ----
    o_seq = fused_path_pallas(Zt.reshape(T, B * K, N), p["gn_w"], p["gn_b"],
                              p["seq_lstm"], p["seq_W"], p["seq_b"], groups)
    # single transpose straight into the band-path layout (K, B, T, N)
    Zb = jnp.transpose(o_seq.reshape(T, B, K, N), (2, 1, 0, 3))
    # ---- band path: samples = (b t), steps = k ----
    o_band = fused_path_pallas(Zb.reshape(K, B * T, N), p["gn_w"], p["gn_b"],
                               p["band_lstm"], p["band_W"], p["band_b"], groups)
    # single transpose back to the seq-path layout for the next block
    return jnp.transpose(o_band.reshape(K, B, T, N), (2, 1, 0, 3))


@functools.partial(jax.jit, static_argnames=("groups",))
def bsrnn_forward_pallas(Z, params, groups):
    # Keep the inter-block tensor in the kernel's time-major layout so each
    # path needs only one XLA transpose of Z.
    Zt = jnp.transpose(Z, (3, 0, 2, 1))              # (T, B, K, N)
    for p in params:
        Zt = block_forward_pallas(Zt, p, groups)
    return jnp.transpose(Zt, (1, 3, 2, 0))           # (B, N, K, T)


# ---------------------------- pure-JAX reference ----------------------------

def _groupnorm_ref(x, w, b, groups):
    Bp, N, L = x.shape
    cpg = N // groups
    xg = x.reshape(Bp, groups, cpg * L)
    mean = xg.mean(axis=-1, keepdims=True)
    var = xg.var(axis=-1, keepdims=True)
    xn = ((xg - mean) / jnp.sqrt(var + EPS)).reshape(Bp, N, L)
    return xn * w[None, :, None] + b[None, :, None]


def _lstm_dir_ref(x, wih, whh, b):
    # x: (Bp, T, N); wih: (N, 4H); whh: (H, 4H); b: (1, 4H); gate order [i,f,g,o].
    Bp, T, N = x.shape
    H = whh.shape[0]

    def step(carry, xt):
        h, c = carry
        g = xt @ wih + h @ whh + b
        i = jax.nn.sigmoid(g[:, :H])
        f = jax.nn.sigmoid(g[:, H:2 * H])
        gg = jnp.tanh(g[:, 2 * H:3 * H])
        o = jax.nn.sigmoid(g[:, 3 * H:])
        c = f * c + i * gg
        h = o * jnp.tanh(c)
        return (h, c), h

    init = (jnp.zeros((Bp, H), jnp.float32), jnp.zeros((Bp, H), jnp.float32))
    _, hs = jax.lax.scan(step, init, jnp.transpose(x, (1, 0, 2)))
    return jnp.transpose(hs, (1, 0, 2))


def _bilstm_ref(x, p):
    hf = _lstm_dir_ref(x, p["wih_f"], p["whh_f"], p["b_f"])
    hb = _lstm_dir_ref(x[:, ::-1], p["wih_b"], p["whh_b"], p["b_b"])[:, ::-1]
    return jnp.concatenate([hf, hb], axis=-1)


def block_forward_ref(Z, p, groups):
    B, N, K, T = Z.shape
    H2 = p["seq_W"].shape[0]
    Xs = jnp.transpose(Z, (0, 2, 1, 3)).reshape(B * K, N, T)
    Xs = _groupnorm_ref(Xs, p["gn_w"], p["gn_b"], groups)
    Xs = jnp.transpose(Xs, (0, 2, 1))
    Hs = _bilstm_ref(Xs, p["seq_lstm"])
    res_s = jnp.transpose(Z, (0, 2, 3, 1)).reshape(B * K * T, N)
    Os = Hs.reshape(B * K * T, H2) @ p["seq_W"] + p["seq_b"][None, :] + res_s
    Z = jnp.transpose(Os.reshape(B, K, T, N), (0, 3, 1, 2))
    Xb = jnp.transpose(Z, (0, 3, 1, 2)).reshape(B * T, N, K)
    Xb = _groupnorm_ref(Xb, p["gn_w"], p["gn_b"], groups)
    Xb = jnp.transpose(Xb, (0, 2, 1))
    Hb = _bilstm_ref(Xb, p["band_lstm"])
    res_b = jnp.transpose(Z, (0, 3, 2, 1)).reshape(B * T * K, N)
    Ob = Hb.reshape(B * T * K, H2) @ p["band_W"] + p["band_b"][None, :] + res_b
    return jnp.transpose(Ob.reshape(B, T, K, N), (0, 3, 2, 1))


def bsrnn_forward_ref(Z, params, groups):
    for p in params:
        Z = block_forward_ref(Z, p, groups)
    return Z


# ------------------------------- param init --------------------------------

def init_params(key, layers, N, H):
    # Deterministic synthetic init (shapes follow the nn.Module __init__).
    # LSTM weights stored gate-fused: wih (N, 4H), whh (H, 4H), bias (1, 4H)
    # with the combined b_ih + b_hh, gate order [i, f, g, o].
    params = []
    s_lstm = 1.0 / float(np.sqrt(H))
    s_lin = 1.0 / float(np.sqrt(2 * H))

    def u(k, shape, s):
        return jax.random.uniform(k, shape, jnp.float32, -s, s)

    for lk in jax.random.split(key, layers):
        ks = jax.random.split(lk, 16)
        p = dict(
            gn_w=jnp.ones((N,), jnp.float32),       # nn.GroupNorm default affine
            gn_b=jnp.zeros((N,), jnp.float32),
            seq_lstm=dict(
                wih_f=u(ks[0], (N, 4 * H), s_lstm), whh_f=u(ks[1], (H, 4 * H), s_lstm),
                b_f=u(ks[2], (1, 4 * H), s_lstm),
                wih_b=u(ks[3], (N, 4 * H), s_lstm), whh_b=u(ks[4], (H, 4 * H), s_lstm),
                b_b=u(ks[5], (1, 4 * H), s_lstm)),
            seq_W=u(ks[6], (2 * H, N), s_lin),
            seq_b=u(ks[7], (N,), s_lin),
            band_lstm=dict(
                wih_f=u(ks[8], (N, 4 * H), s_lstm), whh_f=u(ks[9], (H, 4 * H), s_lstm),
                b_f=u(ks[10], (1, 4 * H), s_lstm),
                wih_b=u(ks[11], (N, 4 * H), s_lstm), whh_b=u(ks[12], (H, 4 * H), s_lstm),
                b_b=u(ks[13], (1, 4 * H), s_lstm)),
            band_W=u(ks[14], (2 * H, N), s_lin),
            band_b=u(ks[15], (N,), s_lin),
        )
        params.append(p)
    return params


# ----------------------------------- main -----------------------------------

if __name__ == "__main__":
    B, N, K, T = 2, 16, 8, 8        # batch, channels, bands, time
    H = 32                          # LSTM hidden size (bidirectional -> 2H)
    groups = 8
    layers = 2

    key = jax.random.PRNGKey(0)
    kz, kp = jax.random.split(key)
    Z = jax.random.normal(kz, (B, N, K, T), jnp.float32)
    params = init_params(kp, layers, N, H)

    out = bsrnn_forward_pallas(Z, params, groups)
    out = jax.block_until_ready(out)
    assert out.shape == (B, N, K, T)

    ref = bsrnn_forward_ref(Z, params, groups)
    np.testing.assert_allclose(np.asarray(out), np.asarray(ref), rtol=2e-2, atol=2e-2)

    print("KERNEL_OK")
</pallas_src>

<mosaic_0001>
module attributes {stable_mosaic.version = 11 : i64} {
  func.func @_bsrnn_path_kernel(%arg0: i32, %arg1: memref<8x8x16xf32, #tpu.memory_space<vmem>>, %arg2: memref<16x16xf32, #tpu.memory_space<vmem>>, %arg3: memref<1x16xf32, #tpu.memory_space<vmem>>, %arg4: memref<1x16xf32, #tpu.memory_space<vmem>>, %arg5: memref<16x256xf32, #tpu.memory_space<vmem>>, %arg6: memref<1x256xf32, #tpu.memory_space<vmem>>, %arg7: memref<32x128xf32, #tpu.memory_space<vmem>>, %arg8: memref<32x128xf32, #tpu.memory_space<vmem>>, %arg9: memref<32x16xf32, #tpu.memory_space<vmem>>, %arg10: memref<32x16xf32, #tpu.memory_space<vmem>>, %arg11: memref<1x16xf32, #tpu.memory_space<vmem>>, %arg12: memref<8x8x16xf32, #tpu.memory_space<vmem>>, %arg13: memref<8x8x256xf32, #tpu.memory_space<vmem>>, %arg14: memref<8x8x32xf32, #tpu.memory_space<vmem>>, %arg15: memref<8x8x32xf32, #tpu.memory_space<vmem>>) attributes {dimension_semantics = [#tpu.dimension_semantics<parallel>], iteration_bounds = array<i64: 2>, scalar_prefetch = 0 : i64, scratch_operands = 3 : i64, tpu.core_type = #tpu.core_type<tc>, window_params = [{transform_indices = @transform_0, window_bounds = array<i64: 8, 8, 16>}, {pipeline_mode = #tpu.pipeline_mode<synchronous>, transform_indices = @transform_1, window_bounds = array<i64: 16, 16>}, {pipeline_mode = #tpu.pipeline_mode<synchronous>, transform_indices = @transform_2, window_bounds = array<i64: 1, 16>}, {pipeline_mode = #tpu.pipeline_mode<synchronous>, transform_indices = @transform_3, window_bounds = array<i64: 1, 16>}, {pipeline_mode = #tpu.pipeline_mode<synchronous>, transform_indices = @transform_4, window_bounds = array<i64: 16, 256>}, {pipeline_mode = #tpu.pipeline_mode<synchronous>, transform_indices = @transform_5, window_bounds = array<i64: 1, 256>}, {pipeline_mode = #tpu.pipeline_mode<synchronous>, transform_indices = @transform_6, window_bounds = array<i64: 32, 128>}, {pipeline_mode = #tpu.pipeline_mode<synchronous>, transform_indices = @transform_7, window_bounds = array<i64: 32, 128>}, {pipeline_mode = #tpu.pipeline_mode<synchronous>, transform_indices = @transform_8, window_bounds = array<i64: 32, 16>}, {pipeline_mode = #tpu.pipeline_mode<synchronous>, transform_indices = @transform_9, window_bounds = array<i64: 32, 16>}, {pipeline_mode = #tpu.pipeline_mode<synchronous>, transform_indices = @transform_10, window_bounds = array<i64: 1, 16>}, {transform_indices = @transform_11, window_bounds = array<i64: 8, 8, 16>}]} {
    %c0 = arith.constant 0 : index
    %c0_0 = arith.constant 0 : index
    %c0_1 = arith.constant 0 : index
    %0 = vector.load %arg1[%c0, %c0_0, %c0_1] : memref<8x8x16xf32, #tpu.memory_space<vmem>>, vector<8x8x16xf32>
    %c0_2 = arith.constant 0 : index
    %c0_3 = arith.constant 0 : index
    %1 = vector.load %arg2[%c0_2, %c0_3] : memref<16x16xf32, #tpu.memory_space<vmem>>, vector<16x16xf32>
    %cst = arith.constant dense<0.000000e+00> : vector<8x16xf32>
    %2 = vector.multi_reduction <add>, %0, %cst [0] : vector<8x8x16xf32> to vector<8x16xf32>
    %cst_4 = arith.constant dense<0.000000e+00> : vector<8x16xf32>
    %3 = tpu.matmul %2, %1, %cst_4 {dimension_numbers = #tpu.dot_dimension_numbers<[1], [0], [0], [1], [0, 0, 1, 1], [], []>} : vector<8x16xf32>, vector<16x16xf32>, vector<8x16xf32> -> vector<8x16xf32>
    %4 = vector.shape_cast %3 : vector<8x16xf32> to vector<1x8x16xf32>
    %5 = vector.broadcast %4 : vector<1x8x16xf32> to vector<8x8x16xf32>
    %6 = arith.subf %0, %5 : vector<8x8x16xf32>
    %7 = arith.mulf %6, %6 : vector<8x8x16xf32>
    %cst_5 = arith.constant dense<0.000000e+00> : vector<8x16xf32>
    %8 = vector.multi_reduction <add>, %7, %cst_5 [0] : vector<8x8x16xf32> to vector<8x16xf32>
    %cst_6 = arith.constant dense<0.000000e+00> : vector<8x16xf32>
    %9 = tpu.matmul %8, %1, %cst_6 {dimension_numbers = #tpu.dot_dimension_numbers<[1], [0], [0], [1], [0, 0, 1, 1], [], []>} : vector<8x16xf32>, vector<16x16xf32>, vector<8x16xf32> -> vector<8x16xf32>
    %cst_7 = arith.constant 9.99999974E-6 : f32
    %10 = vector.broadcast %cst_7 : f32 to vector<8x16xf32>
    %11 = arith.addf %9, %10 : vector<8x16xf32>
    %12 = math.rsqrt %11 : vector<8x16xf32>
    %c0_8 = arith.constant 0 : index
    %c0_9 = arith.constant 0 : index
    %13 = vector.load %arg3[%c0_8, %c0_9] : memref<1x16xf32, #tpu.memory_space<vmem>>, vector<1x16xf32>
    %14 = vector.broadcast %13 : vector<1x16xf32> to vector<8x16xf32>
    %15 = arith.mulf %12, %14 : vector<8x16xf32>
    %c0_10 = arith.constant 0 : index
    %c0_11 = arith.constant 0 : index
    %16 = vector.load %arg4[%c0_10, %c0_11] : memref<1x16xf32, #tpu.memory_space<vmem>>, vector<1x16xf32>
    %17 = arith.mulf %3, %15 : vector<8x16xf32>
    %18 = vector.broadcast %16 : vector<1x16xf32> to vector<8x16xf32>
    %19 = arith.subf %18, %17 : vector<8x16xf32>
    %20 = vector.shape_cast %15 : vector<8x16xf32> to vector<1x8x16xf32>
    %21 = vector.broadcast %20 : vector<1x8x16xf32> to vector<8x8x16xf32>
    %22 = arith.mulf %0, %21 : vector<8x8x16xf32>
    %23 = vector.shape_cast %19 : vector<8x16xf32> to vector<1x8x16xf32>
    %24 = vector.broadcast %23 : vector<1x8x16xf32> to vector<8x8x16xf32>
    %25 = arith.addf %22, %24 : vector<8x8x16xf32>
    %26 = vector.shape_cast %25 : vector<8x8x16xf32> to vector<64x16xf32>
    %c0_12 = arith.constant 0 : index
    %c0_13 = arith.constant 0 : index
    %27 = vector.load %arg5[%c0_12, %c0_13] : memref<16x256xf32, #tpu.memory_space<vmem>>, vector<16x256xf32>
    %cst_14 = arith.constant dense<0.000000e+00> : vector<64x256xf32>
    %28 = tpu.matmul %26, %27, %cst_14 {dimension_numbers = #tpu.dot_dimension_numbers<[1], [0], [0], [1], [0, 0, 1, 1], [], []>} : vector<64x16xf32>, vector<16x256xf32>, vector<64x256xf32> -> vector<64x256xf32>
    %c0_15 = arith.constant 0 : index
    %c0_16 = arith.constant 0 : index
    %29 = vector.load %arg6[%c0_15, %c0_16] : memref<1x256xf32, #tpu.memory_space<vmem>>, vector<1x256xf32>
    %30 = vector.broadcast %29 : vector<1x256xf32> to vector<64x256xf32>
    %31 = arith.addf %28, %30 : vector<64x256xf32>
    %32 = vector.shape_cast %31 : vector<64x256xf32> to vector<8x8x256xf32>
    %c0_17 = arith.constant 0 : index
    %c0_18 = arith.constant 0 : index
    %c0_19 = arith.constant 0 : index
    %33 = vector.load %arg13[%c0_17, %c0_18, %c0_19] : memref<8x8x256xf32, #tpu.memory_space<vmem>>, vector<8x8x256xf32>
    tpu.vector_store %arg13[%c0_17, %c0_18, %c0_19], %32 {strides = array<i32>} : memref<8x8x256xf32, #tpu.memory_space<vmem>>, vector<8x8x256xf32>,
    %c0_20 = arith.constant 0 : index
    %c0_21 = arith.constant 0 : index
    %34 = vector.load %arg7[%c0_20, %c0_21] : memref<32x128xf32, #tpu.memory_space<vmem>>, vector<32x128xf32>
    %c0_22 = arith.constant 0 : index
    %c0_23 = arith.constant 0 : index
    %35 = vector.load %arg8[%c0_22, %c0_23] : memref<32x128xf32, #tpu.memory_space<vmem>>, vector<32x128xf32>
    %cst_24 = arith.constant 0.000000e+00 : f32
    %36 = vector.broadcast %cst_24 : f32 to vector<8x32xf32>
    %c0_i32 = arith.constant 0 : i32
    %c7_i32 = arith.constant 7 : i32
    %37 = arith.subi %c7_i32, %c0_i32 : i32
    %38 = arith.index_cast %c0_i32 : i32 to index
    %c0_25 = arith.constant 0 : index
    %c0_26 = arith.constant 0 : index
    %39 = vector.load %arg13[%38, %c0_25, %c0_26] : memref<8x8x256xf32, #tpu.memory_space<vmem>>, vector<1x8x256xf32>
    %40 = vector.shape_cast %39 : vector<1x8x256xf32> to vector<8x256xf32>
    %41 = vector.extract_strided_slice %40 {offsets = [0, 0], sizes = [8, 128], strides = [1, 1]} : vector<8x256xf32> to vector<8x128xf32>
    %cst_27 = arith.constant dense<0.000000e+00> : vector<8x128xf32>
    %42 = tpu.matmul %36, %34, %cst_27 {dimension_numbers = #tpu.dot_dimension_numbers<[1], [0], [0], [1], [0, 0, 1, 1], [], []>} : vector<8x32xf32>, vector<32x128xf32>, vector<8x128xf32> -> vector<8x128xf32>
    %43 = arith.addf %41, %42 : vector<8x128xf32>
    %44 = arith.index_cast %37 : i32 to index
    %c0_28 = arith.constant 0 : index
    %c0_29 = arith.constant 0 : index
    %45 = vector.load %arg13[%44, %c0_28, %c0_29] : memref<8x8x256xf32, #tpu.memory_space<vmem>>, vector<1x8x256xf32>
    %46 = vector.shape_cast %45 : vector<1x8x256xf32> to vector<8x256xf32>
    %47 = vector.extract_strided_slice %46 {offsets = [0, 128], sizes = [8, 128], strides = [1, 1]} : vector<8x256xf32> to vector<8x128xf32>
    %cst_30 = arith.constant dense<0.000000e+00> : vector<8x128xf32>
    %48 = tpu.matmul %36, %35, %cst_30 {dimension_numbers = #tpu.dot_dimension_numbers<[1], [0], [0], [1], [0, 0, 1, 1], [], []>} : vector<8x32xf32>, vector<32x128xf32>, vector<8x128xf32> -> vector<8x128xf32>
    %49 = arith.addf %47, %48 : vector<8x128xf32>
    %50 = vector.extract_strided_slice %43 {offsets = [0, 0], sizes = [8, 32], strides = [1, 1]} : vector<8x128xf32> to vector<8x32xf32>
    %51 = arith.negf %50 : vector<8x32xf32>
    %52 = math.exp %51 : vector<8x32xf32>
    %cst_31 = arith.constant 1.000000e+00 : f32
    %53 = vector.broadcast %cst_31 : f32 to vector<8x32xf32>
    %54 = arith.addf %53, %52 : vector<8x32xf32>
    %55 = arith.divf %53, %54 : vector<8x32xf32>
    %56 = vector.extract_strided_slice %43 {offsets = [0, 32], sizes = [8, 32], strides = [1, 1]} : vector<8x128xf32> to vector<8x32xf32>
    %57 = arith.negf %56 : vector<8x32xf32>
    %58 = math.exp %57 : vector<8x32xf32>
    %cst_32 = arith.constant 1.000000e+00 : f32
    %59 = vector.broadcast %cst_32 : f32 to vector<8x32xf32>
    %60 = arith.addf %59, %58 : vector<8x32xf32>
    %61 = arith.divf %59, %60 : vector<8x32xf32>
    %62 = vector.extract_strided_slice %43 {offsets = [0, 64], sizes = [8, 32], strides = [1, 1]} : vector<8x128xf32> to vector<8x32xf32>
    %63 = math.tanh %62 : vector<8x32xf32>
    %64 = vector.extract_strided_slice %43 {offsets = [0, 96], sizes = [8, 32], strides = [1, 1]} : vector<8x128xf32> to vector<8x32xf32>
    %65 = arith.negf %64 : vector<8x32xf32>
    %66 = math.exp %65 : vector<8x32xf32>
    %cst_33 = arith.constant 1.000000e+00 : f32
    %67 = vector.broadcast %cst_33 : f32 to vector<8x32xf32>
    %68 = arith.addf %67, %66 : vector<8x32xf32>
    %69 = arith.divf %67, %68 : vector<8x32xf32>
    %70 = arith.mulf %61, %36 : vector<8x32xf32>
    %71 = arith.mulf %55, %63 : vector<8x32xf32>
    %72 = arith.addf %70, %71 : vector<8x32xf32>
    %73 = math.tanh %72 : vector<8x32xf32>
    %74 = arith.mulf %69, %73 : vector<8x32xf32>
    %75 = arith.index_cast %c0_i32 : i32 to index
    %c0_34 = arith.constant 0 : index
    %c0_35 = arith.constant 0 : index
    %76 = vector.load %arg14[%75, %c0_34, %c0_35] : memref<8x8x32xf32, #tpu.memory_space<vmem>>, vector<1x8x32xf32>
    %77 = vector.shape_cast %76 : vector<1x8x32xf32> to vector<8x32xf32>
    %78 = vector.shape_cast %74 : vector<8x32xf32> to vector<1x8x32xf32>
    tpu.vector_store %arg14[%75, %c0_34, %c0_35], %78 {strides = array<i32>} : memref<8x8x32xf32, #tpu.memory_space<vmem>>, vector<1x8x32xf32>,
    %79 = vector.extract_strided_slice %49 {offsets = [0, 0], sizes = [8, 32], strides = [1, 1]} : vector<8x128xf32> to vector<8x32xf32>
    %80 = arith.negf %79 : vector<8x32xf32>
    %81 = math.exp %80 : vector<8x32xf32>
    %cst_36 = arith.constant 1.000000e+00 : f32
    %82 = vector.broadcast %cst_36 : f32 to vector<8x32xf32>
    %83 = arith.addf %82, %81 : vector<8x32xf32>
    %84 = arith.divf %82, %83 : vector<8x32xf32>
    %85 = vector.extract_strided_slice %49 {offsets = [0, 32], sizes = [8, 32], strides = [1, 1]} : vector<8x128xf32> to vector<8x32xf32>
    %86 = arith.negf %85 : vector<8x32xf32>
    %87 = math.exp %86 : vector<8x32xf32>
    %cst_37 = arith.constant 1.000000e+00 : f32
    %88 = vector.broadcast %cst_37 : f32 to vector<8x32xf32>
    %89 = arith.addf %88, %87 : vector<8x32xf32>
    %90 = arith.divf %88, %89 : vector<8x32xf32>
    %91 = vector.extract_strided_slice %49 {offsets = [0, 64], sizes = [8, 32], strides = [1, 1]} : vector<8x128xf32> to vector<8x32xf32>
    %92 = math.tanh %91 : vector<8x32xf32>
    %93 = vector.extract_strided_slice %49 {offsets = [0, 96], sizes = [8, 32], strides = [1, 1]} : vector<8x128xf32> to vector<8x32xf32>
    %94 = arith.negf %93 : vector<8x32xf32>
    %95 = math.exp %94 : vector<8x32xf32>
    %cst_38 = arith.constant 1.000000e+00 : f32
    %96 = vector.broadcast %cst_38 : f32 to vector<8x32xf32>
    %97 = arith.addf %96, %95 : vector<8x32xf32>
    %98 = arith.divf %96, %97 : vector<8x32xf32>
    %99 = arith.mulf %90, %36 : vector<8x32xf32>
    %100 = arith.mulf %84, %92 : vector<8x32xf32>
    %101 = arith.addf %99, %100 : vector<8x32xf32>
    %102 = math.tanh %101 : vector<8x32xf32>
    %103 = arith.mulf %98, %102 : vector<8x32xf32>
    %104 = arith.index_cast %37 : i32 to index
    %c0_39 = arith.constant 0 : index
    %c0_40 = arith.constant 0 : index
    %105 = vector.load %arg15[%104, %c0_39, %c0_40] : memref<8x8x32xf32, #tpu.memory_space<vmem>>, vector<1x8x32xf32>
    %106 = vector.shape_cast %105 : vector<1x8x32xf32> to vector<8x32xf32>
    %107 = vector.shape_cast %103 : vector<8x32xf32> to vector<1x8x32xf32>
    tpu.vector_store %arg15[%104, %c0_39, %c0_40], %107 {strides = array<i32>} : memref<8x8x32xf32, #tpu.memory_space<vmem>>, vector<1x8x32xf32>,
    %c1_i32 = arith.constant 1 : i32
    %c7_i32_41 = arith.constant 7 : i32
    %108 = arith.subi %c7_i32_41, %c1_i32 : i32
    %109 = arith.index_cast %c1_i32 : i32 to index
    %c0_42 = arith.constant 0 : index
    %c0_43 = arith.constant 0 : index
    %110 = vector.load %arg13[%109, %c0_42, %c0_43] : memref<8x8x256xf32, #tpu.memory_space<vmem>>, vector<1x8x256xf32>
    %111 = vector.shape_cast %110 : vector<1x8x256xf32> to vector<8x256xf32>
    %112 = vector.extract_strided_slice %111 {offsets = [0, 0], sizes = [8, 128], strides = [1, 1]} : vector<8x256xf32> to vector<8x128xf32>
    %cst_44 = arith.constant dense<0.000000e+00> : vector<8x128xf32>
    %113 = tpu.matmul %74, %34, %cst_44 {dimension_numbers = #tpu.dot_dimension_numbers<[1], [0], [0], [1], [0, 0, 1, 1], [], []>} : vector<8x32xf32>, vector<32x128xf32>, vector<8x128xf32> -> vector<8x128xf32>
    %114 = arith.addf %112, %113 : vector<8x128xf32>
    %115 = arith.index_cast %108 : i32 to index
    %c0_45 = arith.constant 0 : index
    %c0_46 = arith.constant 0 : index
    %116 = vector.load %arg13[%115, %c0_45, %c0_46] : memref<8x8x256xf32, #tpu.memory_space<vmem>>, vector<1x8x256xf32>
    %117 = vector.shape_cast %116 : vector<1x8x256xf32> to vector<8x256xf32>
    %118 = vector.extract_strided_slice %117 {offsets = [0, 128], sizes = [8, 128], strides = [1, 1]} : vector<8x256xf32> to vector<8x128xf32>
    %cst_47 = arith.constant dense<0.000000e+00> : vector<8x128xf32>
    %119 = tpu.matmul %103, %35, %cst_47 {dimension_numbers = #tpu.dot_dimension_numbers<[1], [0], [0], [1], [0, 0, 1, 1], [], []>} : vector<8x32xf32>, vector<32x128xf32>, vector<8x128xf32> -> vector<8x128xf32>
    %120 = arith.addf %118, %119 : vector<8x128xf32>
    %121 = vector.extract_strided_slice %114 {offsets = [0, 0], sizes = [8, 32], strides = [1, 1]} : vector<8x128xf32> to vector<8x32xf32>
    %122 = arith.negf %121 : vector<8x32xf32>
    %123 = math.exp %122 : vector<8x32xf32>
    %cst_48 = arith.constant 1.000000e+00 : f32
    %124 = vector.broadcast %cst_48 : f32 to vector<8x32xf32>
    %125 = arith.addf %124, %123 : vector<8x32xf32>
    %126 = arith.divf %124, %125 : vector<8x32xf32>
    %127 = vector.extract_strided_slice %114 {offsets = [0, 32], sizes = [8, 32], strides = [1, 1]} : vector<8x128xf32> to vector<8x32xf32>
    %128 = arith.negf %127 : vector<8x32xf32>
    %129 = math.exp %128 : vector<8x32xf32>
    %cst_49 = arith.constant 1.000000e+00 : f32
    %130 = vector.broadcast %cst_49 : f32 to vector<8x32xf32>
    %131 = arith.addf %130, %129 : vector<8x32xf32>
    %132 = arith.divf %130, %131 : vector<8x32xf32>
    %133 = vector.extract_strided_slice %114 {offsets = [0, 64], sizes = [8, 32], strides = [1, 1]} : vector<8x128xf32> to vector<8x32xf32>
    %134 = math.tanh %133 : vector<8x32xf32>
    %135 = vector.extract_strided_slice %114 {offsets = [0, 96], sizes = [8, 32], strides = [1, 1]} : vector<8x128xf32> to vector<8x32xf32>
    %136 = arith.negf %135 : vector<8x32xf32>
    %137 = math.exp %136 : vector<8x32xf32>
    %cst_50 = arith.constant 1.000000e+00 : f32
    %138 = vector.broadcast %cst_50 : f32 to vector<8x32xf32>
    %139 = arith.addf %138, %137 : vector<8x32xf32>
    %140 = arith.divf %138, %139 : vector<8x32xf32>
    %141 = arith.mulf %132, %72 : vector<8x32xf32>
    %142 = arith.mulf %126, %134 : vector<8x32xf32>
    %143 = arith.addf %141, %142 : vector<8x32xf32>
    %144 = math.tanh %143 : vector<8x32xf32>
    %145 = arith.mulf %140, %144 : vector<8x32xf32>
    %146 = arith.index_cast %c1_i32 : i32 to index
    %c0_51 = arith.constant 0 : index
    %c0_52 = arith.constant 0 : index
    %147 = vector.load %arg14[%146, %c0_51, %c0_52] : memref<8x8x32xf32, #tpu.memory_space<vmem>>, vector<1x8x32xf32>
    %148 = vector.shape_cast %147 : vector<1x8x32xf32> to vector<8x32xf32>
    %149 = vector.shape_cast %145 : vector<8x32xf32> to vector<1x8x32xf32>
    tpu.vector_store %arg14[%146, %c0_51, %c0_52], %149 {strides = array<i32>} : memref<8x8x32xf32, #tpu.memory_space<vmem>>, vector<1x8x32xf32>,
    %150 = vector.extract_strided_slice %120 {offsets = [0, 0], sizes = [8, 32], strides = [1, 1]} : vector<8x128xf32> to vector<8x32xf32>
    %151 = arith.negf %150 : vector<8x32xf32>
    %152 = math.exp %151 : vector<8x32xf32>
    %cst_53 = arith.constant 1.000000e+00 : f32
    %153 = vector.broadcast %cst_53 : f32 to vector<8x32xf32>
    %154 = arith.addf %153, %152 : vector<8x32xf32>
    %155 = arith.divf %153, %154 : vector<8x32xf32>
    %156 = vector.extract_strided_slice %120 {offsets = [0, 32], sizes = [8, 32], strides = [1, 1]} : vector<8x128xf32> to vector<8x32xf32>
    %157 = arith.negf %156 : vector<8x32xf32>
    %158 = math.exp %157 : vector<8x32xf32>
    %cst_54 = arith.constant 1.000000e+00 : f32
    %159 = vector.broadcast %cst_54 : f32 to vector<8x32xf32>
    %160 = arith.addf %159, %158 : vector<8x32xf32>
    %161 = arith.divf %159, %160 : vector<8x32xf32>
    %162 = vector.extract_strided_slice %120 {offsets = [0, 64], sizes = [8, 32], strides = [1, 1]} : vector<8x128xf32> to vector<8x32xf32>
    %163 = math.tanh %162 : vector<8x32xf32>
    %164 = vector.extract_strided_slice %120 {offsets = [0, 96], sizes = [8, 32], strides = [1, 1]} : vector<8x128xf32> to vector<8x32xf32>
    %165 = arith.negf %164 : vector<8x32xf32>
    %166 = math.exp %165 : vector<8x32xf32>
    %cst_55 = arith.constant 1.000000e+00 : f32
    %167 = vector.broadcast %cst_55 : f32 to vector<8x32xf32>
    %168 = arith.addf %167, %166 : vector<8x32xf32>
    %169 = arith.divf %167, %168 : vector<8x32xf32>
    %170 = arith.mulf %161, %101 : vector<8x32xf32>
    %171 = arith.mulf %155, %163 : vector<8x32xf32>
    %172 = arith.addf %170, %171 : vector<8x32xf32>
    %173 = math.tanh %172 : vector<8x32xf32>
    %174 = arith.mulf %169, %173 : vector<8x32xf32>
    %175 = arith.index_cast %108 : i32 to index
    %c0_56 = arith.constant 0 : index
    %c0_57 = arith.constant 0 : index
    %176 = vector.load %arg15[%175, %c0_56, %c0_57] : memref<8x8x32xf32, #tpu.memory_space<vmem>>, vector<1x8x32xf32>
    %177 = vector.shape_cast %176 : vector<1x8x32xf32> to vector<8x32xf32>
    %178 = vector.shape_cast %174 : vector<8x32xf32> to vector<1x8x32xf32>
    tpu.vector_store %arg15[%175, %c0_56, %c0_57], %178 {strides = array<i32>} : memref<8x8x32xf32, #tpu.memory_space<vmem>>, vector<1x8x32xf32>,
    %c2_i32 = arith.constant 2 : i32
    %c7_i32_58 = arith.constant 7 : i32
    %179 = arith.subi %c7_i32_58, %c2_i32 : i32
    %180 = arith.index_cast %c2_i32 : i32 to index
    %c0_59 = arith.constant 0 : index
    %c0_60 = arith.constant 0 : index
    %181 = vector.load %arg13[%180, %c0_59, %c0_60] : memref<8x8x256xf32, #tpu.memory_space<vmem>>, vector<1x8x256xf32>
    %182 = vector.shape_cast %181 : vector<1x8x256xf32> to vector<8x256xf32>
    %183 = vector.extract_strided_slice %182 {offsets = [0, 0], sizes = [8, 128], strides = [1, 1]} : vector<8x256xf32> to vector<8x128xf32>
    %cst_61 = arith.constant dense<0.000000e+00> : vector<8x128xf32>
    %184 = tpu.matmul %145, %34, %cst_61 {dimension_numbers = #tpu.dot_dimension_numbers<[1], [0], [0], [1], [0, 0, 1, 1], [], []>} : vector<8x32xf32>, vector<32x128xf32>, vector<8x128xf32> -> vector<8x128xf32>
    %185 = arith.addf %183, %184 : vector<8x128xf32>
    %186 = arith.index_cast %179 : i32 to index
    %c0_62 = arith.constant 0 : index
    %c0_63 = arith.constant 0 : index
    %187 = vector.load %arg13[%186, %c0_62, %c0_63] : memref<8x8x256xf32, #tpu.memory_space<vmem>>, vector<1x8x256xf32>
    %188 = vector.shape_cast %187 : vector<1x8x256xf32> to vector<8x256xf32>
    %189 = vector.extract_strided_slice %188 {offsets = [0, 128], sizes = [8, 128], strides = [1, 1]} : vector<8x256xf32> to vector<8x128xf32>
    %cst_64 = arith.constant dense<0.000000e+00> : vector<8x128xf32>
    %190 = tpu.matmul %174, %35, %cst_64 {dimension_numbers = #tpu.dot_dimension_numbers<[1], [0], [0], [1], [0, 0, 1, 1], [], []>} : vector<8x32xf32>, vector<32x128xf32>, vector<8x128xf32> -> vector<8x128xf32>
    %191 = arith.addf %189, %190 : vector<8x128xf32>
    %192 = vector.extract_strided_slice %185 {offsets = [0, 0], sizes = [8, 32], strides = [1, 1]} : vector<8x128xf32> to vector<8x32xf32>
    %193 = arith.negf %192 : vector<8x32xf32>
    %194 = math.exp %193 : vector<8x32xf32>
    %cst_65 = arith.constant 1.000000e+00 : f32
    %195 = vector.broadcast %cst_65 : f32 to vector<8x32xf32>
    %196 = arith.addf %195, %194 : vector<8x32xf32>
    %197 = arith.divf %195, %196 : vector<8x32xf32>
    %198 = vector.extract_strided_slice %185 {offsets = [0, 32], sizes = [8, 32], strides = [1, 1]} : vector<8x128xf32> to vector<8x32xf32>
    %199 = arith.negf %198 : vector<8x32xf32>
    %200 = math.exp %199 : vector<8x32xf32>
    %cst_66 = arith.constant 1.000000e+00 : f32
    %201 = vector.broadcast %cst_66 : f32 to vector<8x32xf32>
    %202 = arith.addf %201, %200 : vector<8x32xf32>
    %203 = arith.divf %201, %202 : vector<8x32xf32>
    %204 = vector.extract_strided_slice %185 {offsets = [0, 64], sizes = [8, 32], strides = [1, 1]} : vector<8x128xf32> to vector<8x32xf32>
    %205 = math.tanh %204 : vector<8x32xf32>
    %206 = vector.extract_strided_slice %185 {offsets = [0, 96], sizes = [8, 32], strides = [1, 1]} : vector<8x128xf32> to vector<8x32xf32>
    %207 = arith.negf %206 : vector<8x32xf32>
    %208 = math.exp %207 : vector<8x32xf32>
    %cst_67 = arith.constant 1.000000e+00 : f32
    %209 = vector.broadcast %cst_67 : f32 to vector<8x32xf32>
    %210 = arith.addf %209, %208 : vector<8x32xf32>
    %211 = arith.divf %209, %210 : vector<8x32xf32>
    %212 = arith.mulf %203, %143 : vector<8x32xf32>
    %213 = arith.mulf %197, %205 : vector<8x32xf32>
    %214 = arith.addf %212, %213 : vector<8x32xf32>
    %215 = math.tanh %214 : vector<8x32xf32>
    %216 = arith.mulf %211, %215 : vector<8x32xf32>
    %217 = arith.index_cast %c2_i32 : i32 to index
    %c0_68 = arith.constant 0 : index
    %c0_69 = arith.constant 0 : index
    %218 = vector.load %arg14[%217, %c0_68, %c0_69] : memref<8x8x32xf32, #tpu.memory_space<vmem>>, vector<1x8x32xf32>
    %219 = vector.shape_cast %218 : vector<1x8x32xf32> to vector<8x32xf32>
    %220 = vector.shape_cast %216 : vector<8x32xf32> to vector<1x8x32xf32>
    tpu.vector_store %arg14[%217, %c0_68, %c0_69], %220 {strides = array<i32>} : memref<8x8x32xf32, #tpu.memory_space<vmem>>, vector<1x8x32xf32>,
    %221 = vector.extract_strided_slice %191 {offsets = [0, 0], sizes = [8, 32], strides = [1, 1]} : vector<8x128xf32> to vector<8x32xf32>
    %222 = arith.negf %221 : vector<8x32xf32>
    %223 = math.exp %222 : vector<8x32xf32>
    %cst_70 = arith.constant 1.000000e+00 : f32
    %224 = vector.broadcast %cst_70 : f32 to vector<8x32xf32>
    %225 = arith.addf %224, %223 : vector<8x32xf32>
    %226 = arith.divf %224, %225 : vector<8x32xf32>
    %227 = vector.extract_strided_slice %191 {offsets = [0, 32], sizes = [8, 32], strides = [1, 1]} : vector<8x128xf32> to vector<8x32xf32>
    %228 = arith.negf %227 : vector<8x32xf32>
    %229 = math.exp %228 : vector<8x32xf32>
    %cst_71 = arith.constant 1.000000e+00 : f32
    %230 = vector.broadcast %cst_71 : f32 to vector<8x32xf32>
    %231 = arith.addf %230, %229 : vector<8x32xf32>
    %232 = arith.divf %230, %231 : vector<8x32xf32>
    %233 = vector.extract_strided_slice %191 {offsets = [0, 64], sizes = [8, 32], strides = [1, 1]} : vector<8x128xf32> to vector<8x32xf32>
    %234 = math.tanh %233 : vector<8x32xf32>
    %235 = vector.extract_strided_slice %191 {offsets = [0, 96], sizes = [8, 32], strides = [1, 1]} : vector<8x128xf32> to vector<8x32xf32>
    %236 = arith.negf %235 : vector<8x32xf32>
    %237 = math.exp %236 : vector<8x32xf32>
    %cst_72 = arith.constant 1.000000e+00 : f32
    %238 = vector.broadcast %cst_72 : f32 to vector<8x32xf32>
    %239 = arith.addf %238, %237 : vector<8x32xf32>
    %240 = arith.divf %238, %239 : vector<8x32xf32>
    %241 = arith.mulf %232, %172 : vector<8x32xf32>
    %242 = arith.mulf %226, %234 : vector<8x32xf32>
    %243 = arith.addf %241, %242 : vector<8x32xf32>
    %244 = math.tanh %243 : vector<8x32xf32>
    %245 = arith.mulf %240, %244 : vector<8x32xf32>
    %246 = arith.index_cast %179 : i32 to index
    %c0_73 = arith.constant 0 : index
    %c0_74 = arith.constant 0 : index
    %247 = vector.load %arg15[%246, %c0_73, %c0_74] : memref<8x8x32xf32, #tpu.memory_space<vmem>>, vector<1x8x32xf32>
    %248 = vector.shape_cast %247 : vector<1x8x32xf32> to vector<8x32xf32>
    %249 = vector.shape_cast %245 : vector<8x32xf32> to vector<1x8x32xf32>
    tpu.vector_store %arg15[%246, %c0_73, %c0_74], %249 {strides = array<i32>} : memref<8x8x32xf32, #tpu.memory_space<vmem>>, vector<1x8x32xf32>,
    %c3_i32 = arith.constant 3 : i32
    %c7_i32_75 = arith.constant 7 : i32
    %250 = arith.subi %c7_i32_75, %c3_i32 : i32
    %251 = arith.index_cast %c3_i32 : i32 to index
    %c0_76 = arith.constant 0 : index
    %c0_77 = arith.constant 0 : index
    %252 = vector.load %arg13[%251, %c0_76, %c0_77] : memref<8x8x256xf32, #tpu.memory_space<vmem>>, vector<1x8x256xf32>
    %253 = vector.shape_cast %252 : vector<1x8x256xf32> to vector<8x256xf32>
    %254 = vector.extract_strided_slice %253 {offsets = [0, 0], sizes = [8, 128], strides = [1, 1]} : vector<8x256xf32> to vector<8x128xf32>
    %cst_78 = arith.constant dense<0.000000e+00> : vector<8x128xf32>
    %255 = tpu.matmul %216, %34, %cst_78 {dimension_numbers = #tpu.dot_dimension_numbers<[1], [0], [0], [1], [0, 0, 1, 1], [], []>} : vector<8x32xf32>, vector<32x128xf32>, vector<8x128xf32> -> vector<8x128xf32>
    %256 = arith.addf %254, %255 : vector<8x128xf32>
    %257 = arith.index_cast %250 : i32 to index
    %c0_79 = arith.constant 0 : index
    %c0_80 = arith.constant 0 : index
    %258 = vector.load %arg13[%257, %c0_79, %c0_80] : memref<8x8x256xf32, #tpu.memory_space<vmem>>, vector<1x8x256xf32>
    %259 = vector.shape_cast %258 : vector<1x8x256xf32> to vector<8x256xf32>
    %260 = vector.extract_strided_slice %259 {offsets = [0, 128], sizes = [8, 128], strides = [1, 1]} : vector<8x256xf32> to vector<8x128xf32>
    %cst_81 = arith.constant dense<0.000000e+00> : vector<8x128xf32>
    %261 = tpu.matmul %245, %35, %cst_81 {dimension_numbers = #tpu.dot_dimension_numbers<[1], [0], [0], [1], [0, 0, 1, 1], [], []>} : vector<8x32xf32>, vector<32x128xf32>, vector<8x128xf32> -> vector<8x128xf32>
    %262 = arith.addf %260, %261 : vector<8x128xf32>
    %263 = vector.extract_strided_slice %256 {offsets = [0, 0], sizes = [8, 32], strides = [1, 1]} : vector<8x128xf32> to vector<8x32xf32>
    %264 = arith.negf %263 : vector<8x32xf32>
    %265 = math.exp %264 : vector<8x32xf32>
    %cst_82 = arith.constant 1.000000e+00 : f32
    %266 = vector.broadcast %cst_82 : f32 to vector<8x32xf32>
    %267 = arith.addf %266, %265 : vector<8x32xf32>
    %268 = arith.divf %266, %267 : vector<8x32xf32>
    %269 = vector.extract_strided_slice %256 {offsets = [0, 32], sizes = [8, 32], strides = [1, 1]} : vector<8x128xf32> to vector<8x32xf32>
    %270 = arith.negf %269 : vector<8x32xf32>
    %271 = math.exp %270 : vector<8x32xf32>
    %cst_83 = arith.constant 1.000000e+00 : f32
    %272 = vector.broadcast %cst_83 : f32 to vector<8x32xf32>
    %273 = arith.addf %272, %271 : vector<8x32xf32>
    %274 = arith.divf %272, %273 : vector<8x32xf32>
    %275 = vector.extract_strided_slice %256 {offsets = [0, 64], sizes = [8, 32], strides = [1, 1]} : vector<8x128xf32> to vector<8x32xf32>
    %276 = math.tanh %275 : vector<8x32xf32>
    %277 = vector.extract_strided_slice %256 {offsets = [0, 96], sizes = [8, 32], strides = [1, 1]} : vector<8x128xf32> to vector<8x32xf32>
    %278 = arith.negf %277 : vector<8x32xf32>
    %279 = math.exp %278 : vector<8x32xf32>
    %cst_84 = arith.constant 1.000000e+00 : f32
    %280 = vector.broadcast %cst_84 : f32 to vector<8x32xf32>
    %281 = arith.addf %280, %279 : vector<8x32xf32>
    %282 = arith.divf %280, %281 : vector<8x32xf32>
    %283 = arith.mulf %274, %214 : vector<8x32xf32>
    %284 = arith.mulf %268, %276 : vector<8x32xf32>
    %285 = arith.addf %283, %284 : vector<8x32xf32>
    %286 = math.tanh %285 : vector<8x32xf32>
    %287 = arith.mulf %282, %286 : vector<8x32xf32>
    %288 = arith.index_cast %c3_i32 : i32 to index
    %c0_85 = arith.constant 0 : index
    %c0_86 = arith.constant 0 : index
    %289 = vector.load %arg14[%288, %c0_85, %c0_86] : memref<8x8x32xf32, #tpu.memory_space<vmem>>, vector<1x8x32xf32>
    %290 = vector.shape_cast %289 : vector<1x8x32xf32> to vector<8x32xf32>
    %291 = vector.shape_cast %287 : vector<8x32xf32> to vector<1x8x32xf32>
    tpu.vector_store %arg14[%288, %c0_85, %c0_86], %291 {strides = array<i32>} : memref<8x8x32xf32, #tpu.memory_space<vmem>>, vector<1x8x32xf32>,
    %292 = vector.extract_strided_slice %262 {offsets = [0, 0], sizes = [8, 32], strides = [1, 1]} : vector<8x128xf32> to vector<8x32xf32>
    %293 = arith.negf %292 : vector<8x32xf32>
    %294 = math.exp %293 : vector<8x32xf32>
    %cst_87 = arith.constant 1.000000e+00 : f32
    %295 = vector.broadcast %cst_87 : f32 to vector<8x32xf32>
    %296 = arith.addf %295, %294 : vector<8x32xf32>
    %297 = arith.divf %295, %296 : vector<8x32xf32>
    %298 = vector.extract_strided_slice %262 {offsets = [0, 32], sizes = [8, 32], strides = [1, 1]} : vector<8x128xf32> to vector<8x32xf32>
    %299 = arith.negf %298 : vector<8x32xf32>
    %300 = math.exp %299 : vector<8x32xf32>
    %cst_88 = arith.constant 1.000000e+00 : f32
    %301 = vector.broadcast %cst_88 : f32 to vector<8x32xf32>
    %302 = arith.addf %301, %300 : vector<8x32xf32>
    %303 = arith.divf %301, %302 : vector<8x32xf32>
    %304 = vector.extract_strided_slice %262 {offsets = [0, 64], sizes = [8, 32], strides = [1, 1]} : vector<8x128xf32> to vector<8x32xf32>
    %305 = math.tanh %304 : vector<8x32xf32>
    %306 = vector.extract_strided_slice %262 {offsets = [0, 96], sizes = [8, 32], strides = [1, 1]} : vector<8x128xf32> to vector<8x32xf32>
    %307 = arith.negf %306 : vector<8x32xf32>
    %308 = math.exp %307 : vector<8x32xf32>
    %cst_89 = arith.constant 1.000000e+00 : f32
    %309 = vector.broadcast %cst_89 : f32 to vector<8x32xf32>
    %310 = arith.addf %309, %308 : vector<8x32xf32>
    %311 = arith.divf %309, %310 : vector<8x32xf32>
    %312 = arith.mulf %303, %243 : vector<8x32xf32>
    %313 = arith.mulf %297, %305 : vector<8x32xf32>
    %314 = arith.addf %312, %313 : vector<8x32xf32>
    %315 = math.tanh %314 : vector<8x32xf32>
    %316 = arith.mulf %311, %315 : vector<8x32xf32>
    %317 = arith.index_cast %250 : i32 to index
    %c0_90 = arith.constant 0 : index
    %c0_91 = arith.constant 0 : index
    %318 = vector.load %arg15[%317, %c0_90, %c0_91] : memref<8x8x32xf32, #tpu.memory_space<vmem>>, vector<1x8x32xf32>
    %319 = vector.shape_cast %318 : vector<1x8x32xf32> to vector<8x32xf32>
    %320 = vector.shape_cast %316 : vector<8x32xf32> to vector<1x8x32xf32>
    tpu.vector_store %arg15[%317, %c0_90, %c0_91], %320 {strides = array<i32>} : memref<8x8x32xf32, #tpu.memory_space<vmem>>, vector<1x8x32xf32>,
    %c4_i32 = arith.constant 4 : i32
    %c7_i32_92 = arith.constant 7 : i32
    %321 = arith.subi %c7_i32_92, %c4_i32 : i32
    %322 = arith.index_cast %c4_i32 : i32 to index
    %c0_93 = arith.constant 0 : index
    %c0_94 = arith.constant 0 : index
    %323 = vector.load %arg13[%322, %c0_93, %c0_94] : memref<8x8x256xf32, #tpu.memory_space<vmem>>, vector<1x8x256xf32>
    %324 = vector.shape_cast %323 : vector<1x8x256xf32> to vector<8x256xf32>
    %325 = vector.extract_strided_slice %324 {offsets = [0, 0], sizes = [8, 128], strides = [1, 1]} : vector<8x256xf32> to vector<8x128xf32>
    %cst_95 = arith.constant dense<0.000000e+00> : vector<8x128xf32>
    %326 = tpu.matmul %287, %34, %cst_95 {dimension_numbers = #tpu.dot_dimension_numbers<[1], [0], [0], [1], [0, 0, 1, 1], [], []>} : vector<8x32xf32>, vector<32x128xf32>, vector<8x128xf32> -> vector<8x128xf32>
    %327 = arith.addf %325, %326 : vector<8x128xf32>
    %328 = arith.index_cast %321 : i32 to index
    %c0_96 = arith.constant 0 : index
    %c0_97 = arith.constant 0 : index
    %329 = vector.load %arg13[%328, %c0_96, %c0_97] : memref<8x8x256xf32, #tpu.memory_space<vmem>>, vector<1x8x256xf32>
    %330 = vector.shape_cast %329 : vector<1x8x256xf32> to vector<8x256xf32>
    %331 = vector.extract_strided_slice %330 {offsets = [0, 128], sizes = [8, 128], strides = [1, 1]} : vector<8x256xf32> to vector<8x128xf32>
    %cst_98 = arith.constant dense<0.000000e+00> : vector<8x128xf32>
    %332 = tpu.matmul %316, %35, %cst_98 {dimension_numbers = #tpu.dot_dimension_numbers<[1], [0], [0], [1], [0, 0, 1, 1], [], []>} : vector<8x32xf32>, vector<32x128xf32>, vector<8x128xf32> -> vector<8x128xf32>
    %333 = arith.addf %331, %332 : vector<8x128xf32>
    %334 = vector.extract_strided_slice %327 {offsets = [0, 0], sizes = [8, 32], strides = [1, 1]} : vector<8x128xf32> to vector<8x32xf32>
    %335 = arith.negf %334 : vector<8x32xf32>
    %336 = math.exp %335 : vector<8x32xf32>
    %cst_99 = arith.constant 1.000000e+00 : f32
    %337 = vector.broadcast %cst_99 : f32 to vector<8x32xf32>
    %338 = arith.addf %337, %336 : vector<8x32xf32>
    %339 = arith.divf %337, %338 : vector<8x32xf32>
    %340 = vector.extract_strided_slice %327 {offsets = [0, 32], sizes = [8, 32], strides = [1, 1]} : vector<8x128xf32> to vector<8x32xf32>
    %341 = arith.negf %340 : vector<8x32xf32>
    %342 = math.exp %341 : vector<8x32xf32>
    %cst_100 = arith.constant 1.000000e+00 : f32
    %343 = vector.broadcast %cst_100 : f32 to vector<8x32xf32>
    %344 = arith.addf %343, %342 : vector<8x32xf32>
    %345 = arith.divf %343, %344 : vector<8x32xf32>
    %346 = vector.extract_strided_slice %327 {offsets = [0, 64], sizes = [8, 32], strides = [1, 1]} : vector<8x128xf32> to vector<8x32xf32>
    %347 = math.tanh %346 : vector<8x32xf32>
    %348 = vector.extract_strided_slice %327 {offsets = [0, 96], sizes = [8, 32], strides = [1, 1]} : vector<8x128xf32> to vector<8x32xf32>
    %349 = arith.negf %348 : vector<8x32xf32>
    %350 = math.exp %349 : vector<8x32xf32>
    %cst_101 = arith.constant 1.000000e+00 : f32
    %351 = vector.broadcast %cst_101 : f32 to vector<8x32xf32>
    %352 = arith.addf %351, %350 : vector<8x32xf32>
    %353 = arith.divf %351, %352 : vector<8x32xf32>
    %354 = arith.mulf %345, %285 : vector<8x32xf32>
    %355 = arith.mulf %339, %347 : vector<8x32xf32>
    %356 = arith.addf %354, %355 : vector<8x32xf32>
    %357 = math.tanh %356 : vector<8x32xf32>
    %358 = arith.mulf %353, %357 : vector<8x32xf32>
    %359 = arith.index_cast %c4_i32 : i32 to index
    %c0_102 = arith.constant 0 : index
    %c0_103 = arith.constant 0 : index
    %360 = vector.load %arg14[%359, %c0_102, %c0_103] : memref<8x8x32xf32, #tpu.memory_space<vmem>>, vector<1x8x32xf32>
    %361 = vector.shape_cast %360 : vector<1x8x32xf32> to vector<8x32xf32>
    %362 = vector.shape_cast %358 : vector<8x32xf32> to vector<1x8x32xf32>
    tpu.vector_store %arg14[%359, %c0_102, %c0_103], %362 {strides = array<i32>} : memref<8x8x32xf32, #tpu.memory_space<vmem>>, vector<1x8x32xf32>,
    %363 = vector.extract_strided_slice %333 {offsets = [0, 0], sizes = [8, 32], strides = [1, 1]} : vector<8x128xf32> to vector<8x32xf32>
    %364 = arith.negf %363 : vector<8x32xf32>
    %365 = math.exp %364 : vector<8x32xf32>
    %cst_104 = arith.constant 1.000000e+00 : f32
    %366 = vector.broadcast %cst_104 : f32 to vector<8x32xf32>
    %367 = arith.addf %366, %365 : vector<8x32xf32>
    %368 = arith.divf %366, %367 : vector<8x32xf32>
    %369 = vector.extract_strided_slice %333 {offsets = [0, 32], sizes = [8, 32], strides = [1, 1]} : vector<8x128xf32> to vector<8x32xf32>
    %370 = arith.negf %369 : vector<8x32xf32>
    %371 = math.exp %370 : vector<8x32xf32>
    %cst_105 = arith.constant 1.000000e+00 : f32
    %372 = vector.broadcast %cst_105 : f32 to vector<8x32xf32>
    %373 = arith.addf %372, %371 : vector<8x32xf32>
    %374 = arith.divf %372, %373 : vector<8x32xf32>
    %375 = vector.extract_strided_slice %333 {offsets = [0, 64], sizes = [8, 32], strides = [1, 1]} : vector<8x128xf32> to vector<8x32xf32>
    %376 = math.tanh %375 : vector<8x32xf32>
    %377 = vector.extract_strided_slice %333 {offsets = [0, 96], sizes = [8, 32], strides = [1, 1]} : vector<8x128xf32> to vector<8x32xf32>
    %378 = arith.negf %377 : vector<8x32xf32>
    %379 = math.exp %378 : vector<8x32xf32>
    %cst_106 = arith.constant 1.000000e+00 : f32
    %380 = vector.broadcast %cst_106 : f32 to vector<8x32xf32>
    %381 = arith.addf %380, %379 : vector<8x32xf32>
    %382 = arith.divf %380, %381 : vector<8x32xf32>
    %383 = arith.mulf %374, %314 : vector<8x32xf32>
    %384 = arith.mulf %368, %376 : vector<8x32xf32>
    %385 = arith.addf %383, %384 : vector<8x32xf32>
    %386 = math.tanh %385 : vector<8x32xf32>
    %387 = arith.mulf %382, %386 : vector<8x32xf32>
    %388 = arith.index_cast %321 : i32 to index
    %c0_107 = arith.constant 0 : index
    %c0_108 = arith.constant 0 : index
    %389 = vector.load %arg15[%388, %c0_107, %c0_108] : memref<8x8x32xf32, #tpu.memory_space<vmem>>, vector<1x8x32xf32>
    %390 = vector.shape_cast %389 : vector<1x8x32xf32> to vector<8x32xf32>
    %391 = vector.shape_cast %387 : vector<8x32xf32> to vector<1x8x32xf32>
    tpu.vector_store %arg15[%388, %c0_107, %c0_108], %391 {strides = array<i32>} : memref<8x8x32xf32, #tpu.memory_space<vmem>>, vector<1x8x32xf32>,
    %c5_i32 = arith.constant 5 : i32
    %c7_i32_109 = arith.constant 7 : i32
    %392 = arith.subi %c7_i32_109, %c5_i32 : i32
    %393 = arith.index_cast %c5_i32 : i32 to index
    %c0_110 = arith.constant 0 : index
    %c0_111 = arith.constant 0 : index
    %394 = vector.load %arg13[%393, %c0_110, %c0_111] : memref<8x8x256xf32, #tpu.memory_space<vmem>>, vector<1x8x256xf32>
    %395 = vector.shape_cast %394 : vector<1x8x256xf32> to vector<8x256xf32>
    %396 = vector.extract_strided_slice %395 {offsets = [0, 0], sizes = [8, 128], strides = [1, 1]} : vector<8x256xf32> to vector<8x128xf32>
    %cst_112 = arith.constant dense<0.000000e+00> : vector<8x128xf32>
    %397 = tpu.matmul %358, %34, %cst_112 {dimension_numbers = #tpu.dot_dimension_numbers<[1], [0], [0], [1], [0, 0, 1, 1], [], []>} : vector<8x32xf32>, vector<32x128xf32>, vector<8x128xf32> -> vector<8x128xf32>
    %398 = arith.addf %396, %397 : vector<8x128xf32>
    %399 = arith.index_cast %392 : i32 to index
    %c0_113 = arith.constant 0 : index
    %c0_114 = arith.constant 0 : index
    %400 = vector.load %arg13[%399, %c0_113, %c0_114] : memref<8x8x256xf32, #tpu.memory_space<vmem>>, vector<1x8x256xf32>
    %401 = vector.shape_cast %400 : vector<1x8x256xf32> to vector<8x256xf32>
    %402 = vector.extract_strided_slice %401 {offsets = [0, 128], sizes = [8, 128], strides = [1, 1]} : vector<8x256xf32> to vector<8x128xf32>
    %cst_115 = arith.constant dense<0.000000e+00> : vector<8x128xf32>
    %403 = tpu.matmul %387, %35, %cst_115 {dimension_numbers = #tpu.dot_dimension_numbers<[1], [0], [0], [1], [0, 0, 1, 1], [], []>} : vector<8x32xf32>, vector<32x128xf32>, vector<8x128xf32> -> vector<8x128xf32>
    %404 = arith.addf %402, %403 : vector<8x128xf32>
    %405 = vector.extract_strided_slice %398 {offsets = [0, 0], sizes = [8, 32], strides = [1, 1]} : vector<8x128xf32> to vector<8x32xf32>
    %406 = arith.negf %405 : vector<8x32xf32>
    %407 = math.exp %406 : vector<8x32xf32>
    %cst_116 = arith.constant 1.000000e+00 : f32
    %408 = vector.broadcast %cst_116 : f32 to vector<8x32xf32>
    %409 = arith.addf %408, %407 : vector<8x32xf32>
    %410 = arith.divf %408, %409 : vector<8x32xf32>
    %411 = vector.extract_strided_slice %398 {offsets = [0, 32], sizes = [8, 32], strides = [1, 1]} : vector<8x128xf32> to vector<8x32xf32>
    %412 = arith.negf %411 : vector<8x32xf32>
    %413 = math.exp %412 : vector<8x32xf32>
    %cst_117 = arith.constant 1.000000e+00 : f32
    %414 = vector.broadcast %cst_117 : f32 to vector<8x32xf32>
    %415 = arith.addf %414, %413 : vector<8x32xf32>
    %416 = arith.divf %414, %415 : vector<8x32xf32>
    %417 = vector.extract_strided_slice %398 {offsets = [0, 64], sizes = [8, 32], strides = [1, 1]} : vector<8x128xf32> to vector<8x32xf32>
    %418 = math.tanh %417 : vector<8x32xf32>
    %419 = vector.extract_strided_slice %398 {offsets = [0, 96], sizes = [8, 32], strides = [1, 1]} : vector<8x128xf32> to vector<8x32xf32>
    %420 = arith.negf %419 : vector<8x32xf32>
    %421 = math.exp %420 : vector<8x32xf32>
    %cst_118 = arith.constant 1.000000e+00 : f32
    %422 = vector.broadcast %cst_118 : f32 to vector<8x32xf32>
    %423 = arith.addf %422, %421 : vector<8x32xf32>
    %424 = arith.divf %422, %423 : vector<8x32xf32>
    %425 = arith.mulf %416, %356 : vector<8x32xf32>
    %426 = arith.mulf %410, %418 : vector<8x32xf32>
    %427 = arith.addf %425, %426 : vector<8x32xf32>
    %428 = math.tanh %427 : vector<8x32xf32>
    %429 = arith.mulf %424, %428 : vector<8x32xf32>
    %430 = arith.index_cast %c5_i32 : i32 to index
    %c0_119 = arith.constant 0 : index
    %c0_120 = arith.constant 0 : index
    %431 = vector.load %arg14[%430, %c0_119, %c0_120] : memref<8x8x32xf32, #tpu.memory_space<vmem>>, vector<1x8x32xf32>
    %432 = vector.shape_cast %431 : vector<1x8x32xf32> to vector<8x32xf32>
    %433 = vector.shape_cast %429 : vector<8x32xf32> to vector<1x8x32xf32>
    tpu.vector_store %arg14[%430, %c0_119, %c0_120], %433 {strides = array<i32>} : memref<8x8x32xf32, #tpu.memory_space<vmem>>, vector<1x8x32xf32>,
    %434 = vector.extract_strided_slice %404 {offsets = [0, 0], sizes = [8, 32], strides = [1, 1]} : vector<8x128xf32> to vector<8x32xf32>
    %435 = arith.negf %434 : vector<8x32xf32>
    %436 = math.exp %435 : vector<8x32xf32>
    %cst_121 = arith.constant 1.000000e+00 : f32
    %437 = vector.broadcast %cst_121 : f32 to vector<8x32xf32>
    %438 = arith.addf %437, %436 : vector<8x32xf32>
    %439 = arith.divf %437, %438 : vector<8x32xf32>
    %440 = vector.extract_strided_slice %404 {offsets = [0, 32], sizes = [8, 32], strides = [1, 1]} : vector<8x128xf32> to vector<8x32xf32>
    %441 = arith.negf %440 : vector<8x32xf32>
    %442 = math.exp %441 : vector<8x32xf32>
    %cst_122 = arith.constant 1.000000e+00 : f32
    %443 = vector.broadcast %cst_122 : f32 to vector<8x32xf32>
    %444 = arith.addf %443, %442 : vector<8x32xf32>
    %445 = arith.divf %443, %444 : vector<8x32xf32>
    %446 = vector.extract_strided_slice %404 {offsets = [0, 64], sizes = [8, 32], strides = [1, 1]} : vector<8x128xf32> to vector<8x32xf32>
    %447 = math.tanh %446 : vector<8x32xf32>
    %448 = vector.extract_strided_slice %404 {offsets = [0, 96], sizes = [8, 32], strides = [1, 1]} : vector<8x128xf32> to vector<8x32xf32>
    %449 = arith.negf %448 : vector<8x32xf32>
    %450 = math.exp %449 : vector<8x32xf32>
    %cst_123 = arith.constant 1.000000e+00 : f32
    %451 = vector.broadcast %cst_123 : f32 to vector<8x32xf32>
    %452 = arith.addf %451, %450 : vector<8x32xf32>
    %453 = arith.divf %451, %452 : vector<8x32xf32>
    %454 = arith.mulf %445, %385 : vector<8x32xf32>
    %455 = arith.mulf %439, %447 : vector<8x32xf32>
    %456 = arith.addf %454, %455 : vector<8x32xf32>
    %457 = math.tanh %456 : vector<8x32xf32>
    %458 = arith.mulf %453, %457 : vector<8x32xf32>
    %459 = arith.index_cast %392 : i32 to index
    %c0_124 = arith.constant 0 : index
    %c0_125 = arith.constant 0 : index
    %460 = vector.load %arg15[%459, %c0_124, %c0_125] : memref<8x8x32xf32, #tpu.memory_space<vmem>>, vector<1x8x32xf32>
    %461 = vector.shape_cast %460 : vector<1x8x32xf32> to vector<8x32xf32>
    %462 = vector.shape_cast %458 : vector<8x32xf32> to vector<1x8x32xf32>
    tpu.vector_store %arg15[%459, %c0_124, %c0_125], %462 {strides = array<i32>} : memref<8x8x32xf32, #tpu.memory_space<vmem>>, vector<1x8x32xf32>,
    %c6_i32 = arith.constant 6 : i32
    %c7_i32_126 = arith.constant 7 : i32
    %463 = arith.subi %c7_i32_126, %c6_i32 : i32
    %464 = arith.index_cast %c6_i32 : i32 to index
    %c0_127 = arith.constant 0 : index
    %c0_128 = arith.constant 0 : index
    %465 = vector.load %arg13[%464, %c0_127, %c0_128] : memref<8x8x256xf32, #tpu.memory_space<vmem>>, vector<1x8x256xf32>
    %466 = vector.shape_cast %465 : vector<1x8x256xf32> to vector<8x256xf32>
    %467 = vector.extract_strided_slice %466 {offsets = [0, 0], sizes = [8, 128], strides = [1, 1]} : vector<8x256xf32> to vector<8x128xf32>
    %cst_129 = arith.constant dense<0.000000e+00> : vector<8x128xf32>
    %468 = tpu.matmul %429, %34, %cst_129 {dimension_numbers = #tpu.dot_dimension_numbers<[1], [0], [0], [1], [0, 0, 1, 1], [], []>} : vector<8x32xf32>, vector<32x128xf32>, vector<8x128xf32> -> vector<8x128xf32>
    %469 = arith.addf %467, %468 : vector<8x128xf32>
    %470 = arith.index_cast %463 : i32 to index
    %c0_130 = arith.constant 0 : index
    %c0_131 = arith.constant 0 : index
    %471 = vector.load %arg13[%470, %c0_130, %c0_131] : memref<8x8x256xf32, #tpu.memory_space<vmem>>, vector<1x8x256xf32>
    %472 = vector.shape_cast %471 : vector<1x8x256xf32> to vector<8x256xf32>
    %473 = vector.extract_strided_slice %472 {offsets = [0, 128], sizes = [8, 128], strides = [1, 1]} : vector<8x256xf32> to vector<8x128xf32>
    %cst_132 = arith.constant dense<0.000000e+00> : vector<8x128xf32>
    %474 = tpu.matmul %458, %35, %cst_132 {dimension_numbers = #tpu.dot_dimension_numbers<[1], [0], [0], [1], [0, 0, 1, 1], [], []>} : vector<8x32xf32>, vector<32x128xf32>, vector<8x128xf32> -> vector<8x128xf32>
    %475 = arith.addf %473, %474 : vector<8x128xf32>
    %476 = vector.extract_strided_slice %469 {offsets = [0, 0], sizes = [8, 32], strides = [1, 1]} : vector<8x128xf32> to vector<8x32xf32>
    %477 = arith.negf %476 : vector<8x32xf32>
    %478 = math.exp %477 : vector<8x32xf32>
    %cst_133 = arith.constant 1.000000e+00 : f32
    %479 = vector.broadcast %cst_133 : f32 to vector<8x32xf32>
    %480 = arith.addf %479, %478 : vector<8x32xf32>
    %481 = arith.divf %479, %480 : vector<8x32xf32>
    %482 = vector.extract_strided_slice %469 {offsets = [0, 32], sizes = [8, 32], strides = [1, 1]} : vector<8x128xf32> to vector<8x32xf32>
    %483 = arith.negf %482 : vector<8x32xf32>
    %484 = math.exp %483 : vector<8x32xf32>
    %cst_134 = arith.constant 1.000000e+00 : f32
    %485 = vector.broadcast %cst_134 : f32 to vector<8x32xf32>
    %486 = arith.addf %485, %484 : vector<8x32xf32>
    %487 = arith.divf %485, %486 : vector<8x32xf32>
    %488 = vector.extract_strided_slice %469 {offsets = [0, 64], sizes = [8, 32], strides = [1, 1]} : vector<8x128xf32> to vector<8x32xf32>
    %489 = math.tanh %488 : vector<8x32xf32>
    %490 = vector.extract_strided_slice %469 {offsets = [0, 96], sizes = [8, 32], strides = [1, 1]} : vector<8x128xf32> to vector<8x32xf32>
    %491 = arith.negf %490 : vector<8x32xf32>
    %492 = math.exp %491 : vector<8x32xf32>
    %cst_135 = arith.constant 1.000000e+00 : f32
    %493 = vector.broadcast %cst_135 : f32 to vector<8x32xf32>
    %494 = arith.addf %493, %492 : vector<8x32xf32>
    %495 = arith.divf %493, %494 : vector<8x32xf32>
    %496 = arith.mulf %487, %427 : vector<8x32xf32>
    %497 = arith.mulf %481, %489 : vector<8x32xf32>
    %498 = arith.addf %496, %497 : vector<8x32xf32>
    %499 = math.tanh %498 : vector<8x32xf32>
    %500 = arith.mulf %495, %499 : vector<8x32xf32>
    %501 = arith.index_cast %c6_i32 : i32 to index
    %c0_136 = arith.constant 0 : index
    %c0_137 = arith.constant 0 : index
    %502 = vector.load %arg14[%501, %c0_136, %c0_137] : memref<8x8x32xf32, #tpu.memory_space<vmem>>, vector<1x8x32xf32>
    %503 = vector.shape_cast %502 : vector<1x8x32xf32> to vector<8x32xf32>
    %504 = vector.shape_cast %500 : vector<8x32xf32> to vector<1x8x32xf32>
    tpu.vector_store %arg14[%501, %c0_136, %c0_137], %504 {strides = array<i32>} : memref<8x8x32xf32, #tpu.memory_space<vmem>>, vector<1x8x32xf32>,
    %505 = vector.extract_strided_slice %475 {offsets = [0, 0], sizes = [8, 32], strides = [1, 1]} : vector<8x128xf32> to vector<8x32xf32>
    %506 = arith.negf %505 : vector<8x32xf32>
    %507 = math.exp %506 : vector<8x32xf32>
    %cst_138 = arith.constant 1.000000e+00 : f32
    %508 = vector.broadcast %cst_138 : f32 to vector<8x32xf32>
    %509 = arith.addf %508, %507 : vector<8x32xf32>
    %510 = arith.divf %508, %509 : vector<8x32xf32>
    %511 = vector.extract_strided_slice %475 {offsets = [0, 32], sizes = [8, 32], strides = [1, 1]} : vector<8x128xf32> to vector<8x32xf32>
    %512 = arith.negf %511 : vector<8x32xf32>
    %513 = math.exp %512 : vector<8x32xf32>
    %cst_139 = arith.constant 1.000000e+00 : f32
    %514 = vector.broadcast %cst_139 : f32 to vector<8x32xf32>
    %515 = arith.addf %514, %513 : vector<8x32xf32>
    %516 = arith.divf %514, %515 : vector<8x32xf32>
    %517 = vector.extract_strided_slice %475 {offsets = [0, 64], sizes = [8, 32], strides = [1, 1]} : vector<8x128xf32> to vector<8x32xf32>
    %518 = math.tanh %517 : vector<8x32xf32>
    %519 = vector.extract_strided_slice %475 {offsets = [0, 96], sizes = [8, 32], strides = [1, 1]} : vector<8x128xf32> to vector<8x32xf32>
    %520 = arith.negf %519 : vector<8x32xf32>
    %521 = math.exp %520 : vector<8x32xf32>
    %cst_140 = arith.constant 1.000000e+00 : f32
    %522 = vector.broadcast %cst_140 : f32 to vector<8x32xf32>
    %523 = arith.addf %522, %521 : vector<8x32xf32>
    %524 = arith.divf %522, %523 : vector<8x32xf32>
    %525 = arith.mulf %516, %456 : vector<8x32xf32>
    %526 = arith.mulf %510, %518 : vector<8x32xf32>
    %527 = arith.addf %525, %526 : vector<8x32xf32>
    %528 = math.tanh %527 : vector<8x32xf32>
    %529 = arith.mulf %524, %528 : vector<8x32xf32>
    %530 = arith.index_cast %463 : i32 to index
    %c0_141 = arith.constant 0 : index
    %c0_142 = arith.constant 0 : index
    %531 = vector.load %arg15[%530, %c0_141, %c0_142] : memref<8x8x32xf32, #tpu.memory_space<vmem>>, vector<1x8x32xf32>
    %532 = vector.shape_cast %531 : vector<1x8x32xf32> to vector<8x32xf32>
    %533 = vector.shape_cast %529 : vector<8x32xf32> to vector<1x8x32xf32>
    tpu.vector_store %arg15[%530, %c0_141, %c0_142], %533 {strides = array<i32>} : memref<8x8x32xf32, #tpu.memory_space<vmem>>, vector<1x8x32xf32>,
    %c7_i32_143 = arith.constant 7 : i32
    %c7_i32_144 = arith.constant 7 : i32
    %534 = arith.subi %c7_i32_144, %c7_i32_143 : i32
    %535 = arith.index_cast %c7_i32_143 : i32 to index
    %c0_145 = arith.constant 0 : index
    %c0_146 = arith.constant 0 : index
    %536 = vector.load %arg13[%535, %c0_145, %c0_146] : memref<8x8x256xf32, #tpu.memory_space<vmem>>, vector<1x8x256xf32>
    %537 = vector.shape_cast %536 : vector<1x8x256xf32> to vector<8x256xf32>
    %538 = vector.extract_strided_slice %537 {offsets = [0, 0], sizes = [8, 128], strides = [1, 1]} : vector<8x256xf32> to vector<8x128xf32>
    %cst_147 = arith.constant dense<0.000000e+00> : vector<8x128xf32>
    %539 = tpu.matmul %500, %34, %cst_147 {dimension_numbers = #tpu.dot_dimension_numbers<[1], [0], [0], [1], [0, 0, 1, 1], [], []>} : vector<8x32xf32>, vector<32x128xf32>, vector<8x128xf32> -> vector<8x128xf32>
    %540 = arith.addf %538, %539 : vector<8x128xf32>
    %541 = arith.index_cast %534 : i32 to index
    %c0_148 = arith.constant 0 : index
    %c0_149 = arith.constant 0 : index
    %542 = vector.load %arg13[%541, %c0_148, %c0_149] : memref<8x8x256xf32, #tpu.memory_space<vmem>>, vector<1x8x256xf32>
    %543 = vector.shape_cast %542 : vector<1x8x256xf32> to vector<8x256xf32>
    %544 = vector.extract_strided_slice %543 {offsets = [0, 128], sizes = [8, 128], strides = [1, 1]} : vector<8x256xf32> to vector<8x128xf32>
    %cst_150 = arith.constant dense<0.000000e+00> : vector<8x128xf32>
    %545 = tpu.matmul %529, %35, %cst_150 {dimension_numbers = #tpu.dot_dimension_numbers<[1], [0], [0], [1], [0, 0, 1, 1], [], []>} : vector<8x32xf32>, vector<32x128xf32>, vector<8x128xf32> -> vector<8x128xf32>
    %546 = arith.addf %544, %545 : vector<8x128xf32>
    %547 = vector.extract_strided_slice %540 {offsets = [0, 0], sizes = [8, 32], strides = [1, 1]} : vector<8x128xf32> to vector<8x32xf32>
    %548 = arith.negf %547 : vector<8x32xf32>
    %549 = math.exp %548 : vector<8x32xf32>
    %cst_151 = arith.constant 1.000000e+00 : f32
    %550 = vector.broadcast %cst_151 : f32 to vector<8x32xf32>
    %551 = arith.addf %550, %549 : vector<8x32xf32>
    %552 = arith.divf %550, %551 : vector<8x32xf32>
    %553 = vector.extract_strided_slice %540 {offsets = [0, 32], sizes = [8, 32], strides = [1, 1]} : vector<8x128xf32> to vector<8x32xf32>
    %554 = arith.negf %553 : vector<8x32xf32>
    %555 = math.exp %554 : vector<8x32xf32>
    %cst_152 = arith.constant 1.000000e+00 : f32
    %556 = vector.broadcast %cst_152 : f32 to vector<8x32xf32>
    %557 = arith.addf %556, %555 : vector<8x32xf32>
    %558 = arith.divf %556, %557 : vector<8x32xf32>
    %559 = vector.extract_strided_slice %540 {offsets = [0, 64], sizes = [8, 32], strides = [1, 1]} : vector<8x128xf32> to vector<8x32xf32>
    %560 = math.tanh %559 : vector<8x32xf32>
    %561 = vector.extract_strided_slice %540 {offsets = [0, 96], sizes = [8, 32], strides = [1, 1]} : vector<8x128xf32> to vector<8x32xf32>
    %562 = arith.negf %561 : vector<8x32xf32>
    %563 = math.exp %562 : vector<8x32xf32>
    %cst_153 = arith.constant 1.000000e+00 : f32
    %564 = vector.broadcast %cst_153 : f32 to vector<8x32xf32>
    %565 = arith.addf %564, %563 : vector<8x32xf32>
    %566 = arith.divf %564, %565 : vector<8x32xf32>
    %567 = arith.mulf %558, %498 : vector<8x32xf32>
    %568 = arith.mulf %552, %560 : vector<8x32xf32>
    %569 = arith.addf %567, %568 : vector<8x32xf32>
    %570 = math.tanh %569 : vector<8x32xf32>
    %571 = arith.mulf %566, %570 : vector<8x32xf32>
    %572 = arith.index_cast %c7_i32_143 : i32 to index
    %c0_154 = arith.constant 0 : index
    %c0_155 = arith.constant 0 : index
    %573 = vector.load %arg14[%572, %c0_154, %c0_155] : memref<8x8x32xf32, #tpu.memory_space<vmem>>, vector<1x8x32xf32>
    %574 = vector.shape_cast %573 : vector<1x8x32xf32> to vector<8x32xf32>
    %575 = vector.shape_cast %571 : vector<8x32xf32> to vector<1x8x32xf32>
    tpu.vector_store %arg14[%572, %c0_154, %c0_155], %575 {strides = array<i32>} : memref<8x8x32xf32, #tpu.memory_space<vmem>>, vector<1x8x32xf32>,
    %576 = vector.extract_strided_slice %546 {offsets = [0, 0], sizes = [8, 32], strides = [1, 1]} : vector<8x128xf32> to vector<8x32xf32>
    %577 = arith.negf %576 : vector<8x32xf32>
    %578 = math.exp %577 : vector<8x32xf32>
    %cst_156 = arith.constant 1.000000e+00 : f32
    %579 = vector.broadcast %cst_156 : f32 to vector<8x32xf32>
    %580 = arith.addf %579, %578 : vector<8x32xf32>
    %581 = arith.divf %579, %580 : vector<8x32xf32>
    %582 = vector.extract_strided_slice %546 {offsets = [0, 32], sizes = [8, 32], strides = [1, 1]} : vector<8x128xf32> to vector<8x32xf32>
    %583 = arith.negf %582 : vector<8x32xf32>
    %584 = math.exp %583 : vector<8x32xf32>
    %cst_157 = arith.constant 1.000000e+00 : f32
    %585 = vector.broadcast %cst_157 : f32 to vector<8x32xf32>
    %586 = arith.addf %585, %584 : vector<8x32xf32>
    %587 = arith.divf %585, %586 : vector<8x32xf32>
    %588 = vector.extract_strided_slice %546 {offsets = [0, 64], sizes = [8, 32], strides = [1, 1]} : vector<8x128xf32> to vector<8x32xf32>
    %589 = math.tanh %588 : vector<8x32xf32>
    %590 = vector.extract_strided_slice %546 {offsets = [0, 96], sizes = [8, 32], strides = [1, 1]} : vector<8x128xf32> to vector<8x32xf32>
    %591 = arith.negf %590 : vector<8x32xf32>
    %592 = math.exp %591 : vector<8x32xf32>
    %cst_158 = arith.constant 1.000000e+00 : f32
    %593 = vector.broadcast %cst_158 : f32 to vector<8x32xf32>
    %594 = arith.addf %593, %592 : vector<8x32xf32>
    %595 = arith.divf %593, %594 : vector<8x32xf32>
    %596 = arith.mulf %587, %527 : vector<8x32xf32>
    %597 = arith.mulf %581, %589 : vector<8x32xf32>
    %598 = arith.addf %596, %597 : vector<8x32xf32>
    %599 = math.tanh %598 : vector<8x32xf32>
    %600 = arith.mulf %595, %599 : vector<8x32xf32>
    %601 = arith.index_cast %534 : i32 to index
    %c0_159 = arith.constant 0 : index
    %c0_160 = arith.constant 0 : index
    %602 = vector.load %arg15[%601, %c0_159, %c0_160] : memref<8x8x32xf32, #tpu.memory_space<vmem>>, vector<1x8x32xf32>
    %603 = vector.shape_cast %602 : vector<1x8x32xf32> to vector<8x32xf32>
    %604 = vector.shape_cast %600 : vector<8x32xf32> to vector<1x8x32xf32>
    tpu.vector_store %arg15[%601, %c0_159, %c0_160], %604 {strides = array<i32>} : memref<8x8x32xf32, #tpu.memory_space<vmem>>, vector<1x8x32xf32>,
    %c8_i32 = arith.constant 8 : i32
    %c0_161 = arith.constant 0 : index
    %c0_162 = arith.constant 0 : index
    %c0_163 = arith.constant 0 : index
    %605 = vector.load %arg14[%c0_161, %c0_162, %c0_163] : memref<8x8x32xf32, #tpu.memory_space<vmem>>, vector<8x8x32xf32>
    %606 = vector.shape_cast %605 : vector<8x8x32xf32> to vector<64x32xf32>
    %c0_164 = arith.constant 0 : index
    %c0_165 = arith.constant 0 : index
    %c0_166 = arith.constant 0 : index
    %607 = vector.load %arg15[%c0_164, %c0_165, %c0_166] : memref<8x8x32xf32, #tpu.memory_space<vmem>>, vector<8x8x32xf32>
    %608 = vector.shape_cast %607 : vector<8x8x32xf32> to vector<64x32xf32>
    %c0_167 = arith.constant 0 : index
    %c0_168 = arith.constant 0 : index
    %609 = vector.load %arg9[%c0_167, %c0_168] : memref<32x16xf32, #tpu.memory_space<vmem>>, vector<32x16xf32>
    %cst_169 = arith.constant dense<0.000000e+00> : vector<64x16xf32>
    %610 = tpu.matmul %606, %609, %cst_169 {dimension_numbers = #tpu.dot_dimension_numbers<[1], [0], [0], [1], [0, 0, 1, 1], [], []>} : vector<64x32xf32>, vector<32x16xf32>, vector<64x16xf32> -> vector<64x16xf32>
    %c0_170 = arith.constant 0 : index
    %c0_171 = arith.constant 0 : index
    %611 = vector.load %arg10[%c0_170, %c0_171] : memref<32x16xf32, #tpu.memory_space<vmem>>, vector<32x16xf32>
    %cst_172 = arith.constant dense<0.000000e+00> : vector<64x16xf32>
    %612 = tpu.matmul %608, %611, %cst_172 {dimension_numbers = #tpu.dot_dimension_numbers<[1], [0], [0], [1], [0, 0, 1, 1], [], []>} : vector<64x32xf32>, vector<32x16xf32>, vector<64x16xf32> -> vector<64x16xf32>
    %613 = arith.addf %610, %612 : vector<64x16xf32>
    %c0_173 = arith.constant 0 : index
    %c0_174 = arith.constant 0 : index
    %614 = vector.load %arg11[%c0_173, %c0_174] : memref<1x16xf32, #tpu.memory_space<vmem>>, vector<1x16xf32>
    %615 = vector.broadcast %614 : vector<1x16xf32> to vector<64x16xf32>
    %616 = arith.addf %613, %615 : vector<64x16xf32>
    %617 = vector.shape_cast %0 : vector<8x8x16xf32> to vector<64x16xf32>
    %618 = arith.addf %616, %617 : vector<64x16xf32>
    %619 = vector.shape_cast %618 : vector<64x16xf32> to vector<8x8x16xf32>
    %c0_175 = arith.constant 0 : index
    %c0_176 = arith.constant 0 : index
    %c0_177 = arith.constant 0 : index
    %620 = vector.load %arg12[%c0_175, %c0_176, %c0_177] : memref<8x8x16xf32, #tpu.memory_space<vmem>>, vector<8x8x16xf32>
    tpu.vector_store %arg12[%c0_175, %c0_176, %c0_177], %619 {strides = array<i32>} : memref<8x8x16xf32, #tpu.memory_space<vmem>>, vector<8x8x16xf32>,
    return
  }
  func.func @transform_0(%arg0: i32) -> (i32, i32, i32) {
    %c0_i32 = arith.constant 0 : i32
    %c0_i32_0 = arith.constant 0 : i32
    %c0_i32_1 = arith.constant 0 : i32
    return %c0_i32, %arg0, %c0_i32_0 : i32, i32, i32
  }
  func.func @transform_1(%arg0: i32) -> (i32, i32) {
    %c0_i32 = arith.constant 0 : i32
    %c0_i32_0 = arith.constant 0 : i32
    %c0_i32_1 = arith.constant 0 : i32
    return %c0_i32, %c0_i32_0 : i32, i32
  }
  func.func @transform_2(%arg0: i32) -> (i32, i32) {
    %c0_i32 = arith.constant 0 : i32
    %c0_i32_0 = arith.constant 0 : i32
    %c0_i32_1 = arith.constant 0 : i32
    return %c0_i32, %c0_i32_0 : i32, i32
  }
  func.func @transform_3(%arg0: i32) -> (i32, i32) {
    %c0_i32 = arith.constant 0 : i32
    %c0_i32_0 = arith.constant 0 : i32
    %c0_i32_1 = arith.constant 0 : i32
    return %c0_i32, %c0_i32_0 : i32, i32
  }
  func.func @transform_4(%arg0: i32) -> (i32, i32) {
    %c0_i32 = arith.constant 0 : i32
    %c0_i32_0 = arith.constant 0 : i32
    %c0_i32_1 = arith.constant 0 : i32
    return %c0_i32, %c0_i32_0 : i32, i32
  }
  func.func @transform_5(%arg0: i32) -> (i32, i32) {
    %c0_i32 = arith.constant 0 : i32
    %c0_i32_0 = arith.constant 0 : i32
    %c0_i32_1 = arith.constant 0 : i32
    return %c0_i32, %c0_i32_0 : i32, i32
  }
  func.func @transform_6(%arg0: i32) -> (i32, i32) {
    %c0_i32 = arith.constant 0 : i32
    %c0_i32_0 = arith.constant 0 : i32
    %c0_i32_1 = arith.constant 0 : i32
    return %c0_i32, %c0_i32_0 : i32, i32
  }
  func.func @transform_7(%arg0: i32) -> (i32, i32) {
    %c0_i32 = arith.constant 0 : i32
    %c0_i32_0 = arith.constant 0 : i32
    %c0_i32_1 = arith.constant 0 : i32
    return %c0_i32, %c0_i32_0 : i32, i32
  }
  func.func @transform_8(%arg0: i32) -> (i32, i32) {
    %c0_i32 = arith.constant 0 : i32
    %c0_i32_0 = arith.constant 0 : i32
    %c0_i32_1 = arith.constant 0 : i32
    return %c0_i32, %c0_i32_0 : i32, i32
  }
  func.func @transform_9(%arg0: i32) -> (i32, i32) {
    %c0_i32 = arith.constant 0 : i32
    %c0_i32_0 = arith.constant 0 : i32
    %c0_i32_1 = arith.constant 0 : i32
    return %c0_i32, %c0_i32_0 : i32, i32
  }
  func.func @transform_10(%arg0: i32) -> (i32, i32) {
    %c0_i32 = arith.constant 0 : i32
    %c0_i32_0 = arith.constant 0 : i32
    %c0_i32_1 = arith.constant 0 : i32
    return %c0_i32, %c0_i32_0 : i32, i32
  }
  func.func @transform_11(%arg0: i32) -> (i32, i32, i32) {
    %c0_i32 = arith.constant 0 : i32
    %c0_i32_0 = arith.constant 0 : i32
    %c0_i32_1 = arith.constant 0 : i32
    return %c0_i32, %arg0, %c0_i32_0 : i32, i32, i32
  }
}

</mosaic_0001>

<llo_original>
// kernel: bsrnn_forward_pallas.4
$region0: #{bsrnn_forward_pallas.4}
  #allocation0 [shape = 'u32[]', space=smem, size = 0x4, offset = 0x4, fixed_abs, tag = 'smem constant byte address 0x4 - core index']
  #allocation1 [shape = 'u32[72,128]{1,0:T(1,128)}', space=vmem, size = 0x9000, scoped, tag = 'internal scratch']
  #allocation2 [shape = 'f32[8,8,256]{2,1,0:T(8,128)}', space=vmem, size = 0x10000, scoped, tag = 'scratch operand']
  #allocation3 [shape = 'f32[8,8,32]{2,1,0:T(8,128)}', space=vmem, size = 0x8000, scoped, tag = 'scratch operand']
  #allocation4 [shape = 'f32[8,8,32]{2,1,0:T(8,128)}', space=vmem, size = 0x8000, scoped, tag = 'scratch operand']
  %s0 = inlined_call_operand.vmem [shape: f32[8,16,16], index: 0, kind: input, shape index: {}]
  %s1 = inlined_call_operand.vmem [shape: f32[16,16], index: 1, kind: input, shape index: {}]
  %s2 = inlined_call_operand.vmem [shape: f32[1,16], index: 2, kind: input, shape index: {}]
  %s3 = inlined_call_operand.vmem [shape: f32[1,16], index: 3, kind: input, shape index: {}]
  %s4 = inlined_call_operand.vmem [shape: f32[16,256], index: 4, kind: input, shape index: {}]
  %s5 = inlined_call_operand.vmem [shape: f32[1,256], index: 5, kind: input, shape index: {}]
  %s6 = inlined_call_operand.vmem [shape: f32[32,128], index: 6, kind: input, shape index: {}]
  %s7 = inlined_call_operand.vmem [shape: f32[32,128], index: 7, kind: input, shape index: {}]
  %s8 = inlined_call_operand.vmem [shape: f32[32,16], index: 8, kind: input, shape index: {}]
  %s9 = inlined_call_operand.vmem [shape: f32[32,16], index: 9, kind: input, shape index: {}]
  %s10 = inlined_call_operand.vmem [shape: f32[1,16], index: 10, kind: input, shape index: {}]
  %s11 = inlined_call_operand.vmem [shape: f32[8,16,16], index: 11, kind: output, shape index: {}]
  %s12 = sld [smem:[#allocation0]]
  $region149: #{bsrnn_forward_pallas.4} parent=0
    _
  %s14 = ssub.s32 1, %s12
  %s15 = scalar_select 0, %s14, %s12
  $region1: #{bsrnn_forward_pallas.4} parent=0
    #allocation5 [shape = 'u8[65536]{0}', space=vmem, size = 0x10000, scoped, tag = 'input window, operand 0']
    #allocation6 [shape = 'u8[65536]{0}', space=vmem, size = 0x10000, scoped, tag = 'output window, operand 0']
    loop: start=0, step=1, limit=4
    $region2: #{bsrnn_forward_pallas.4} parent=1 // loop_pre_header
      _
    $region3: #{bsrnn_forward_pallas.4} parent=1 // loop_header
      %s17 = sphi 0, %s21
      %p18 = scmp.ge.s32.totalorder %s17, 4
      %s27 = sphi 0, %s29
      %s30 = sphi 0, %s27
      %s31 = sphi 0, %s30
      %s47 = sphi 0, %s31
      %s51 = sphi 0, %s51
      %s53 = sphi 0, %s51
      %s54 = sphi 0, %s53
      %s68 = sphi 0, %s54
      %s72 = sphi 0, %s72
      %s74 = sphi 0, %s72
      %s75 = sphi 0, %s74
      %s89 = sphi 0, %s75
      %s93 = sphi 0, %s93
      %s95 = sphi 0, %s93
      %s96 = sphi 0, %s95
      %s110 = sphi 0, %s96
      %s114 = sphi 0, %s114
      %s116 = sphi 0, %s114
      %s117 = sphi 0, %s116
      %s131 = sphi 0, %s117
      %s135 = sphi 0, %s135
      %s137 = sphi 0, %s135
      %s138 = sphi 0, %s137
      %s152 = sphi 0, %s138
      %s156 = sphi 0, %s156
      %s158 = sphi 0, %s156
      %s159 = sphi 0, %s158
      %s173 = sphi 0, %s159
      %s177 = sphi 0, %s177
      %s179 = sphi 0, %s177
      %s180 = sphi 0, %s179
      %s194 = sphi 0, %s180
      %s198 = sphi 0, %s198
      %s200 = sphi 0, %s198
      %s201 = sphi 0, %s200
      %s215 = sphi 0, %s201
      %s219 = sphi 0, %s219
      %s221 = sphi 0, %s219
      %s222 = sphi 0, %s221
      %s236 = sphi 0, %s222
      %s240 = sphi 0, %s240
      %s242 = sphi 0, %s240
      %s243 = sphi 0, %s242
      %s257 = sphi 0, %s243
      %s263 = sphi 0, %s265
      %s266 = sphi 0, %s263
      %s267 = sphi 0, %s266
      %s283 = sphi 0, %s267
    $region4: #{bsrnn_forward_pallas.4} parent=1 // loop_header_branch
      %20 = sbr.rel (%p18) target = $region8
    $region5: #{bsrnn_forward_pallas.4} parent=1 // loop_body
      %s22 = ssub.s32 %s17, 1
      %s23 = ssub.s32 %s17, 2
      %s24 = sadd.s32 %s17, 1
      %s25 = ssub.s32 %s17, %s24
      %p26 = scmp.eq.s32.totalorder %s25, 0
      %s28 = sadd.s32 %s27, 1
      %s29 = scalar_select %p26, %s27, %s28
      %p32 = pneg %p26
      %p33 = scmp.eq.s32.totalorder %s17, 1
      %p34 = por %p32, %p33
      %p35 = scmp.ne.s32.totalorder %s27, %s30
      %p36 = scmp.eq.s32.totalorder %s17, 0
      %p37 = por %p35, %p36
      %p38 = scmp.ne.s32.totalorder %s27, %s30
      %p39 = scmp.eq.s32.totalorder %s22, 1
      %p40 = por %p38, %p39
      %p41 = scmp.ne.s32.totalorder %s30, %s31
      %p42 = scmp.eq.s32.totalorder %s22, 0
      %p43 = por %p41, %p42
      %p44 = scmp.ne.s32.totalorder %s30, %s31
      %p45 = scmp.eq.s32.totalorder %s23, 1
      %p46 = por %p44, %p45
      %p48 = scmp.ne.s32.totalorder %s31, %s47
      %p49 = scmp.eq.s32.totalorder %s23, 0
      %p50 = por %p48, %p49
      %s52 = sadd.s32 %s51, 1
      %p55 = scmp.eq.s32.totalorder %s17, 1
      %p56 = scmp.ne.s32.totalorder %s51, %s53
      %p57 = scmp.eq.s32.totalorder %s17, 0
      %p58 = por %p56, %p57
      %p59 = scmp.ne.s32.totalorder %s51, %s53
      %p60 = scmp.eq.s32.totalorder %s22, 1
      %p61 = por %p59, %p60
      %p62 = scmp.ne.s32.totalorder %s53, %s54
      %p63 = scmp.eq.s32.totalorder %s22, 0
      %p64 = por %p62, %p63
      %p65 = scmp.ne.s32.totalorder %s53, %s54
      %p66 = scmp.eq.s32.totalorder %s23, 1
      %p67 = por %p65, %p66
      %p69 = scmp.ne.s32.totalorder %s54, %s68
      %p70 = scmp.eq.s32.totalorder %s23, 0
      %p71 = por %p69, %p70
      %s73 = sadd.s32 %s72, 1
      %p76 = scmp.eq.s32.totalorder %s17, 1
      %p77 = scmp.ne.s32.totalorder %s72, %s74
      %p78 = scmp.eq.s32.totalorder %s17, 0
      %p79 = por %p77, %p78
      %p80 = scmp.ne.s32.totalorder %s72, %s74
      %p81 = scmp.eq.s32.totalorder %s22, 1
      %p82 = por %p80, %p81
      %p83 = scmp.ne.s32.totalorder %s74, %s75
      %p84 = scmp.eq.s32.totalorder %s22, 0
      %p85 = por %p83, %p84
      %p86 = scmp.ne.s32.totalorder %s74, %s75
      %p87 = scmp.eq.s32.totalorder %s23, 1
      %p88 = por %p86, %p87
      %p90 = scmp.ne.s32.totalorder %s75, %s89
      %p91 = scmp.eq.s32.totalorder %s23, 0
      %p92 = por %p90, %p91
      %s94 = sadd.s32 %s93, 1
      %p97 = scmp.eq.s32.totalorder %s17, 1
      %p98 = scmp.ne.s32.totalorder %s93, %s95
      %p99 = scmp.eq.s32.totalorder %s17, 0
      %p100 = por %p98, %p99
      %p101 = scmp.ne.s32.totalorder %s93, %s95
      %p102 = scmp.eq.s32.totalorder %s22, 1
      %p103 = por %p101, %p102
      %p104 = scmp.ne.s32.totalorder %s95, %s96
      %p105 = scmp.eq.s32.totalorder %s22, 0
      %p106 = por %p104, %p105
      %p107 = scmp.ne.s32.totalorder %s95, %s96
      %p108 = scmp.eq.s32.totalorder %s23, 1
      %p109 = por %p107, %p108
      %p111 = scmp.ne.s32.totalorder %s96, %s110
      %p112 = scmp.eq.s32.totalorder %s23, 0
      %p113 = por %p111, %p112
      %s115 = sadd.s32 %s114, 1
      %p118 = scmp.eq.s32.totalorder %s17, 1
      %p119 = scmp.ne.s32.totalorder %s114, %s116
      %p120 = scmp.eq.s32.totalorder %s17, 0
      %p121 = por %p119, %p120
      %p122 = scmp.ne.s32.totalorder %s114, %s116
      %p123 = scmp.eq.s32.totalorder %s22, 1
      %p124 = por %p122, %p123
      %p125 = scmp.ne.s32.totalorder %s116, %s117
      %p126 = scmp.eq.s32.totalorder %s22, 0
      %p127 = por %p125, %p126
      %p128 = scmp.ne.s32.totalorder %s116, %s117
      %p129 = scmp.eq.s32.totalorder %s23, 1
      %p130 = por %p128, %p129
      %p132 = scmp.ne.s32.totalorder %s117, %s131
      %p133 = scmp.eq.s32.totalorder %s23, 0
      %p134 = por %p132, %p133
      %s136 = sadd.s32 %s135, 1
      %p139 = scmp.eq.s32.totalorder %s17, 1
      %p140 = scmp.ne.s32.totalorder %s135, %s137
      %p141 = scmp.eq.s32.totalorder %s17, 0
      %p142 = por %p140, %p141
      %p143 = scmp.ne.s32.totalorder %s135, %s137
      %p144 = scmp.eq.s32.totalorder %s22, 1
      %p145 = por %p143, %p144
      %p146 = scmp.ne.s32.totalorder %s137, %s138
      %p147 = scmp.eq.s32.totalorder %s22, 0
      %p148 = por %p146, %p147
      %p149 = scmp.ne.s32.totalorder %s137, %s138
      %p150 = scmp.eq.s32.totalorder %s23, 1
      %p151 = por %p149, %p150
      %p153 = scmp.ne.s32.totalorder %s138, %s152
      %p154 = scmp.eq.s32.totalorder %s23, 0
      %p155 = por %p153, %p154
      %s157 = sadd.s32 %s156, 1
      %p160 = scmp.eq.s32.totalorder %s17, 1
      %p161 = scmp.ne.s32.totalorder %s156, %s158
      %p162 = scmp.eq.s32.totalorder %s17, 0
      %p163 = por %p161, %p162
      %p164 = scmp.ne.s32.totalorder %s156, %s158
      %p165 = scmp.eq.s32.totalorder %s22, 1
      %p166 = por %p164, %p165
      %p167 = scmp.ne.s32.totalorder %s158, %s159
      %p168 = scmp.eq.s32.totalorder %s22, 0
      %p169 = por %p167, %p168
      %p170 = scmp.ne.s32.totalorder %s158, %s159
      %p171 = scmp.eq.s32.totalorder %s23, 1
      %p172 = por %p170, %p171
      %p174 = scmp.ne.s32.totalorder %s159, %s173
      %p175 = scmp.eq.s32.totalorder %s23, 0
      %p176 = por %p174, %p175
      %s178 = sadd.s32 %s177, 1
      %p181 = scmp.eq.s32.totalorder %s17, 1
      %p182 = scmp.ne.s32.totalorder %s177, %s179
      %p183 = scmp.eq.s32.totalorder %s17, 0
      %p184 = por %p182, %p183
      %p185 = scmp.ne.s32.totalorder %s177, %s179
      %p186 = scmp.eq.s32.totalorder %s22, 1
      %p187 = por %p185, %p186
      %p188 = scmp.ne.s32.totalorder %s179, %s180
      %p189 = scmp.eq.s32.totalorder %s22, 0
      %p190 = por %p188, %p189
      %p191 = scmp.ne.s32.totalorder %s179, %s180
      %p192 = scmp.eq.s32.totalorder %s23, 1
      %p193 = por %p191, %p192
      %p195 = scmp.ne.s32.totalorder %s180, %s194
      %p196 = scmp.eq.s32.totalorder %s23, 0
      %p197 = por %p195, %p196
      %s199 = sadd.s32 %s198, 1
      %p202 = scmp.eq.s32.totalorder %s17, 1
      %p203 = scmp.ne.s32.totalorder %s198, %s200
      %p204 = scmp.eq.s32.totalorder %s17, 0
      %p205 = por %p203, %p204
      %p206 = scmp.ne.s32.totalorder %s198, %s200
      %p207 = scmp.eq.s32.totalorder %s22, 1
      %p208 = por %p206, %p207
      %p209 = scmp.ne.s32.totalorder %s200, %s201
      %p210 = scmp.eq.s32.totalorder %s22, 0
      %p211 = por %p209, %p210
      %p212 = scmp.ne.s32.totalorder %s200, %s201
      %p213 = scmp.eq.s32.totalorder %s23, 1
      %p214 = por %p212, %p213
      %p216 = scmp.ne.s32.totalorder %s201, %s215
      %p217 = scmp.eq.s32.totalorder %s23, 0
      %p218 = por %p216, %p217
      %s220 = sadd.s32 %s219, 1
      %p223 = scmp.eq.s32.totalorder %s17, 1
      %p224 = scmp.ne.s32.totalorder %s219, %s221
      %p225 = scmp.eq.s32.totalorder %s17, 0
      %p226 = por %p224, %p225
      %p227 = scmp.ne.s32.totalorder %s219, %s221
      %p228 = scmp.eq.s32.totalorder %s22, 1
      %p229 = por %p227, %p228
      %p230 = scmp.ne.s32.totalorder %s221, %s222
      %p231 = scmp.eq.s32.totalorder %s22, 0
      %p232 = por %p230, %p231
      %p233 = scmp.ne.s32.totalorder %s221, %s222
      %p234 = scmp.eq.s32.totalorder %s23, 1
      %p235 = por %p233, %p234
      %p237 = scmp.ne.s32.totalorder %s222, %s236
      %p238 = scmp.eq.s32.totalorder %s23, 0
      %p239 = por %p237, %p238
      %s241 = sadd.s32 %s240, 1
      %p244 = scmp.eq.s32.totalorder %s17, 1
      %p245 = scmp.ne.s32.totalorder %s240, %s242
      %p246 = scmp.eq.s32.totalorder %s17, 0
      %p247 = por %p245, %p246
      %p248 = scmp.ne.s32.totalorder %s240, %s242
      %p249 = scmp.eq.s32.totalorder %s22, 1
      %p250 = por %p248, %p249
      %p251 = scmp.ne.s32.totalorder %s242, %s243
      %p252 = scmp.eq.s32.totalorder %s22, 0
      %p253 = por %p251, %p252
      %p254 = scmp.ne.s32.totalorder %s242, %s243
      %p255 = scmp.eq.s32.totalorder %s23, 1
      %p256 = por %p254, %p255
      %p258 = scmp.ne.s32.totalorder %s243, %s257
      %p259 = scmp.eq.s32.totalorder %s23, 0
      %p260 = por %p258, %p259
      %s261 = ssub.s32 %s17, %s24
      %p262 = scmp.eq.s32.totalorder %s261, 0
      %s264 = sadd.s32 %s263, 1
      %s265 = scalar_select %p262, %s263, %s264
      %p268 = pneg %p262
      %p269 = scmp.eq.s32.totalorder %s17, 1
      %p270 = por %p268, %p269
      %p271 = scmp.ne.s32.totalorder %s263, %s266
      %p272 = scmp.eq.s32.totalorder %s17, 0
      %p273 = por %p271, %p272
      %p274 = scmp.ne.s32.totalorder %s263, %s266
      %p275 = scmp.eq.s32.totalorder %s22, 1
      %p276 = por %p274, %p275
      %p277 = scmp.ne.s32.totalorder %s266, %s267
      %p278 = scmp.eq.s32.totalorder %s22, 0
      %p279 = por %p277, %p278
      %p280 = scmp.ne.s32.totalorder %s266, %s267
      %p281 = scmp.eq.s32.totalorder %s23, 1
      %p282 = por %p280, %p281
      %p284 = scmp.ne.s32.totalorder %s267, %s283
      %p285 = scmp.eq.s32.totalorder %s23, 0
      %p286 = por %p284, %p285
      %p287 = scmp.le.s32.totalorder 1, %s17
      %p288 = scmp.lt.s32.totalorder %s17, 3
      %p289 = pnand %p287, %p288
      %p290 = pneg %p289
      // Predicated region
      $region9: #{bsrnn_forward_pallas.4} parent=5 // pred_check
        _
      $region10: #{bsrnn_forward_pallas.4} parent=5 // pred_check_branch
        %292 = sbr.rel (%p289) target = $region12
      $region11: #{bsrnn_forward_pallas.4} parent=5 // pred_region
        %s293 = ssub.s32 %s17, 1
        // Predicated region
        $region13: #{bsrnn_forward_pallas.4} parent=11 // pred_check
          %p294 = pneg %p64
        $region14: #{bsrnn_forward_pallas.4} parent=11 // pred_check_branch
          %296 = sbr.rel (%p294) target = $region16
        $region15: #{bsrnn_forward_pallas.4} parent=11 // pred_region
          _
        $region16: #{bsrnn_forward_pallas.4} parent=11 // pred_fallthru
          _
        // Predicated region
        $region17: #{bsrnn_forward_pallas.4} parent=11 // pred_check
          %p297 = pneg %p85
        $region18: #{bsrnn_forward_pallas.4} parent=11 // pred_check_branch
          %299 = sbr.rel (%p297) target = $region20
        $region19: #{bsrnn_forward_pallas.4} parent=11 // pred_region
          _
        $region20: #{bsrnn_forward_pallas.4} parent=11 // pred_fallthru
          _
        // Predicated region
        $region21: #{bsrnn_forward_pallas.4} parent=11 // pred_check
          %p300 = pneg %p106
        $region22: #{bsrnn_forward_pallas.4} parent=11 // pred_check_branch
          %302 = sbr.rel (%p300) target = $region24
        $region23: #{bsrnn_forward_pallas.4} parent=11 // pred_region
          _
        $region24: #{bsrnn_forward_pallas.4} parent=11 // pred_fallthru
          _
        // Predicated region
        $region25: #{bsrnn_forward_pallas.4} parent=11 // pred_check
          %p303 = pneg %p127
        $region26: #{bsrnn_forward_pallas.4} parent=11 // pred_check_branch
          %305 = sbr.rel (%p303) target = $region28
        $region27: #{bsrnn_forward_pallas.4} parent=11 // pred_region
          _
        $region28: #{bsrnn_forward_pallas.4} parent=11 // pred_fallthru
          _
        // Predicated region
        $region29: #{bsrnn_forward_pallas.4} parent=11 // pred_check
          %p306 = pneg %p148
        $region30: #{bsrnn_forward_pallas.4} parent=11 // pred_check_branch
          %308 = sbr.rel (%p306) target = $region32
        $region31: #{bsrnn_forward_pallas.4} parent=11 // pred_region
          _
        $region32: #{bsrnn_forward_pallas.4} parent=11 // pred_fallthru
          _
        // Predicated region
        $region33: #{bsrnn_forward_pallas.4} parent=11 // pred_check
          %p309 = pneg %p169
        $region34: #{bsrnn_forward_pallas.4} parent=11 // pred_check_branch
          %311 = sbr.rel (%p309) target = $region36
        $region35: #{bsrnn_forward_pallas.4} parent=11 // pred_region
          _
        $region36: #{bsrnn_forward_pallas.4} parent=11 // pred_fallthru
          _
        // Predicated region
        $region37: #{bsrnn_forward_pallas.4} parent=11 // pred_check
          %p312 = pneg %p190
        $region38: #{bsrnn_forward_pallas.4} parent=11 // pred_check_branch
          %314 = sbr.rel (%p312) target = $region40
        $region39: #{bsrnn_forward_pallas.4} parent=11 // pred_region
          _
        $region40: #{bsrnn_forward_pallas.4} parent=11 // pred_fallthru
          _
        // Predicated region
        $region41: #{bsrnn_forward_pallas.4} parent=11 // pred_check
          %p315 = pneg %p211
        $region42: #{bsrnn_forward_pallas.4} parent=11 // pred_check_branch
          %317 = sbr.rel (%p315) target = $region44
        $region43: #{bsrnn_forward_pallas.4} parent=11 // pred_region
          _
        $region44: #{bsrnn_forward_pallas.4} parent=11 // pred_fallthru
          _
        // Predicated region
        $region45: #{bsrnn_forward_pallas.4} parent=11 // pred_check
          %p318 = pneg %p232
        $region46: #{bsrnn_forward_pallas.4} parent=11 // pred_check_branch
          %320 = sbr.rel (%p318) target = $region48
        $region47: #{bsrnn_forward_pallas.4} parent=11 // pred_region
          _
        $region48: #{bsrnn_forward_pallas.4} parent=11 // pred_fallthru
          _
        // Predicated region
        $region49: #{bsrnn_forward_pallas.4} parent=11 // pred_check
          %p321 = pneg %p253
        $region50: #{bsrnn_forward_pallas.4} parent=11 // pred_check_branch
          %323 = sbr.rel (%p321) target = $region52
        $region51: #{bsrnn_forward_pallas.4} parent=11 // pred_region
          _
        $region52: #{bsrnn_forward_pallas.4} parent=11 // pred_fallthru
          _
      $region12: #{bsrnn_forward_pallas.4} parent=5 // pred_fallthru
        _
      %p324 = scmp.lt.s32.totalorder %s17, 2
      // Predicated region
      $region53: #{bsrnn_forward_pallas.4} parent=5 // pred_check
        %p325 = pneg %p324
      $region54: #{bsrnn_forward_pallas.4} parent=5 // pred_check_branch
        %327 = sbr.rel (%p325) target = $region56
      $region55: #{bsrnn_forward_pallas.4} parent=5 // pred_region
        // Predicated region
        $region57: #{bsrnn_forward_pallas.4} parent=55 // pred_check
          %p328 = pneg %p37
        $region58: #{bsrnn_forward_pallas.4} parent=55 // pred_check_branch
          %330 = sbr.rel (%p328) target = $region60
        $region59: #{bsrnn_forward_pallas.4} parent=55 // pred_region
          %s331 = sand.u32 %s27, 1
          %s332 = sand.u32 %s27, 1
          %s333 = smul.addr %s332, 64
          %s334 = scalar_lea.vmem [#allocation5], %s333
          %s335 = smul.addr %s17, 8
          %s336 = scalar_lea.vmem %s0, %s335
          // Predicated region
          $region61: #{bsrnn_forward_pallas.4} parent=59 // pred_check
            _
          $region62: #{bsrnn_forward_pallas.4} parent=59 // pred_check_branch
            %338 = sbr.rel (0) target = $region64
          $region63: #{bsrnn_forward_pallas.4} parent=59 // pred_region
            // Predicated region
            $region65: #{bsrnn_forward_pallas.4} parent=63 // pred_check
              _
            $region66: #{bsrnn_forward_pallas.4} parent=63 // pred_check_branch
              %340 = sbr.rel (0) target = $region68
            $region67: #{bsrnn_forward_pallas.4} parent=63 // pred_region
              // Predicated region
              $region80: #{bsrnn_forward_pallas.4} parent=67 // pred_check
                _
              $region81: #{bsrnn_forward_pallas.4} parent=67 // pred_check_branch
                %370 = sbr.rel (0) target = $region83
              $region82: #{bsrnn_forward_pallas.4} parent=67 // pred_region
                loop: start=0, step=1, limit=1
                $region84: #{bsrnn_forward_pallas.4} parent=82 // loop_pre_header
                  _
                $region85: #{bsrnn_forward_pallas.4} parent=82 // loop_header
                  %s372 = sphi 0, %s376
                  %p373 = scmp.ge.s32.totalorder %s372, 1
                  %s377 = sphi %s336, %s336
                  %s378 = sphi %s334, %s334
                $region86: #{bsrnn_forward_pallas.4} parent=82 // loop_header_branch
                  %375 = sbr.rel (%p373) target = $region90
                $region87: #{bsrnn_forward_pallas.4} parent=82 // loop_body
                  %v379 = vld [vmem:[%s377] sm:$0xff]
                  %380 = vst [vmem:[%s378] sm:$0xff] %v379
                  %v381 = vld [vmem:[%s377 + $0x10] sm:$0xff]
                  %382 = vst [vmem:[%s378 + $0x8] sm:$0xff] %v381
                  %v383 = vld [vmem:[%s377 + $0x20] sm:$0xff]
                  %384 = vst [vmem:[%s378 + $0x10] sm:$0xff] %v383
                  %v385 = vld [vmem:[%s377 + $0x30] sm:$0xff]
                  %386 = vst [vmem:[%s378 + $0x18] sm:$0xff] %v385
                  %v387 = vld [vmem:[%s377 + $0x40] sm:$0xff]
                  %388 = vst [vmem:[%s378 + $0x20] sm:$0xff] %v387
                  %v389 = vld [vmem:[%s377 + $0x50] sm:$0xff]
                  %390 = vst [vmem:[%s378 + $0x28] sm:$0xff] %v389
                  %v391 = vld [vmem:[%s377 + $0x60] sm:$0xff]
                  %392 = vst [vmem:[%s378 + $0x30] sm:$0xff] %v391
                  %v393 = vld [vmem:[%s377 + $0x70] sm:$0xff]
                  %394 = vst [vmem:[%s378 + $0x38] sm:$0xff] %v393
                $region88: #{bsrnn_forward_pallas.4} parent=82 // loop_footer
                  %s376 = sadd.s32 1, %s372
                $region89: #{bsrnn_forward_pallas.4} parent=82 // loop_footer_branch
                  %371 = sbr.rel target = $region85
                $region90: #{bsrnn_forward_pallas.4} parent=82 // loop_exit
                  _
              $region83: #{bsrnn_forward_pallas.4} parent=67 // pred_fallthru
                _
              // Predicated region
              $region91: #{bsrnn_forward_pallas.4} parent=67 // pred_check
                _
              $region92: #{bsrnn_forward_pallas.4} parent=67 // pred_check_branch
                %396 = sbr.rel target = $region94
              $region93: #{bsrnn_forward_pallas.4} parent=67 // pred_region
                _
              $region94: #{bsrnn_forward_pallas.4} parent=67 // pred_fallthru
                _
            $region68: #{bsrnn_forward_pallas.4} parent=63 // pred_fallthru
              _
            // Predicated region
            $region69: #{bsrnn_forward_pallas.4} parent=63 // pred_check
              _
            $region70: #{bsrnn_forward_pallas.4} parent=63 // pred_check_branch
              %342 = sbr.rel target = $region72
            $region71: #{bsrnn_forward_pallas.4} parent=63 // pred_region
              %s344 = ssub.s32 256, 1
              loop: start=0, step=1, limit=1
              $region73: #{bsrnn_forward_pallas.4} parent=71 // loop_pre_header
                _
              $region74: #{bsrnn_forward_pallas.4} parent=71 // loop_header
                %s346 = sphi 0, %s350
                %p347 = scmp.ge.s32.totalorder %s346, 1
                %s351 = sphi %s336, %s336
                %s352 = sphi %s334, %s334
              $region75: #{bsrnn_forward_pallas.4} parent=71 // loop_header_branch
                %349 = sbr.rel (%p347) target = $region79
              $region76: #{bsrnn_forward_pallas.4} parent=71 // loop_body
                %v353 = vld [vmem:[%s351] sm:%s344]
                %354 = vst [vmem:[%s352] sm:%s344] %v353
                %v355 = vld [vmem:[%s351 + $0x10] sm:%s344]
                %356 = vst [vmem:[%s352 + $0x8] sm:%s344] %v355
                %v357 = vld [vmem:[%s351 + $0x20] sm:%s344]
                %358 = vst [vmem:[%s352 + $0x10] sm:%s344] %v357
                %v359 = vld [vmem:[%s351 + $0x30] sm:%s344]
                %360 = vst [vmem:[%s352 + $0x18] sm:%s344] %v359
                %v361 = vld [vmem:[%s351 + $0x40] sm:%s344]
                %362 = vst [vmem:[%s352 + $0x20] sm:%s344] %v361
                %v363 = vld [vmem:[%s351 + $0x50] sm:%s344]
                %364 = vst [vmem:[%s352 + $0x28] sm:%s344] %v363
                %v365 = vld [vmem:[%s351 + $0x60] sm:%s344]
                %366 = vst [vmem:[%s352 + $0x30] sm:%s344] %v365
                %v367 = vld [vmem:[%s351 + $0x70] sm:%s344]
                %368 = vst [vmem:[%s352 + $0x38] sm:%s344] %v367
              $region77: #{bsrnn_forward_pallas.4} parent=71 // loop_footer
                %s350 = sadd.s32 1, %s346
              $region78: #{bsrnn_forward_pallas.4} parent=71 // loop_footer_branch
                %345 = sbr.rel target = $region74
              $region79: #{bsrnn_forward_pallas.4} parent=71 // loop_exit
                _
            $region72: #{bsrnn_forward_pallas.4} parent=63 // pred_fallthru
              _
          $region64: #{bsrnn_forward_pallas.4} parent=59 // pred_fallthru
            _
          %397 = vnop
        $region60: #{bsrnn_forward_pallas.4} parent=55 // pred_fallthru
          _
      $region56: #{bsrnn_forward_pallas.4} parent=5 // pred_fallthru
        _
      %p398 = scmp.le.s32.totalorder 1, %s17
      %p399 = scmp.lt.s32.totalorder %s17, 3
      %p400 = pnand %p398, %p399
      %p401 = pneg %p400
      // Predicated region
      $region95: #{bsrnn_forward_pallas.4} parent=5 // pred_check
        _
      $region96: #{bsrnn_forward_pallas.4} parent=5 // pred_check_branch
        %403 = sbr.rel (%p400) target = $region98
      $region97: #{bsrnn_forward_pallas.4} parent=5 // pred_region
        %s404 = ssub.s32 %s17, 1
        %s405 = sand.u32 %s30, 1
        %s406 = sand.u32 %s30, 1
        %s407 = smul.addr %s406, 64
        %s408 = scalar_lea.vmem [#allocation5], %s407
        // Predicated region
        $region99: #{bsrnn_forward_pallas.4} parent=97 // pred_check
          %p409 = pneg %p43
        $region100: #{bsrnn_forward_pallas.4} parent=97 // pred_check_branch
          %411 = sbr.rel (%p409) target = $region102
        $region101: #{bsrnn_forward_pallas.4} parent=97 // pred_region
          _
        $region102: #{bsrnn_forward_pallas.4} parent=97 // pred_fallthru
          _
        %s412 = sand.u32 %s30, 1
        %s413 = sand.u32 %s30, 1
        %s414 = smul.addr %s413, 64
        %s415 = scalar_lea.vmem [#allocation5], %s414
        %p416 = pneg %p43
        %p417 = pneg %p40
        %p418 = pneg %p64
        %p419 = pneg %p61
        %p420 = pneg %p85
        %p421 = pneg %p82
        %p422 = pneg %p106
        %p423 = pneg %p103
        %p424 = pneg %p127
        %p425 = pneg %p124
        %p426 = pneg %p148
        %p427 = pneg %p145
        %p428 = pneg %p169
        %p429 = pneg %p166
        %p430 = pneg %p190
        %p431 = pneg %p187
        %p432 = pneg %p211
        %p433 = pneg %p208
        %p434 = pneg %p232
        %p435 = pneg %p229
        %p436 = pneg %p253
        %p437 = pneg %p250
        %p438 = pneg %p279
        %p439 = pneg %p276
        %s440 = sand.u32 %s266, 1
        %s441 = sand.u32 %s266, 1
        %s442 = smul.addr %s441, 64
        %s443 = scalar_lea.vmem [#allocation6], %s442
        %v444 = vld [vmem:[%s408] sm:$0xff]
        %v445 = vld [vmem:[%s408 + $0x8] sm:$0xff]
        %v446 = vld [vmem:[%s408 + $0x10] sm:$0xff]
        %v447 = vld [vmem:[%s408 + $0x18] sm:$0xff]
        %v448 = vld [vmem:[%s408 + $0x20] sm:$0xff]
        %v449 = vld [vmem:[%s408 + $0x28] sm:$0xff]
        %v450 = vld [vmem:[%s408 + $0x30] sm:$0xff]
        %v451 = vld [vmem:[%s408 + $0x38] sm:$0xff]
        %v452 = vld [vmem:[%s1] sm:$0xff]
        %v453 = vld [vmem:[%s1 + $0x8] sm:$0xff]
        %vm454 = vcmask 130048
        %v455 = vsel %vm454, %v444, 0.0
        %v456 = vsel %vm454, %v445, 0.0
        %v457 = vadd.f32 %v455, %v456
        %v458 = vsel %vm454, %v446, 0.0
        %v459 = vadd.f32 %v457, %v458
        %v460 = vsel %vm454, %v447, 0.0
        %v461 = vadd.f32 %v459, %v460
        %v462 = vsel %vm454, %v448, 0.0
        %v463 = vadd.f32 %v461, %v462
        %v464 = vsel %vm454, %v449, 0.0
        %v465 = vadd.f32 %v463, %v464
        %v466 = vsel %vm454, %v450, 0.0
        %v467 = vadd.f32 %v465, %v466
        %v468 = vsel %vm454, %v451, 0.0
        %v469 = vadd.f32 %v467, %v468
        %v471 = vsel %vm454, %v469, 0
        %473 = vmatpush.msra.mxu0 0.0
        %474 = vmatpush.msra.mxu0 0.0
        %475 = vmatpush.msra.mxu0 0.0
        %476 = vmatpush.msra.mxu0 0.0
        %477 = vmatpush.msra.mxu0 0.0
        %478 = vmatpush.msra.mxu0 0.0
        %479 = vmatpush.msra.mxu0 0.0
        %480 = vmatpush.msra.mxu0 0.0
        %481 = vmatpush.msra.mxu0 0.0
        %482 = vmatpush.msra.mxu0 0.0
        %483 = vmatpush.msra.mxu0 0.0
        %484 = vmatpush.msra.mxu0 0.0
        %485 = vmatpush.msra.mxu0 0.0
        %486 = vmatpush.msra.mxu0 0.0
        %487 = vmatpush.msra.mxu0 %v453
        %488 = vmatpush.msra.mxu0 %v452
        %489 = vmatmul.f32.gmra.mxu0 %v471
        %v490 = vpop.f32.mrf.mxu0
        %v491 = vadd.f32 0.0, %v490
        %492 = vdwg.mxu0
        %v493 = vsub.f32 %v444, %v491
        %v494 = vsub.f32 %v445, %v491
        %v495 = vsub.f32 %v446, %v491
        %v496 = vsub.f32 %v447, %v491
        %v497 = vsub.f32 %v448, %v491
        %v498 = vsub.f32 %v449, %v491
        %v499 = vsub.f32 %v450, %v491
        %v500 = vsub.f32 %v451, %v491
        %v501 = vmul.f32 %v493, %v493
        %v502 = vmul.f32 %v494, %v494
        %v503 = vmul.f32 %v495, %v495
        %v504 = vmul.f32 %v496, %v496
        %v505 = vmul.f32 %v497, %v497
        %v506 = vmul.f32 %v498, %v498
        %v507 = vmul.f32 %v499, %v499
        %v508 = vmul.f32 %v500, %v500
        %v509 = vsel %vm454, %v501, 0.0
        %v510 = vsel %vm454, %v502, 0.0
        %v511 = vadd.f32 %v509, %v510
        %v512 = vsel %vm454, %v503, 0.0
        %v513 = vadd.f32 %v511, %v512
        %v514 = vsel %vm454, %v504, 0.0
        %v515 = vadd.f32 %v513, %v514
        %v516 = vsel %vm454, %v505, 0.0
        %v517 = vadd.f32 %v515, %v516
        %v518 = vsel %vm454, %v506, 0.0
        %v519 = vadd.f32 %v517, %v518
        %v520 = vsel %vm454, %v507, 0.0
        %v521 = vadd.f32 %v519, %v520
        %v522 = vsel %vm454, %v508, 0.0
        %v523 = vadd.f32 %v521, %v522
        %v525 = vsel %vm454, %v523, 0
        %527 = vmatpush.msra.mxu0 0.0
        %528 = vmatpush.msra.mxu0 0.0
        %529 = vmatpush.msra.mxu0 0.0
        %530 = vmatpush.msra.mxu0 0.0
        %531 = vmatpush.msra.mxu0 0.0
        %532 = vmatpush.msra.mxu0 0.0
        %533 = vmatpush.msra.mxu0 0.0
        %534 = vmatpush.msra.mxu0 0.0
        %535 = vmatpush.msra.mxu0 0.0
        %536 = vmatpush.msra.mxu0 0.0
        %537 = vmatpush.msra.mxu0 0.0
        %538 = vmatpush.msra.mxu0 0.0
        %539 = vmatpush.msra.mxu0 0.0
        %540 = vmatpush.msra.mxu0 0.0
        %541 = vmatpush.msra.mxu0 %v453
        %542 = vmatpush.msra.mxu0 %v452
        %543 = vmatmul.f32.gmra.mxu0 %v525
        %v544 = vpop.f32.mrf.mxu0
        %v545 = vadd.f32 1e-05, %v544
        %546 = vdwg.mxu0
        %v547 = vrsqrt.pop %v545
        %v548 = vmul.f32 %v547, %v545
        %v549 = vmul.f32 %v548, %v547
        %v550 = vmul.f32 0.5, %v549
        %v551 = vsub.f32 1.5, %v550
        %v552 = vmul.f32 %v547, %v551
        %vm553 = vweird.f32 %v545
        %vm554 = vweird.f32 %v547
        %vm555 = vmor %vm553, %vm554
        %v556 = vsel %vm555, %v547, %v552
        %v557 = vld [vmem:[%s2] sm:$0x1]
        %v559 = vperm.slane %v557, 0
        %v561 = vmul.f32 %v556, %v559
        %v562 = vld [vmem:[%s3] sm:$0x1]
        %v563 = vmul.f32 %v491, %v561
        %v565 = vperm.slane %v562, 0
        %v567 = vsub.f32 %v565, %v563
        %v568 = vmul.f32 %v444, %v561
        %v569 = vmul.f32 %v445, %v561
        %v570 = vmul.f32 %v446, %v561
        %v571 = vmul.f32 %v447, %v561
        %v572 = vmul.f32 %v448, %v561
        %v573 = vmul.f32 %v449, %v561
        %v574 = vmul.f32 %v450, %v561
        %v575 = vmul.f32 %v451, %v561
        %v576 = vadd.f32 %v568, %v567
        %v577 = vadd.f32 %v569, %v567
        %v578 = vadd.f32 %v570, %v567
        %v579 = vadd.f32 %v571, %v567
        %v580 = vadd.f32 %v572, %v567
        %v581 = vadd.f32 %v573, %v567
        %v582 = vadd.f32 %v574, %v567
        %v583 = vadd.f32 %v575, %v567
        %v584 = vld [vmem:[%s4] sm:$0xff]
        %v585 = vld [vmem:[%s4 + $0x8] sm:$0xff]
        %v586 = vld [vmem:[%s4 + $0x10] sm:$0xff]
        %v587 = vld [vmem:[%s4 + $0x18] sm:$0xff]
        %v588 = vld [vmem:[%s5] sm:$0x3]
        %v590 = vperm.slane %v588, 0
        %v591 = vperm.slane %v588, 1
        %v595 = vsel %vm454, %v576, 0
        %v598 = vsel %vm454, %v577, 0
        %v601 = vsel %vm454, %v578, 0
        %v604 = vsel %vm454, %v579, 0
        %v607 = vsel %vm454, %v580, 0
        %v610 = vsel %vm454, %v581, 0
        %v613 = vsel %vm454, %v582, 0
        %v616 = vsel %vm454, %v583, 0
        %618 = vmatpush.msra.mxu0 0.0
        %619 = vmatpush.msra.mxu0 0.0
        %620 = vmatpush.msra.mxu0 0.0
        %621 = vmatpush.msra.mxu0 0.0
        %622 = vmatpush.msra.mxu0 0.0
        %623 = vmatpush.msra.mxu0 0.0
        %624 = vmatpush.msra.mxu0 0.0
        %625 = vmatpush.msra.mxu0 0.0
        %626 = vmatpush.msra.mxu0 0.0
        %627 = vmatpush.msra.mxu0 0.0
        %628 = vmatpush.msra.mxu0 0.0
        %629 = vmatpush.msra.mxu0 0.0
        %630 = vmatpush.msra.mxu0 0.0
        %631 = vmatpush.msra.mxu0 0.0
        %632 = vmatpush.msra.mxu0 %v586
        %633 = vmatpush.msra.mxu0 %v584
        %634 = vmatmul.f32.gmra.mxu0 %v595
        %v635 = vpop.f32.mrf.mxu0
        %v636 = vadd.f32 %v590, %v635
        %637 = vmatmul.f32.gmra.mxu0 %v598
        %v638 = vpop.f32.mrf.mxu0
        %v639 = vadd.f32 %v590, %v638
        %640 = vmatmul.f32.gmra.mxu0 %v601
        %v641 = vpop.f32.mrf.mxu0
        %v642 = vadd.f32 %v590, %v641
        %643 = vmatmul.f32.gmra.mxu0 %v604
        %v644 = vpop.f32.mrf.mxu0
        %v645 = vadd.f32 %v590, %v644
        %646 = vmatmul.f32.gmra.mxu0 %v607
        %v647 = vpop.f32.mrf.mxu0
        %v648 = vadd.f32 %v590, %v647
        %649 = vmatmul.f32.gmra.mxu0 %v610
        %v650 = vpop.f32.mrf.mxu0
        %v651 = vadd.f32 %v590, %v650
        %652 = vmatmul.f32.gmra.mxu0 %v613
        %v653 = vpop.f32.mrf.mxu0
        %v654 = vadd.f32 %v590, %v653
        %655 = vmatmul.f32.gmra.mxu0 %v616
        %v656 = vpop.f32.mrf.mxu0
        %v657 = vadd.f32 %v590, %v656
        %658 = vdwg.mxu0
        %659 = vmatpush.msra.mxu0 0.0
        %660 = vmatpush.msra.mxu0 0.0
        %661 = vmatpush.msra.mxu0 0.0
        %662 = vmatpush.msra.mxu0 0.0
        %663 = vmatpush.msra.mxu0 0.0
        %664 = vmatpush.msra.mxu0 0.0
        %665 = vmatpush.msra.mxu0 0.0
        %666 = vmatpush.msra.mxu0 0.0
        %667 = vmatpush.msra.mxu0 0.0
        %668 = vmatpush.msra.mxu0 0.0
        %669 = vmatpush.msra.mxu0 0.0
        %670 = vmatpush.msra.mxu0 0.0
        %671 = vmatpush.msra.mxu0 0.0
        %672 = vmatpush.msra.mxu0 0.0
        %673 = vmatpush.msra.mxu0 %v587
        %674 = vmatpush.msra.mxu0 %v585
        %675 = vmatmul.f32.gmra.mxu0 %v595
        %v676 = vpop.f32.mrf.mxu0
        %v677 = vadd.f32 %v591, %v676
        %678 = vmatmul.f32.gmra.mxu0 %v598
        %v679 = vpop.f32.mrf.mxu0
        %v680 = vadd.f32 %v591, %v679
        %681 = vmatmul.f32.gmra.mxu0 %v601
        %v682 = vpop.f32.mrf.mxu0
        %v683 = vadd.f32 %v591, %v682
        %684 = vmatmul.f32.gmra.mxu0 %v604
        %v685 = vpop.f32.mrf.mxu0
        %v686 = vadd.f32 %v591, %v685
        %687 = vmatmul.f32.gmra.mxu0 %v607
        %v688 = vpop.f32.mrf.mxu0
        %v689 = vadd.f32 %v591, %v688
        %690 = vmatmul.f32.gmra.mxu0 %v610
        %v691 = vpop.f32.mrf.mxu0
        %v692 = vadd.f32 %v591, %v691
        %693 = vmatmul.f32.gmra.mxu0 %v613
        %v694 = vpop.f32.mrf.mxu0
        %v695 = vadd.f32 %v591, %v694
        %696 = vmatmul.f32.gmra.mxu0 %v616
        %v697 = vpop.f32.mrf.mxu0
        %v698 = vadd.f32 %v591, %v697
        %699 = vdwg.mxu0
        %700 = vst [vmem:[#allocation2] sm:$0xff] %v636
        %701 = vst [vmem:[#allocation2 + $0x8] sm:$0xff] %v677
        %702 = vst [vmem:[#allocation2 + $0x10] sm:$0xff] %v639
        %703 = vst [vmem:[#allocation2 + $0x18] sm:$0xff] %v680
        %704 = vst [vmem:[#allocation2 + $0x20] sm:$0xff] %v642
        %705 = vst [vmem:[#allocation2 + $0x28] sm:$0xff] %v683
        %706 = vst [vmem:[#allocation2 + $0x30] sm:$0xff] %v645
        %707 = vst [vmem:[#allocation2 + $0x38] sm:$0xff] %v686
        %708 = vst [vmem:[#allocation2 + $0x40] sm:$0xff] %v648
        %709 = vst [vmem:[#allocation2 + $0x48] sm:$0xff] %v689
        %710 = vst [vmem:[#allocation2 + $0x50] sm:$0xff] %v651
        %711 = vst [vmem:[#allocation2 + $0x58] sm:$0xff] %v692
        %712 = vst [vmem:[#allocation2 + $0x60] sm:$0xff] %v654
        %713 = vst [vmem:[#allocation2 + $0x68] sm:$0xff] %v695
        %714 = vst [vmem:[#allocation2 + $0x70] sm:$0xff] %v657
        %715 = vst [vmem:[#allocation2 + $0x78] sm:$0xff] %v698
        %v716 = vld [vmem:[%s6] sm:$0xff]
        %v717 = vld [vmem:[%s6 + $0x8] sm:$0xff]
        %v718 = vld [vmem:[%s6 + $0x10] sm:$0xff]
        %v719 = vld [vmem:[%s6 + $0x18] sm:$0xff]
        %v720 = vld [vmem:[%s7] sm:$0xff]
        %v721 = vld [vmem:[%s7 + $0x8] sm:$0xff]
        %v722 = vld [vmem:[%s7 + $0x10] sm:$0xff]
        %v723 = vld [vmem:[%s7 + $0x18] sm:$0xff]
        %v724 = vld [vmem:[#allocation2] sm:$0xff]
        %vm725 = vcmask 261120
        %v727 = vsel %vm725, 0.0, 0
        %729 = vmatpush.msra.mxu0 0.0
        %730 = vmatpush.msra.mxu0 0.0
        %731 = vmatpush.msra.mxu0 0.0
        %732 = vmatpush.msra.mxu0 0.0
        %733 = vmatpush.msra.mxu0 0.0
        %734 = vmatpush.msra.mxu0 0.0
        %735 = vmatpush.msra.mxu0 0.0
        %736 = vmatpush.msra.mxu0 0.0
        %737 = vmatpush.msra.mxu0 0.0
        %738 = vmatpush.msra.mxu0 0.0
        %739 = vmatpush.msra.mxu0 0.0
        %740 = vmatpush.msra.mxu0 0.0
        %741 = vmatpush.msra.mxu0 %v719
        %742 = vmatpush.msra.mxu0 %v718
        %743 = vmatpush.msra.mxu0 %v717
        %744 = vmatpush.msra.mxu0 %v716
        %745 = vmatmul.f32.gmra.mxu0 %v727
        %v746 = vpop.f32.mrf.mxu0
        %v747 = vadd.f32 0.0, %v746
        %748 = vdwg.mxu0
        %v749 = vadd.f32 %v724, %v747
        %s750 = scalar_lea.vmem [#allocation2], 112
        %v751 = vld [vmem:[%s750 + $0x8] sm:$0xff]
        %752 = vmatpush.msra.mxu0 0.0
        %753 = vmatpush.msra.mxu0 0.0
        %754 = vmatpush.msra.mxu0 0.0
        %755 = vmatpush.msra.mxu0 0.0
        %756 = vmatpush.msra.mxu0 0.0
        %757 = vmatpush.msra.mxu0 0.0
        %758 = vmatpush.msra.mxu0 0.0
        %759 = vmatpush.msra.mxu0 0.0
        %760 = vmatpush.msra.mxu0 0.0
        %761 = vmatpush.msra.mxu0 0.0
        %762 = vmatpush.msra.mxu0 0.0
        %763 = vmatpush.msra.mxu0 0.0
        %764 = vmatpush.msra.mxu0 %v723
        %765 = vmatpush.msra.mxu0 %v722
        %766 = vmatpush.msra.mxu0 %v721
        %767 = vmatpush.msra.mxu0 %v720
        %768 = vmatmul.f32.gmra.mxu0 %v727
        %v769 = vpop.f32.mrf.mxu0
        %v770 = vadd.f32 0.0, %v769
        %771 = vdwg.mxu0
        %v772 = vadd.f32 %v751, %v770
        %v773 = vxor.u32 %v749, 2147483648
        %v774 = vmul.f32 %v773, 1.442695
        %v775 = vpow.pop %v774
        %v776 = vadd.f32 %v775, 1.0
        %v777 = vrcp.pop %v776
        %v778 = vmul.f32 %v776, %v777
        %v779 = vsub.f32 1.0, %v778
        %v780 = vmul.f32 %v777, %v779
        %v781 = vadd.f32 %v777, %v780
        %vm782 = vweird.f32 %v776
        %vm783 = vweird.f32 %v777
        %vm784 = vmor %vm782, %vm783
        %v785 = vsel %vm784, %v777, %v781
        %v786 = vand.u32 2147483647, %v776
        %vm787 = vcmp.eq.f32.partialorder %v786, 8.507059e+37
        %v788 = vand.u32 %v776, 2147483648
        %v789 = vor.u32 1.1754944e-38, %v788
        %v790 = vsel %vm787, %v789, %v785
        %v791 = vmul.f32 1.0, %v790
        %v792 = vtanh.pop %v749
        %v793 = vmul.f32 %v791, 0.0
        %795 = vrot.lane.b32.xlu0 %v792, 64
        %v796 = vpop.permute.xlu0 %795
        %v798 = vmul.f32 %v791, %v796
        %800 = vrot.lane.b32.xlu0 %v798, 32
        %v801 = vpop.permute.xlu0 %800
        %v803 = vadd.f32 %v793, %v801
        %v804 = vtanh.pop %v803
        %806 = vrot.lane.b32.xlu0 %v804, 64
        %v807 = vpop.permute.xlu0 %806
        %v809 = vmul.f32 %v791, %v807
        %811 = vrot.lane.b32.xlu0 %v809, 32
        %v812 = vpop.permute.xlu0 %811
        %814 = vst.msk [vmem:[#allocation3] sm:$0xff] %vm725, %v812
        %v815 = vxor.u32 %v772, 2147483648
        %v816 = vmul.f32 %v815, 1.442695
        %v817 = vpow.pop %v816
        %v818 = vadd.f32 %v817, 1.0
        %v819 = vrcp.pop %v818
        %v820 = vmul.f32 %v818, %v819
        %v821 = vsub.f32 1.0, %v820
        %v822 = vmul.f32 %v819, %v821
        %v823 = vadd.f32 %v819, %v822
        %vm824 = vweird.f32 %v818
        %vm825 = vweird.f32 %v819
        %vm826 = vmor %vm824, %vm825
        %v827 = vsel %vm826, %v819, %v823
        %v828 = vand.u32 2147483647, %v818
        %vm829 = vcmp.eq.f32.partialorder %v828, 8.507059e+37
        %v830 = vand.u32 %v818, 2147483648
        %v831 = vor.u32 1.1754944e-38, %v830
        %v832 = vsel %vm829, %v831, %v827
        %v833 = vmul.f32 1.0, %v832
        %v834 = vtanh.pop %v772
        %v835 = vmul.f32 %v833, 0.0
        %837 = vrot.lane.b32.xlu0 %v834, 64
        %v838 = vpop.permute.xlu0 %837
        %v840 = vmul.f32 %v833, %v838
        %842 = vrot.lane.b32.xlu0 %v840, 32
        %v843 = vpop.permute.xlu0 %842
        %v845 = vadd.f32 %v835, %v843
        %v846 = vtanh.pop %v845
        %848 = vrot.lane.b32.xlu0 %v846, 64
        %v849 = vpop.permute.xlu0 %848
        %v851 = vmul.f32 %v833, %v849
        %853 = vrot.lane.b32.xlu0 %v851, 32
        %v854 = vpop.permute.xlu0 %853
        %s856 = scalar_lea.vmem [#allocation4], 56
        %857 = vst.msk [vmem:[%s856] sm:$0xff] %vm725, %v854
        %s858 = scalar_lea.vmem [#allocation2], 16
        %v859 = vld [vmem:[%s858] sm:$0xff]
        %v860 = vsel %vm725, %v812, 0
        %862 = vmatpush.msra.mxu0 0.0
        %863 = vmatpush.msra.mxu0 0.0
        %864 = vmatpush.msra.mxu0 0.0
        %865 = vmatpush.msra.mxu0 0.0
        %866 = vmatpush.msra.mxu0 0.0
        %867 = vmatpush.msra.mxu0 0.0
        %868 = vmatpush.msra.mxu0 0.0
        %869 = vmatpush.msra.mxu0 0.0
        %870 = vmatpush.msra.mxu0 0.0
        %871 = vmatpush.msra.mxu0 0.0
        %872 = vmatpush.msra.mxu0 0.0
        %873 = vmatpush.msra.mxu0 0.0
        %874 = vmatpush.msra.mxu0 %v719
        %875 = vmatpush.msra.mxu0 %v718
        %876 = vmatpush.msra.mxu0 %v717
        %877 = vmatpush.msra.mxu0 %v716
        %878 = vmatmul.f32.gmra.mxu0 %v860
        %v879 = vpop.f32.mrf.mxu0
        %v880 = vadd.f32 0.0, %v879
        %881 = vdwg.mxu0
        %v882 = vadd.f32 %v859, %v880
        %s883 = scalar_lea.vmem [#allocation2], 96
        %v884 = vld [vmem:[%s883 + $0x8] sm:$0xff]
        %v885 = vsel %vm725, %v854, 0
        %887 = vmatpush.msra.mxu0 0.0
        %888 = vmatpush.msra.mxu0 0.0
        %889 = vmatpush.msra.mxu0 0.0
        %890 = vmatpush.msra.mxu0 0.0
        %891 = vmatpush.msra.mxu0 0.0
        %892 = vmatpush.msra.mxu0 0.0
        %893 = vmatpush.msra.mxu0 0.0
        %894 = vmatpush.msra.mxu0 0.0
        %895 = vmatpush.msra.mxu0 0.0
        %896 = vmatpush.msra.mxu0 0.0
        %897 = vmatpush.msra.mxu0 0.0
        %898 = vmatpush.msra.mxu0 0.0
        %899 = vmatpush.msra.mxu0 %v723
        %900 = vmatpush.msra.mxu0 %v722
        %901 = vmatpush.msra.mxu0 %v721
        %902 = vmatpush.msra.mxu0 %v720
        %903 = vmatmul.f32.gmra.mxu0 %v885
        %v904 = vpop.f32.mrf.mxu0
        %v905 = vadd.f32 0.0, %v904
        %906 = vdwg.mxu0
        %v907 = vadd.f32 %v884, %v905
        %v908 = vxor.u32 %v882, 2147483648
        %v909 = vmul.f32 %v908, 1.442695
        %v910 = vpow.pop %v909
        %v911 = vadd.f32 %v910, 1.0
        %v912 = vrcp.pop %v911
        %v913 = vmul.f32 %v911, %v912
        %v914 = vsub.f32 1.0, %v913
        %v915 = vmul.f32 %v912, %v914
        %v916 = vadd.f32 %v912, %v915
        %vm917 = vweird.f32 %v911
        %vm918 = vweird.f32 %v912
        %vm919 = vmor %vm917, %vm918
        %v920 = vsel %vm919, %v912, %v916
        %v921 = vand.u32 2147483647, %v911
        %vm922 = vcmp.eq.f32.partialorder %v921, 8.507059e+37
        %v923 = vand.u32 %v911, 2147483648
        %v924 = vor.u32 1.1754944e-38, %v923
        %v925 = vsel %vm922, %v924, %v920
        %v926 = vmul.f32 1.0, %v925
        %v927 = vtanh.pop %v882
        %v928 = vmul.f32 %v926, %v803
        %930 = vrot.lane.b32.xlu0 %v927, 64
        %v931 = vpop.permute.xlu0 %930
        %v933 = vmul.f32 %v926, %v931
        %935 = vrot.lane.b32.xlu0 %v933, 32
        %v936 = vpop.permute.xlu0 %935
        %v938 = vadd.f32 %v928, %v936
        %v939 = vtanh.pop %v938
        %941 = vrot.lane.b32.xlu0 %v939, 64
        %v942 = vpop.permute.xlu0 %941
        %v944 = vmul.f32 %v926, %v942
        %946 = vrot.lane.b32.xlu0 %v944, 32
        %v947 = vpop.permute.xlu0 %946
        %s949 = scalar_lea.vmem [#allocation3], 8
        %950 = vst.msk [vmem:[%s949] sm:$0xff] %vm725, %v947
        %v951 = vxor.u32 %v907, 2147483648
        %v952 = vmul.f32 %v951, 1.442695
        %v953 = vpow.pop %v952
        %v954 = vadd.f32 %v953, 1.0
        %v955 = vrcp.pop %v954
        %v956 = vmul.f32 %v954, %v955
        %v957 = vsub.f32 1.0, %v956
        %v958 = vmul.f32 %v955, %v957
        %v959 = vadd.f32 %v955, %v958
        %vm960 = vweird.f32 %v954
        %vm961 = vweird.f32 %v955
        %vm962 = vmor %vm960, %vm961
        %v963 = vsel %vm962, %v955, %v959
        %v964 = vand.u32 2147483647, %v954
        %vm965 = vcmp.eq.f32.partialorder %v964, 8.507059e+37
        %v966 = vand.u32 %v954, 2147483648
        %v967 = vor.u32 1.1754944e-38, %v966
        %v968 = vsel %vm965, %v967, %v963
        %v969 = vmul.f32 1.0, %v968
        %v970 = vtanh.pop %v907
        %v971 = vmul.f32 %v969, %v845
        %973 = vrot.lane.b32.xlu0 %v970, 64
        %v974 = vpop.permute.xlu0 %973
        %v976 = vmul.f32 %v969, %v974
        %978 = vrot.lane.b32.xlu0 %v976, 32
        %v979 = vpop.permute.xlu0 %978
        %v981 = vadd.f32 %v971, %v979
        %v982 = vtanh.pop %v981
        %984 = vrot.lane.b32.xlu0 %v982, 64
        %v985 = vpop.permute.xlu0 %984
        %v987 = vmul.f32 %v969, %v985
        %989 = vrot.lane.b32.xlu0 %v987, 32
        %v990 = vpop.permute.xlu0 %989
        %s992 = scalar_lea.vmem [#allocation4], 48
        %993 = vst.msk [vmem:[%s992] sm:$0xff] %vm725, %v990
        %s994 = scalar_lea.vmem [#allocation2], 32
        %v995 = vld [vmem:[%s994] sm:$0xff]
        %v996 = vsel %vm725, %v947, 0
        %998 = vmatpush.msra.mxu0 0.0
        %999 = vmatpush.msra.mxu0 0.0
        %1000 = vmatpush.msra.mxu0 0.0
        %1001 = vmatpush.msra.mxu0 0.0
        %1002 = vmatpush.msra.mxu0 0.0
        %1003 = vmatpush.msra.mxu0 0.0
        %1004 = vmatpush.msra.mxu0 0.0
        %1005 = vmatpush.msra.mxu0 0.0
        %1006 = vmatpush.msra.mxu0 0.0
        %1007 = vmatpush.msra.mxu0 0.0
        %1008 = vmatpush.msra.mxu0 0.0
        %1009 = vmatpush.msra.mxu0 0.0
        %1010 = vmatpush.msra.mxu0 %v719
        %1011 = vmatpush.msra.mxu0 %v718
        %1012 = vmatpush.msra.mxu0 %v717
        %1013 = vmatpush.msra.mxu0 %v716
        %1014 = vmatmul.f32.gmra.mxu0 %v996
        %v1015 = vpop.f32.mrf.mxu0
        %v1016 = vadd.f32 0.0, %v1015
        %1017 = vdwg.mxu0
        %v1018 = vadd.f32 %v995, %v1016
        %s1019 = scalar_lea.vmem [#allocation2], 80
        %v1020 = vld [vmem:[%s1019 + $0x8] sm:$0xff]
        %v1021 = vsel %vm725, %v990, 0
        %1023 = vmatpush.msra.mxu0 0.0
        %1024 = vmatpush.msra.mxu0 0.0
        %1025 = vmatpush.msra.mxu0 0.0
        %1026 = vmatpush.msra.mxu0 0.0
        %1027 = vmatpush.msra.mxu0 0.0
        %1028 = vmatpush.msra.mxu0 0.0
        %1029 = vmatpush.msra.mxu0 0.0
        %1030 = vmatpush.msra.mxu0 0.0
        %1031 = vmatpush.msra.mxu0 0.0
        %1032 = vmatpush.msra.mxu0 0.0
        %1033 = vmatpush.msra.mxu0 0.0
        %1034 = vmatpush.msra.mxu0 0.0
        %1035 = vmatpush.msra.mxu0 %v723
        %1036 = vmatpush.msra.mxu0 %v722
        %1037 = vmatpush.msra.mxu0 %v721
        %1038 = vmatpush.msra.mxu0 %v720
        %1039 = vmatmul.f32.gmra.mxu0 %v1021
        %v1040 = vpop.f32.mrf.mxu0
        %v1041 = vadd.f32 0.0, %v1040
        %1042 = vdwg.mxu0
        %v1043 = vadd.f32 %v1020, %v1041
        %v1044 = vxor.u32 %v1018, 2147483648
        %v1045 = vmul.f32 %v1044, 1.442695
        %v1046 = vpow.pop %v1045
        %v1047 = vadd.f32 %v1046, 1.0
        %v1048 = vrcp.pop %v1047
        %v1049 = vmul.f32 %v1047, %v1048
        %v1050 = vsub.f32 1.0, %v1049
        %v1051 = vmul.f32 %v1048, %v1050
        %v1052 = vadd.f32 %v1048, %v1051
        %vm1053 = vweird.f32 %v1047
        %vm1054 = vweird.f32 %v1048
        %vm1055 = vmor %vm1053, %vm1054
        %v1056 = vsel %vm1055, %v1048, %v1052
        %v1057 = vand.u32 2147483647, %v1047
        %vm1058 = vcmp.eq.f32.partialorder %v1057, 8.507059e+37
        %v1059 = vand.u32 %v1047, 2147483648
        %v1060 = vor.u32 1.1754944e-38, %v1059
        %v1061 = vsel %vm1058, %v1060, %v1056
        %v1062 = vmul.f32 1.0, %v1061
        %v1063 = vtanh.pop %v1018
        %v1064 = vmul.f32 %v1062, %v938
        %1066 = vrot.lane.b32.xlu0 %v1063, 64
        %v1067 = vpop.permute.xlu0 %1066
        %v1069 = vmul.f32 %v1062, %v1067
        %1071 = vrot.lane.b32.xlu0 %v1069, 32
        %v1072 = vpop.permute.xlu0 %1071
        %v1074 = vadd.f32 %v1064, %v1072
        %v1075 = vtanh.pop %v1074
        %1077 = vrot.lane.b32.xlu0 %v1075, 64
        %v1078 = vpop.permute.xlu0 %1077
        %v1080 = vmul.f32 %v1062, %v1078
        %1082 = vrot.lane.b32.xlu0 %v1080, 32
        %v1083 = vpop.permute.xlu0 %1082
        %s1085 = scalar_lea.vmem [#allocation3], 16
        %1086 = vst.msk [vmem:[%s1085] sm:$0xff] %vm725, %v1083
        %v1087 = vxor.u32 %v1043, 2147483648
        %v1088 = vmul.f32 %v1087, 1.442695
        %v1089 = vpow.pop %v1088
        %v1090 = vadd.f32 %v1089, 1.0
        %v1091 = vrcp.pop %v1090
        %v1092 = vmul.f32 %v1090, %v1091
        %v1093 = vsub.f32 1.0, %v1092
        %v1094 = vmul.f32 %v1091, %v1093
        %v1095 = vadd.f32 %v1091, %v1094
        %vm1096 = vweird.f32 %v1090
        %vm1097 = vweird.f32 %v1091
        %vm1098 = vmor %vm1096, %vm1097
        %v1099 = vsel %vm1098, %v1091, %v1095
        %v1100 = vand.u32 2147483647, %v1090
        %vm1101 = vcmp.eq.f32.partialorder %v1100, 8.507059e+37
        %v1102 = vand.u32 %v1090, 2147483648
        %v1103 = vor.u32 1.1754944e-38, %v1102
        %v1104 = vsel %vm1101, %v1103, %v1099
        %v1105 = vmul.f32 1.0, %v1104
        %v1106 = vtanh.pop %v1043
        %v1107 = vmul.f32 %v1105, %v981
        %1109 = vrot.lane.b32.xlu0 %v1106, 64
        %v1110 = vpop.permute.xlu0 %1109
        %v1112 = vmul.f32 %v1105, %v1110
        %1114 = vrot.lane.b32.xlu0 %v1112, 32
        %v1115 = vpop.permute.xlu0 %1114
        %v1117 = vadd.f32 %v1107, %v1115
        %v1118 = vtanh.pop %v1117
        %1120 = vrot.lane.b32.xlu0 %v1118, 64
        %v1121 = vpop.permute.xlu0 %1120
        %v1123 = vmul.f32 %v1105, %v1121
        %1125 = vrot.lane.b32.xlu0 %v1123, 32
        %v1126 = vpop.permute.xlu0 %1125
        %s1128 = scalar_lea.vmem [#allocation4], 40
        %1129 = vst.msk [vmem:[%s1128] sm:$0xff] %vm725, %v1126
        %s1130 = scalar_lea.vmem [#allocation2], 48
        %v1131 = vld [vmem:[%s1130] sm:$0xff]
        %v1132 = vsel %vm725, %v1083, 0
        %1134 = vmatpush.msra.mxu0 0.0
        %1135 = vmatpush.msra.mxu0 0.0
        %1136 = vmatpush.msra.mxu0 0.0
        %1137 = vmatpush.msra.mxu0 0.0
        %1138 = vmatpush.msra.mxu0 0.0
        %1139 = vmatpush.msra.mxu0 0.0
        %1140 = vmatpush.msra.mxu0 0.0
        %1141 = vmatpush.msra.mxu0 0.0
        %1142 = vmatpush.msra.mxu0 0.0
        %1143 = vmatpush.msra.mxu0 0.0
        %1144 = vmatpush.msra.mxu0 0.0
        %1145 = vmatpush.msra.mxu0 0.0
        %1146 = vmatpush.msra.mxu0 %v719
        %1147 = vmatpush.msra.mxu0 %v718
        %1148 = vmatpush.msra.mxu0 %v717
        %1149 = vmatpush.msra.mxu0 %v716
        %1150 = vmatmul.f32.gmra.mxu0 %v1132
        %v1151 = vpop.f32.mrf.mxu0
        %v1152 = vadd.f32 0.0, %v1151
        %1153 = vdwg.mxu0
        %v1154 = vadd.f32 %v1131, %v1152
        %s1155 = scalar_lea.vmem [#allocation2], 64
        %v1156 = vld [vmem:[%s1155 + $0x8] sm:$0xff]
        %v1157 = vsel %vm725, %v1126, 0
        %1159 = vmatpush.msra.mxu0 0.0
        %1160 = vmatpush.msra.mxu0 0.0
        %1161 = vmatpush.msra.mxu0 0.0
        %1162 = vmatpush.msra.mxu0 0.0
        %1163 = vmatpush.msra.mxu0 0.0
        %1164 = vmatpush.msra.mxu0 0.0
        %1165 = vmatpush.msra.mxu0 0.0
        %1166 = vmatpush.msra.mxu0 0.0
        %1167 = vmatpush.msra.mxu0 0.0
        %1168 = vmatpush.msra.mxu0 0.0
        %1169 = vmatpush.msra.mxu0 0.0
        %1170 = vmatpush.msra.mxu0 0.0
        %1171 = vmatpush.msra.mxu0 %v723
        %1172 = vmatpush.msra.mxu0 %v722
        %1173 = vmatpush.msra.mxu0 %v721
        %1174 = vmatpush.msra.mxu0 %v720
        %1175 = vmatmul.f32.gmra.mxu0 %v1157
        %v1176 = vpop.f32.mrf.mxu0
        %v1177 = vadd.f32 0.0, %v1176
        %1178 = vdwg.mxu0
        %v1179 = vadd.f32 %v1156, %v1177
        %v1180 = vxor.u32 %v1154, 2147483648
        %v1181 = vmul.f32 %v1180, 1.442695
        %v1182 = vpow.pop %v1181
        %v1183 = vadd.f32 %v1182, 1.0
        %v1184 = vrcp.pop %v1183
        %v1185 = vmul.f32 %v1183, %v1184
        %v1186 = vsub.f32 1.0, %v1185
        %v1187 = vmul.f32 %v1184, %v1186
        %v1188 = vadd.f32 %v1184, %v1187
        %vm1189 = vweird.f32 %v1183
        %vm1190 = vweird.f32 %v1184
        %vm1191 = vmor %vm1189, %vm1190
        %v1192 = vsel %vm1191, %v1184, %v1188
        %v1193 = vand.u32 2147483647, %v1183
        %vm1194 = vcmp.eq.f32.partialorder %v1193, 8.507059e+37
        %v1195 = vand.u32 %v1183, 2147483648
        %v1196 = vor.u32 1.1754944e-38, %v1195
        %v1197 = vsel %vm1194, %v1196, %v1192
        %v1198 = vmul.f32 1.0, %v1197
        %v1199 = vtanh.pop %v1154
        %v1200 = vmul.f32 %v1198, %v1074
        %1202 = vrot.lane.b32.xlu0 %v1199, 64
        %v1203 = vpop.permute.xlu0 %1202
        %v1205 = vmul.f32 %v1198, %v1203
        %1207 = vrot.lane.b32.xlu0 %v1205, 32
        %v1208 = vpop.permute.xlu0 %1207
        %v1210 = vadd.f32 %v1200, %v1208
        %v1211 = vtanh.pop %v1210
        %1213 = vrot.lane.b32.xlu0 %v1211, 64
        %v1214 = vpop.permute.xlu0 %1213
        %v1216 = vmul.f32 %v1198, %v1214
        %1218 = vrot.lane.b32.xlu0 %v1216, 32
        %v1219 = vpop.permute.xlu0 %1218
        %s1221 = scalar_lea.vmem [#allocation3], 24
        %1222 = vst.msk [vmem:[%s1221] sm:$0xff] %vm725, %v1219
        %v1223 = vxor.u32 %v1179, 2147483648
        %v1224 = vmul.f32 %v1223, 1.442695
        %v1225 = vpow.pop %v1224
        %v1226 = vadd.f32 %v1225, 1.0
        %v1227 = vrcp.pop %v1226
        %v1228 = vmul.f32 %v1226, %v1227
        %v1229 = vsub.f32 1.0, %v1228
        %v1230 = vmul.f32 %v1227, %v1229
        %v1231 = vadd.f32 %v1227, %v1230
        %vm1232 = vweird.f32 %v1226
        %vm1233 = vweird.f32 %v1227
        %vm1234 = vmor %vm1232, %vm1233
        %v1235 = vsel %vm1234, %v1227, %v1231
        %v1236 = vand.u32 2147483647, %v1226
        %vm1237 = vcmp.eq.f32.partialorder %v1236, 8.507059e+37
        %v1238 = vand.u32 %v1226, 2147483648
        %v1239 = vor.u32 1.1754944e-38, %v1238
        %v1240 = vsel %vm1237, %v1239, %v1235
        %v1241 = vmul.f32 1.0, %v1240
        %v1242 = vtanh.pop %v1179
        %v1243 = vmul.f32 %v1241, %v1117
        %1245 = vrot.lane.b32.xlu0 %v1242, 64
        %v1246 = vpop.permute.xlu0 %1245
        %v1248 = vmul.f32 %v1241, %v1246
        %1250 = vrot.lane.b32.xlu0 %v1248, 32
        %v1251 = vpop.permute.xlu0 %1250
        %v1253 = vadd.f32 %v1243, %v1251
        %v1254 = vtanh.pop %v1253
        %1256 = vrot.lane.b32.xlu0 %v1254, 64
        %v1257 = vpop.permute.xlu0 %1256
        %v1259 = vmul.f32 %v1241, %v1257
        %1261 = vrot.lane.b32.xlu0 %v1259, 32
        %v1262 = vpop.permute.xlu0 %1261
        %s1264 = scalar_lea.vmem [#allocation4], 32
        %1265 = vst.msk [vmem:[%s1264] sm:$0xff] %vm725, %v1262
        %v1266 = vld [vmem:[%s1155] sm:$0xff]
        %v1267 = vsel %vm725, %v1219, 0
        %1269 = vmatpush.msra.mxu0 0.0
        %1270 = vmatpush.msra.mxu0 0.0
        %1271 = vmatpush.msra.mxu0 0.0
        %1272 = vmatpush.msra.mxu0 0.0
        %1273 = vmatpush.msra.mxu0 0.0
        %1274 = vmatpush.msra.mxu0 0.0
        %1275 = vmatpush.msra.mxu0 0.0
        %1276 = vmatpush.msra.mxu0 0.0
        %1277 = vmatpush.msra.mxu0 0.0
        %1278 = vmatpush.msra.mxu0 0.0
        %1279 = vmatpush.msra.mxu0 0.0
        %1280 = vmatpush.msra.mxu0 0.0
        %1281 = vmatpush.msra.mxu0 %v719
        %1282 = vmatpush.msra.mxu0 %v718
        %1283 = vmatpush.msra.mxu0 %v717
        %1284 = vmatpush.msra.mxu0 %v716
        %1285 = vmatmul.f32.gmra.mxu0 %v1267
        %v1286 = vpop.f32.mrf.mxu0
        %v1287 = vadd.f32 0.0, %v1286
        %1288 = vdwg.mxu0
        %v1289 = vadd.f32 %v1266, %v1287
        %v1290 = vld [vmem:[%s1130 + $0x8] sm:$0xff]
        %v1291 = vsel %vm725, %v1262, 0
        %1293 = vmatpush.msra.mxu0 0.0
        %1294 = vmatpush.msra.mxu0 0.0
        %1295 = vmatpush.msra.mxu0 0.0
        %1296 = vmatpush.msra.mxu0 0.0
        %1297 = vmatpush.msra.mxu0 0.0
        %1298 = vmatpush.msra.mxu0 0.0
        %1299 = vmatpush.msra.mxu0 0.0
        %1300 = vmatpush.msra.mxu0 0.0
        %1301 = vmatpush.msra.mxu0 0.0
        %1302 = vmatpush.msra.mxu0 0.0
        %1303 = vmatpush.msra.mxu0 0.0
        %1304 = vmatpush.msra.mxu0 0.0
        %1305 = vmatpush.msra.mxu0 %v723
        %1306 = vmatpush.msra.mxu0 %v722
        %1307 = vmatpush.msra.mxu0 %v721
        %1308 = vmatpush.msra.mxu0 %v720
        %1309 = vmatmul.f32.gmra.mxu0 %v1291
        %v1310 = vpop.f32.mrf.mxu0
        %v1311 = vadd.f32 0.0, %v1310
        %1312 = vdwg.mxu0
        %v1313 = vadd.f32 %v1290, %v1311
        %v1314 = vxor.u32 %v1289, 2147483648
        %v1315 = vmul.f32 %v1314, 1.442695
        %v1316 = vpow.pop %v1315
        %v1317 = vadd.f32 %v1316, 1.0
        %v1318 = vrcp.pop %v1317
        %v1319 = vmul.f32 %v1317, %v1318
        %v1320 = vsub.f32 1.0, %v1319
        %v1321 = vmul.f32 %v1318, %v1320
        %v1322 = vadd.f32 %v1318, %v1321
        %vm1323 = vweird.f32 %v1317
        %vm1324 = vweird.f32 %v1318
        %vm1325 = vmor %vm1323, %vm1324
        %v1326 = vsel %vm1325, %v1318, %v1322
        %v1327 = vand.u32 2147483647, %v1317
        %vm1328 = vcmp.eq.f32.partialorder %v1327, 8.507059e+37
        %v1329 = vand.u32 %v1317, 2147483648
        %v1330 = vor.u32 1.1754944e-38, %v1329
        %v1331 = vsel %vm1328, %v1330, %v1326
        %v1332 = vmul.f32 1.0, %v1331
        %v1333 = vtanh.pop %v1289
        %v1334 = vmul.f32 %v1332, %v1210
        %1336 = vrot.lane.b32.xlu0 %v1333, 64
        %v1337 = vpop.permute.xlu0 %1336
        %v1339 = vmul.f32 %v1332, %v1337
        %1341 = vrot.lane.b32.xlu0 %v1339, 32
        %v1342 = vpop.permute.xlu0 %1341
        %v1344 = vadd.f32 %v1334, %v1342
        %v1345 = vtanh.pop %v1344
        %1347 = vrot.lane.b32.xlu0 %v1345, 64
        %v1348 = vpop.permute.xlu0 %1347
        %v1350 = vmul.f32 %v1332, %v1348
        %1352 = vrot.lane.b32.xlu0 %v1350, 32
        %v1353 = vpop.permute.xlu0 %1352
        %s1355 = scalar_lea.vmem [#allocation3], 32
        %1356 = vst.msk [vmem:[%s1355] sm:$0xff] %vm725, %v1353
        %v1357 = vxor.u32 %v1313, 2147483648
        %v1358 = vmul.f32 %v1357, 1.442695
        %v1359 = vpow.pop %v1358
        %v1360 = vadd.f32 %v1359, 1.0
        %v1361 = vrcp.pop %v1360
        %v1362 = vmul.f32 %v1360, %v1361
        %v1363 = vsub.f32 1.0, %v1362
        %v1364 = vmul.f32 %v1361, %v1363
        %v1365 = vadd.f32 %v1361, %v1364
        %vm1366 = vweird.f32 %v1360
        %vm1367 = vweird.f32 %v1361
        %vm1368 = vmor %vm1366, %vm1367
        %v1369 = vsel %vm1368, %v1361, %v1365
        %v1370 = vand.u32 2147483647, %v1360
        %vm1371 = vcmp.eq.f32.partialorder %v1370, 8.507059e+37
        %v1372 = vand.u32 %v1360, 2147483648
        %v1373 = vor.u32 1.1754944e-38, %v1372
        %v1374 = vsel %vm1371, %v1373, %v1369
        %v1375 = vmul.f32 1.0, %v1374
        %v1376 = vtanh.pop %v1313
        %v1377 = vmul.f32 %v1375, %v1253
        %1379 = vrot.lane.b32.xlu0 %v1376, 64
        %v1380 = vpop.permute.xlu0 %1379
        %v1382 = vmul.f32 %v1375, %v1380
        %1384 = vrot.lane.b32.xlu0 %v1382, 32
        %v1385 = vpop.permute.xlu0 %1384
        %v1387 = vadd.f32 %v1377, %v1385
        %v1388 = vtanh.pop %v1387
        %1390 = vrot.lane.b32.xlu0 %v1388, 64
        %v1391 = vpop.permute.xlu0 %1390
        %v1393 = vmul.f32 %v1375, %v1391
        %1395 = vrot.lane.b32.xlu0 %v1393, 32
        %v1396 = vpop.permute.xlu0 %1395
        %s1398 = scalar_lea.vmem [#allocation4], 24
        %1399 = vst.msk [vmem:[%s1398] sm:$0xff] %vm725, %v1396
        %v1400 = vld [vmem:[%s1019] sm:$0xff]
        %v1401 = vsel %vm725, %v1353, 0
        %1403 = vmatpush.msra.mxu0 0.0
        %1404 = vmatpush.msra.mxu0 0.0
        %1405 = vmatpush.msra.mxu0 0.0
        %1406 = vmatpush.msra.mxu0 0.0
        %1407 = vmatpush.msra.mxu0 0.0
        %1408 = vmatpush.msra.mxu0 0.0
        %1409 = vmatpush.msra.mxu0 0.0
        %1410 = vmatpush.msra.mxu0 0.0
        %1411 = vmatpush.msra.mxu0 0.0
        %1412 = vmatpush.msra.mxu0 0.0
        %1413 = vmatpush.msra.mxu0 0.0
        %1414 = vmatpush.msra.mxu0 0.0
        %1415 = vmatpush.msra.mxu0 %v719
        %1416 = vmatpush.msra.mxu0 %v718
        %1417 = vmatpush.msra.mxu0 %v717
        %1418 = vmatpush.msra.mxu0 %v716
        %1419 = vmatmul.f32.gmra.mxu0 %v1401
        %v1420 = vpop.f32.mrf.mxu0
        %v1421 = vadd.f32 0.0, %v1420
        %1422 = vdwg.mxu0
        %v1423 = vadd.f32 %v1400, %v1421
        %v1424 = vld [vmem:[%s994 + $0x8] sm:$0xff]
        %v1425 = vsel %vm725, %v1396, 0
        %1427 = vmatpush.msra.mxu0 0.0
        %1428 = vmatpush.msra.mxu0 0.0
        %1429 = vmatpush.msra.mxu0 0.0
        %1430 = vmatpush.msra.mxu0 0.0
        %1431 = vmatpush.msra.mxu0 0.0
        %1432 = vmatpush.msra.mxu0 0.0
        %1433 = vmatpush.msra.mxu0 0.0
        %1434 = vmatpush.msra.mxu0 0.0
        %1435 = vmatpush.msra.mxu0 0.0
        %1436 = vmatpush.msra.mxu0 0.0
        %1437 = vmatpush.msra.mxu0 0.0
        %1438 = vmatpush.msra.mxu0 0.0
        %1439 = vmatpush.msra.mxu0 %v723
        %1440 = vmatpush.msra.mxu0 %v722
        %1441 = vmatpush.msra.mxu0 %v721
        %1442 = vmatpush.msra.mxu0 %v720
        %1443 = vmatmul.f32.gmra.mxu0 %v1425
        %v1444 = vpop.f32.mrf.mxu0
        %v1445 = vadd.f32 0.0, %v1444
        %1446 = vdwg.mxu0
        %v1447 = vadd.f32 %v1424, %v1445
        %v1448 = vxor.u32 %v1423, 2147483648
        %v1449 = vmul.f32 %v1448, 1.442695
        %v1450 = vpow.pop %v1449
        %v1451 = vadd.f32 %v1450, 1.0
        %v1452 = vrcp.pop %v1451
        %v1453 = vmul.f32 %v1451, %v1452
        %v1454 = vsub.f32 1.0, %v1453
        %v1455 = vmul.f32 %v1452, %v1454
        %v1456 = vadd.f32 %v1452, %v1455
        %vm1457 = vweird.f32 %v1451
        %vm1458 = vweird.f32 %v1452
        %vm1459 = vmor %vm1457, %vm1458
        %v1460 = vsel %vm1459, %v1452, %v1456
        %v1461 = vand.u32 2147483647, %v1451
        %vm1462 = vcmp.eq.f32.partialorder %v1461, 8.507059e+37
        %v1463 = vand.u32 %v1451, 2147483648
        %v1464 = vor.u32 1.1754944e-38, %v1463
        %v1465 = vsel %vm1462, %v1464, %v1460
        %v1466 = vmul.f32 1.0, %v1465
        %v1467 = vtanh.pop %v1423
        %v1468 = vmul.f32 %v1466, %v1344
        %1470 = vrot.lane.b32.xlu0 %v1467, 64
        %v1471 = vpop.permute.xlu0 %1470
        %v1473 = vmul.f32 %v1466, %v1471
        %1475 = vrot.lane.b32.xlu0 %v1473, 32
        %v1476 = vpop.permute.xlu0 %1475
        %v1478 = vadd.f32 %v1468, %v1476
        %v1479 = vtanh.pop %v1478
        %1481 = vrot.lane.b32.xlu0 %v1479, 64
        %v1482 = vpop.permute.xlu0 %1481
        %v1484 = vmul.f32 %v1466, %v1482
        %1486 = vrot.lane.b32.xlu0 %v1484, 32
        %v1487 = vpop.permute.xlu0 %1486
        %s1489 = scalar_lea.vmem [#allocation3], 40
        %1490 = vst.msk [vmem:[%s1489] sm:$0xff] %vm725, %v1487
        %v1491 = vxor.u32 %v1447, 2147483648
        %v1492 = vmul.f32 %v1491, 1.442695
        %v1493 = vpow.pop %v1492
        %v1494 = vadd.f32 %v1493, 1.0
        %v1495 = vrcp.pop %v1494
        %v1496 = vmul.f32 %v1494, %v1495
        %v1497 = vsub.f32 1.0, %v1496
        %v1498 = vmul.f32 %v1495, %v1497
        %v1499 = vadd.f32 %v1495, %v1498
        %vm1500 = vweird.f32 %v1494
        %vm1501 = vweird.f32 %v1495
        %vm1502 = vmor %vm1500, %vm1501
        %v1503 = vsel %vm1502, %v1495, %v1499
        %v1504 = vand.u32 2147483647, %v1494
        %vm1505 = vcmp.eq.f32.partialorder %v1504, 8.507059e+37
        %v1506 = vand.u32 %v1494, 2147483648
        %v1507 = vor.u32 1.1754944e-38, %v1506
        %v1508 = vsel %vm1505, %v1507, %v1503
        %v1509 = vmul.f32 1.0, %v1508
        %v1510 = vtanh.pop %v1447
        %v1511 = vmul.f32 %v1509, %v1387
        %1513 = vrot.lane.b32.xlu0 %v1510, 64
        %v1514 = vpop.permute.xlu0 %1513
        %v1516 = vmul.f32 %v1509, %v1514
        %1518 = vrot.lane.b32.xlu0 %v1516, 32
        %v1519 = vpop.permute.xlu0 %1518
        %v1521 = vadd.f32 %v1511, %v1519
        %v1522 = vtanh.pop %v1521
        %1524 = vrot.lane.b32.xlu0 %v1522, 64
        %v1525 = vpop.permute.xlu0 %1524
        %v1527 = vmul.f32 %v1509, %v1525
        %1529 = vrot.lane.b32.xlu0 %v1527, 32
        %v1530 = vpop.permute.xlu0 %1529
        %s1532 = scalar_lea.vmem [#allocation4], 16
        %1533 = vst.msk [vmem:[%s1532] sm:$0xff] %vm725, %v1530
        %v1534 = vld [vmem:[%s883] sm:$0xff]
        %v1535 = vsel %vm725, %v1487, 0
        %1537 = vmatpush.msra.mxu0 0.0
        %1538 = vmatpush.msra.mxu0 0.0
        %1539 = vmatpush.msra.mxu0 0.0
        %1540 = vmatpush.msra.mxu0 0.0
        %1541 = vmatpush.msra.mxu0 0.0
        %1542 = vmatpush.msra.mxu0 0.0
        %1543 = vmatpush.msra.mxu0 0.0
        %1544 = vmatpush.msra.mxu0 0.0
        %1545 = vmatpush.msra.mxu0 0.0
        %1546 = vmatpush.msra.mxu0 0.0
        %1547 = vmatpush.msra.mxu0 0.0
        %1548 = vmatpush.msra.mxu0 0.0
        %1549 = vmatpush.msra.mxu0 %v719
        %1550 = vmatpush.msra.mxu0 %v718
        %1551 = vmatpush.msra.mxu0 %v717
        %1552 = vmatpush.msra.mxu0 %v716
        %1553 = vmatmul.f32.gmra.mxu0 %v1535
        %v1554 = vpop.f32.mrf.mxu0
        %v1555 = vadd.f32 0.0, %v1554
        %1556 = vdwg.mxu0
        %v1557 = vadd.f32 %v1534, %v1555
        %v1558 = vld [vmem:[%s858 + $0x8] sm:$0xff]
        %v1559 = vsel %vm725, %v1530, 0
        %1561 = vmatpush.msra.mxu0 0.0
        %1562 = vmatpush.msra.mxu0 0.0
        %1563 = vmatpush.msra.mxu0 0.0
        %1564 = vmatpush.msra.mxu0 0.0
        %1565 = vmatpush.msra.mxu0 0.0
        %1566 = vmatpush.msra.mxu0 0.0
        %1567 = vmatpush.msra.mxu0 0.0
        %1568 = vmatpush.msra.mxu0 0.0
        %1569 = vmatpush.msra.mxu0 0.0
        %1570 = vmatpush.msra.mxu0 0.0
        %1571 = vmatpush.msra.mxu0 0.0
        %1572 = vmatpush.msra.mxu0 0.0
        %1573 = vmatpush.msra.mxu0 %v723
        %1574 = vmatpush.msra.mxu0 %v722
        %1575 = vmatpush.msra.mxu0 %v721
        %1576 = vmatpush.msra.mxu0 %v720
        %1577 = vmatmul.f32.gmra.mxu0 %v1559
        %v1578 = vpop.f32.mrf.mxu0
        %v1579 = vadd.f32 0.0, %v1578
        %1580 = vdwg.mxu0
        %v1581 = vadd.f32 %v1558, %v1579
        %v1582 = vxor.u32 %v1557, 2147483648
        %v1583 = vmul.f32 %v1582, 1.442695
        %v1584 = vpow.pop %v1583
        %v1585 = vadd.f32 %v1584, 1.0
        %v1586 = vrcp.pop %v1585
        %v1587 = vmul.f32 %v1585, %v1586
        %v1588 = vsub.f32 1.0, %v1587
        %v1589 = vmul.f32 %v1586, %v1588
        %v1590 = vadd.f32 %v1586, %v1589
        %vm1591 = vweird.f32 %v1585
        %vm1592 = vweird.f32 %v1586
        %vm1593 = vmor %vm1591, %vm1592
        %v1594 = vsel %vm1593, %v1586, %v1590
        %v1595 = vand.u32 2147483647, %v1585
        %vm1596 = vcmp.eq.f32.partialorder %v1595, 8.507059e+37
        %v1597 = vand.u32 %v1585, 2147483648
        %v1598 = vor.u32 1.1754944e-38, %v1597
        %v1599 = vsel %vm1596, %v1598, %v1594
        %v1600 = vmul.f32 1.0, %v1599
        %v1601 = vtanh.pop %v1557
        %v1602 = vmul.f32 %v1600, %v1478
        %1604 = vrot.lane.b32.xlu0 %v1601, 64
        %v1605 = vpop.permute.xlu0 %1604
        %v1607 = vmul.f32 %v1600, %v1605
        %1609 = vrot.lane.b32.xlu0 %v1607, 32
        %v1610 = vpop.permute.xlu0 %1609
        %v1612 = vadd.f32 %v1602, %v1610
        %v1613 = vtanh.pop %v1612
        %1615 = vrot.lane.b32.xlu0 %v1613, 64
        %v1616 = vpop.permute.xlu0 %1615
        %v1618 = vmul.f32 %v1600, %v1616
        %1620 = vrot.lane.b32.xlu0 %v1618, 32
        %v1621 = vpop.permute.xlu0 %1620
        %s1623 = scalar_lea.vmem [#allocation3], 48
        %1624 = vst.msk [vmem:[%s1623] sm:$0xff] %vm725, %v1621
        %v1625 = vxor.u32 %v1581, 2147483648
        %v1626 = vmul.f32 %v1625, 1.442695
        %v1627 = vpow.pop %v1626
        %v1628 = vadd.f32 %v1627, 1.0
        %v1629 = vrcp.pop %v1628
        %v1630 = vmul.f32 %v1628, %v1629
        %v1631 = vsub.f32 1.0, %v1630
        %v1632 = vmul.f32 %v1629, %v1631
        %v1633 = vadd.f32 %v1629, %v1632
        %vm1634 = vweird.f32 %v1628
        %vm1635 = vweird.f32 %v1629
        %vm1636 = vmor %vm1634, %vm1635
        %v1637 = vsel %vm1636, %v1629, %v1633
        %v1638 = vand.u32 2147483647, %v1628
        %vm1639 = vcmp.eq.f32.partialorder %v1638, 8.507059e+37
        %v1640 = vand.u32 %v1628, 2147483648
        %v1641 = vor.u32 1.1754944e-38, %v1640
        %v1642 = vsel %vm1639, %v1641, %v1637
        %v1643 = vmul.f32 1.0, %v1642
        %v1644 = vtanh.pop %v1581
        %v1645 = vmul.f32 %v1643, %v1521
        %1647 = vrot.lane.b32.xlu0 %v1644, 64
        %v1648 = vpop.permute.xlu0 %1647
        %v1650 = vmul.f32 %v1643, %v1648
        %1652 = vrot.lane.b32.xlu0 %v1650, 32
        %v1653 = vpop.permute.xlu0 %1652
        %v1655 = vadd.f32 %v1645, %v1653
        %v1656 = vtanh.pop %v1655
        %1658 = vrot.lane.b32.xlu0 %v1656, 64
        %v1659 = vpop.permute.xlu0 %1658
        %v1661 = vmul.f32 %v1643, %v1659
        %1663 = vrot.lane.b32.xlu0 %v1661, 32
        %v1664 = vpop.permute.xlu0 %1663
        %s1666 = scalar_lea.vmem [#allocation4], 8
        %1667 = vst.msk [vmem:[%s1666] sm:$0xff] %vm725, %v1664
        %v1668 = vld [vmem:[%s750] sm:$0xff]
        %v1669 = vsel %vm725, %v1621, 0
        %1671 = vmatpush.msra.mxu0 0.0
        %1672 = vmatpush.msra.mxu0 0.0
        %1673 = vmatpush.msra.mxu0 0.0
        %1674 = vmatpush.msra.mxu0 0.0
        %1675 = vmatpush.msra.mxu0 0.0
        %1676 = vmatpush.msra.mxu0 0.0
        %1677 = vmatpush.msra.mxu0 0.0
        %1678 = vmatpush.msra.mxu0 0.0
        %1679 = vmatpush.msra.mxu0 0.0
        %1680 = vmatpush.msra.mxu0 0.0
        %1681 = vmatpush.msra.mxu0 0.0
        %1682 = vmatpush.msra.mxu0 0.0
        %1683 = vmatpush.msra.mxu0 %v719
        %1684 = vmatpush.msra.mxu0 %v718
        %1685 = vmatpush.msra.mxu0 %v717
        %1686 = vmatpush.msra.mxu0 %v716
        %1687 = vmatmul.f32.gmra.mxu0 %v1669
        %v1688 = vpop.f32.mrf.mxu0
        %v1689 = vadd.f32 0.0, %v1688
        %1690 = vdwg.mxu0
        %v1691 = vadd.f32 %v1668, %v1689
        %v1692 = vld [vmem:[#allocation2 + $0x8] sm:$0xff]
        %v1693 = vsel %vm725, %v1664, 0
        %1695 = vmatpush.msra.mxu0 0.0
        %1696 = vmatpush.msra.mxu0 0.0
        %1697 = vmatpush.msra.mxu0 0.0
        %1698 = vmatpush.msra.mxu0 0.0
        %1699 = vmatpush.msra.mxu0 0.0
        %1700 = vmatpush.msra.mxu0 0.0
        %1701 = vmatpush.msra.mxu0 0.0
        %1702 = vmatpush.msra.mxu0 0.0
        %1703 = vmatpush.msra.mxu0 0.0
        %1704 = vmatpush.msra.mxu0 0.0
        %1705 = vmatpush.msra.mxu0 0.0
        %1706 = vmatpush.msra.mxu0 0.0
        %1707 = vmatpush.msra.mxu0 %v723
        %1708 = vmatpush.msra.mxu0 %v722
        %1709 = vmatpush.msra.mxu0 %v721
        %1710 = vmatpush.msra.mxu0 %v720
        %1711 = vmatmul.f32.gmra.mxu0 %v1693
        %v1712 = vpop.f32.mrf.mxu0
        %v1713 = vadd.f32 0.0, %v1712
        %1714 = vdwg.mxu0
        %v1715 = vadd.f32 %v1692, %v1713
        %v1716 = vxor.u32 %v1691, 2147483648
        %v1717 = vmul.f32 %v1716, 1.442695
        %v1718 = vpow.pop %v1717
        %v1719 = vadd.f32 %v1718, 1.0
        %v1720 = vrcp.pop %v1719
        %v1721 = vmul.f32 %v1719, %v1720
        %v1722 = vsub.f32 1.0, %v1721
        %v1723 = vmul.f32 %v1720, %v1722
        %v1724 = vadd.f32 %v1720, %v1723
        %vm1725 = vweird.f32 %v1719
        %vm1726 = vweird.f32 %v1720
        %vm1727 = vmor %vm1725, %vm1726
        %v1728 = vsel %vm1727, %v1720, %v1724
        %v1729 = vand.u32 2147483647, %v1719
        %vm1730 = vcmp.eq.f32.partialorder %v1729, 8.507059e+37
        %v1731 = vand.u32 %v1719, 2147483648
        %v1732 = vor.u32 1.1754944e-38, %v1731
        %v1733 = vsel %vm1730, %v1732, %v1728
        %v1734 = vmul.f32 1.0, %v1733
        %v1735 = vtanh.pop %v1691
        %v1736 = vmul.f32 %v1734, %v1612
        %1738 = vrot.lane.b32.xlu0 %v1735, 64
        %v1739 = vpop.permute.xlu0 %1738
        %v1741 = vmul.f32 %v1734, %v1739
        %1743 = vrot.lane.b32.xlu0 %v1741, 32
        %v1744 = vpop.permute.xlu0 %1743
        %v1746 = vadd.f32 %v1736, %v1744
        %v1747 = vtanh.pop %v1746
        %1749 = vrot.lane.b32.xlu0 %v1747, 64
        %v1750 = vpop.permute.xlu0 %1749
        %v1752 = vmul.f32 %v1734, %v1750
        %1754 = vrot.lane.b32.xlu0 %v1752, 32
        %v1755 = vpop.permute.xlu0 %1754
        %s1757 = scalar_lea.vmem [#allocation3], 56
        %1758 = vst.msk [vmem:[%s1757] sm:$0xff] %vm725, %v1755
        %v1759 = vxor.u32 %v1715, 2147483648
        %v1760 = vmul.f32 %v1759, 1.442695
        %v1761 = vpow.pop %v1760
        %v1762 = vadd.f32 %v1761, 1.0
        %v1763 = vrcp.pop %v1762
        %v1764 = vmul.f32 %v1762, %v1763
        %v1765 = vsub.f32 1.0, %v1764
        %v1766 = vmul.f32 %v1763, %v1765
        %v1767 = vadd.f32 %v1763, %v1766
        %vm1768 = vweird.f32 %v1762
        %vm1769 = vweird.f32 %v1763
        %vm1770 = vmor %vm1768, %vm1769
        %v1771 = vsel %vm1770, %v1763, %v1767
        %v1772 = vand.u32 2147483647, %v1762
        %vm1773 = vcmp.eq.f32.partialorder %v1772, 8.507059e+37
        %v1774 = vand.u32 %v1762, 2147483648
        %v1775 = vor.u32 1.1754944e-38, %v1774
        %v1776 = vsel %vm1773, %v1775, %v1771
        %v1777 = vmul.f32 1.0, %v1776
        %v1778 = vtanh.pop %v1715
        %v1779 = vmul.f32 %v1777, %v1655
        %1781 = vrot.lane.b32.xlu0 %v1778, 64
        %v1782 = vpop.permute.xlu0 %1781
        %v1784 = vmul.f32 %v1777, %v1782
        %1786 = vrot.lane.b32.xlu0 %v1784, 32
        %v1787 = vpop.permute.xlu0 %1786
        %v1789 = vadd.f32 %v1779, %v1787
        %v1790 = vtanh.pop %v1789
        %1792 = vrot.lane.b32.xlu0 %v1790, 64
        %v1793 = vpop.permute.xlu0 %1792
        %v1795 = vmul.f32 %v1777, %v1793
        %1797 = vrot.lane.b32.xlu0 %v1795, 32
        %v1798 = vpop.permute.xlu0 %1797
        %1800 = vst.msk [vmem:[#allocation4] sm:$0xff] %vm725, %v1798
        %v1801 = vld [vmem:[#allocation3] sm:$0xff]
        %v1802 = vld [vmem:[#allocation3 + $0x8] sm:$0xff]
        %v1803 = vld [vmem:[#allocation3 + $0x10] sm:$0xff]
        %v1804 = vld [vmem:[#allocation3 + $0x18] sm:$0xff]
        %v1805 = vld [vmem:[#allocation3 + $0x20] sm:$0xff]
        %v1806 = vld [vmem:[#allocation3 + $0x28] sm:$0xff]
        %v1807 = vld [vmem:[#allocation3 + $0x30] sm:$0xff]
        %v1808 = vld [vmem:[#allocation3 + $0x38] sm:$0xff]
        %v1809 = vld [vmem:[#allocation4] sm:$0xff]
        %v1810 = vld [vmem:[#allocation4 + $0x8] sm:$0xff]
        %v1811 = vld [vmem:[#allocation4 + $0x10] sm:$0xff]
        %v1812 = vld [vmem:[#allocation4 + $0x18] sm:$0xff]
        %v1813 = vld [vmem:[#allocation4 + $0x20] sm:$0xff]
        %v1814 = vld [vmem:[#allocation4 + $0x28] sm:$0xff]
        %v1815 = vld [vmem:[#allocation4 + $0x30] sm:$0xff]
        %v1816 = vld [vmem:[#allocation4 + $0x38] sm:$0xff]
        %v1817 = vld [vmem:[%s8] sm:$0xff]
        %v1818 = vld [vmem:[%s8 + $0x8] sm:$0xff]
        %v1819 = vld [vmem:[%s8 + $0x10] sm:$0xff]
        %v1820 = vld [vmem:[%s8 + $0x18] sm:$0xff]
        %v1821 = vld [vmem:[%s9] sm:$0xff]
        %v1822 = vld [vmem:[%s9 + $0x8] sm:$0xff]
        %v1823 = vld [vmem:[%s9 + $0x10] sm:$0xff]
        %v1824 = vld [vmem:[%s9 + $0x18] sm:$0xff]
        %v1826 = vsel %vm725, %v1809, 0
        %v1829 = vsel %vm725, %v1810, 0
        %v1832 = vsel %vm725, %v1811, 0
        %v1835 = vsel %vm725, %v1812, 0
        %v1838 = vsel %vm725, %v1813, 0
        %v1841 = vsel %vm725, %v1814, 0
        %v1844 = vsel %vm725, %v1815, 0
        %v1847 = vsel %vm725, %v1816, 0
        %1849 = vmatpush.msra.mxu0 0.0
        %1850 = vmatpush.msra.mxu0 0.0
        %1851 = vmatpush.msra.mxu0 0.0
        %1852 = vmatpush.msra.mxu0 0.0
        %1853 = vmatpush.msra.mxu0 0.0
        %1854 = vmatpush.msra.mxu0 0.0
        %1855 = vmatpush.msra.mxu0 0.0
        %1856 = vmatpush.msra.mxu0 0.0
        %1857 = vmatpush.msra.mxu0 0.0
        %1858 = vmatpush.msra.mxu0 0.0
        %1859 = vmatpush.msra.mxu0 0.0
        %1860 = vmatpush.msra.mxu0 0.0
        %1861 = vmatpush.msra.mxu0 %v1824
        %1862 = vmatpush.msra.mxu0 %v1823
        %1863 = vmatpush.msra.mxu0 %v1822
        %1864 = vmatpush.msra.mxu0 %v1821
        %1865 = vmatmul.f32.gmra.mxu0 %v1826
        %v1866 = vpop.f32.mrf.mxu0
        %v1867 = vadd.f32 0.0, %v1866
        %1868 = vmatmul.f32.gmra.mxu0 %v1829
        %v1869 = vpop.f32.mrf.mxu0
        %v1870 = vadd.f32 0.0, %v1869
        %1871 = vmatmul.f32.gmra.mxu0 %v1832
        %v1872 = vpop.f32.mrf.mxu0
        %v1873 = vadd.f32 0.0, %v1872
        %1874 = vmatmul.f32.gmra.mxu0 %v1835
        %v1875 = vpop.f32.mrf.mxu0
        %v1876 = vadd.f32 0.0, %v1875
        %1877 = vmatmul.f32.gmra.mxu0 %v1838
        %v1878 = vpop.f32.mrf.mxu0
        %v1879 = vadd.f32 0.0, %v1878
        %1880 = vmatmul.f32.gmra.mxu0 %v1841
        %v1881 = vpop.f32.mrf.mxu0
        %v1882 = vadd.f32 0.0, %v1881
        %1883 = vmatmul.f32.gmra.mxu0 %v1844
        %v1884 = vpop.f32.mrf.mxu0
        %v1885 = vadd.f32 0.0, %v1884
        %1886 = vmatmul.f32.gmra.mxu0 %v1847
        %v1887 = vpop.f32.mrf.mxu0
        %v1888 = vadd.f32 0.0, %v1887
        %1889 = vdwg.mxu0
        %v1891 = vsel %vm725, %v1801, 0
        %v1894 = vsel %vm725, %v1802, 0
        %v1897 = vsel %vm725, %v1803, 0
        %v1900 = vsel %vm725, %v1804, 0
        %v1903 = vsel %vm725, %v1805, 0
        %v1906 = vsel %vm725, %v1806, 0
        %v1909 = vsel %vm725, %v1807, 0
        %v1912 = vsel %vm725, %v1808, 0
        %1914 = vmatpush.msra.mxu0 0.0
        %1915 = vmatpush.msra.mxu0 0.0
        %1916 = vmatpush.msra.mxu0 0.0
        %1917 = vmatpush.msra.mxu0 0.0
        %1918 = vmatpush.msra.mxu0 0.0
        %1919 = vmatpush.msra.mxu0 0.0
        %1920 = vmatpush.msra.mxu0 0.0
        %1921 = vmatpush.msra.mxu0 0.0
        %1922 = vmatpush.msra.mxu0 0.0
        %1923 = vmatpush.msra.mxu0 0.0
        %1924 = vmatpush.msra.mxu0 0.0
        %1925 = vmatpush.msra.mxu0 0.0
        %1926 = vmatpush.msra.mxu0 %v1820
        %1927 = vmatpush.msra.mxu0 %v1819
        %1928 = vmatpush.msra.mxu0 %v1818
        %1929 = vmatpush.msra.mxu0 %v1817
        %1930 = vmatmul.f32.gmra.mxu0 %v1891
        %v1931 = vpop.f32.mrf.mxu0
        %v1932 = vadd.f32 %v1867, %v1931
        %1933 = vmatmul.f32.gmra.mxu0 %v1894
        %v1934 = vpop.f32.mrf.mxu0
        %v1935 = vadd.f32 %v1870, %v1934
        %1936 = vmatmul.f32.gmra.mxu0 %v1897
        %v1937 = vpop.f32.mrf.mxu0
        %v1938 = vadd.f32 %v1873, %v1937
        %1939 = vmatmul.f32.gmra.mxu0 %v1900
        %v1940 = vpop.f32.mrf.mxu0
        %v1941 = vadd.f32 %v1876, %v1940
        %1942 = vmatmul.f32.gmra.mxu0 %v1903
        %v1943 = vpop.f32.mrf.mxu0
        %v1944 = vadd.f32 %v1879, %v1943
        %1945 = vmatmul.f32.gmra.mxu0 %v1906
        %v1946 = vpop.f32.mrf.mxu0
        %v1947 = vadd.f32 %v1882, %v1946
        %1948 = vmatmul.f32.gmra.mxu0 %v1909
        %v1949 = vpop.f32.mrf.mxu0
        %v1950 = vadd.f32 %v1885, %v1949
        %1951 = vmatmul.f32.gmra.mxu0 %v1912
        %v1952 = vpop.f32.mrf.mxu0
        %v1953 = vadd.f32 %v1888, %v1952
        %1954 = vdwg.mxu0
        %v1955 = vld [vmem:[%s10] sm:$0x1]
        %v1957 = vperm.slane %v1955, 0
        %v1959 = vadd.f32 %v1932, %v1957
        %v1960 = vadd.f32 %v1935, %v1957
        %v1961 = vadd.f32 %v1938, %v1957
        %v1962 = vadd.f32 %v1941, %v1957
        %v1963 = vadd.f32 %v1944, %v1957
        %v1964 = vadd.f32 %v1947, %v1957
        %v1965 = vadd.f32 %v1950, %v1957
        %v1966 = vadd.f32 %v1953, %v1957
        %v1967 = vadd.f32 %v1959, %v444
        %v1968 = vadd.f32 %v1960, %v445
        %v1969 = vadd.f32 %v1961, %v446
        %v1970 = vadd.f32 %v1962, %v447
        %v1971 = vadd.f32 %v1963, %v448
        %v1972 = vadd.f32 %v1964, %v449
        %v1973 = vadd.f32 %v1965, %v450
        %v1974 = vadd.f32 %v1966, %v451
        %1975 = vst.msk [vmem:[%s443] sm:$0xff] %vm454, %v1967
        %1976 = vst.msk [vmem:[%s443 + $0x8] sm:$0xff] %vm454, %v1968
        %1977 = vst.msk [vmem:[%s443 + $0x10] sm:$0xff] %vm454, %v1969
        %1978 = vst.msk [vmem:[%s443 + $0x18] sm:$0xff] %vm454, %v1970
        %1979 = vst.msk [vmem:[%s443 + $0x20] sm:$0xff] %vm454, %v1971
        %1980 = vst.msk [vmem:[%s443 + $0x28] sm:$0xff] %vm454, %v1972
        %1981 = vst.msk [vmem:[%s443 + $0x30] sm:$0xff] %vm454, %v1973
        %1982 = vst.msk [vmem:[%s443 + $0x38] sm:$0xff] %vm454, %v1974
        %s1983 = sand.u32 %s266, 1
        %s1984 = sand.u32 %s266, 1
        %s1985 = smul.addr %s1984, 64
        %s1986 = scalar_lea.vmem [#allocation6], %s1985
        // Predicated region
        $region103: #{bsrnn_forward_pallas.4} parent=97 // pred_check
          %p1987 = pneg %p276
        $region104: #{bsrnn_forward_pallas.4} parent=97 // pred_check_branch
          %1989 = sbr.rel (%p1987) target = $region106
        $region105: #{bsrnn_forward_pallas.4} parent=97 // pred_region
          %s1990 = smul.addr %s22, 8
          %s1991 = scalar_lea.vmem %s11, %s1990
          // Predicated region
          $region107: #{bsrnn_forward_pallas.4} parent=105 // pred_check
            _
          $region108: #{bsrnn_forward_pallas.4} parent=105 // pred_check_branch
            %1993 = sbr.rel (0) target = $region110
          $region109: #{bsrnn_forward_pallas.4} parent=105 // pred_region
            // Predicated region
            $region111: #{bsrnn_forward_pallas.4} parent=109 // pred_check
              _
            $region112: #{bsrnn_forward_pallas.4} parent=109 // pred_check_branch
              %1995 = sbr.rel (0) target = $region114
            $region113: #{bsrnn_forward_pallas.4} parent=109 // pred_region
              // Predicated region
              $region126: #{bsrnn_forward_pallas.4} parent=113 // pred_check
                _
              $region127: #{bsrnn_forward_pallas.4} parent=113 // pred_check_branch
                %2025 = sbr.rel (0) target = $region129
              $region128: #{bsrnn_forward_pallas.4} parent=113 // pred_region
                loop: start=0, step=1, limit=1
                $region130: #{bsrnn_forward_pallas.4} parent=128 // loop_pre_header
                  _
                $region131: #{bsrnn_forward_pallas.4} parent=128 // loop_header
                  %s2027 = sphi 0, %s2031
                  %p2028 = scmp.ge.s32.totalorder %s2027, 1
                  %s2032 = sphi %s1986, %s1986
                  %s2033 = sphi %s1991, %s1991
                $region132: #{bsrnn_forward_pallas.4} parent=128 // loop_header_branch
                  %2030 = sbr.rel (%p2028) target = $region136
                $region133: #{bsrnn_forward_pallas.4} parent=128 // loop_body
                  %v2034 = vld [vmem:[%s2032] sm:$0xff]
                  %2035 = vst [vmem:[%s2033] sm:$0xff] %v2034
                  %v2036 = vld [vmem:[%s2032 + $0x8] sm:$0xff]
                  %2037 = vst [vmem:[%s2033 + $0x10] sm:$0xff] %v2036
                  %v2038 = vld [vmem:[%s2032 + $0x10] sm:$0xff]
                  %2039 = vst [vmem:[%s2033 + $0x20] sm:$0xff] %v2038
                  %v2040 = vld [vmem:[%s2032 + $0x18] sm:$0xff]
                  %2041 = vst [vmem:[%s2033 + $0x30] sm:$0xff] %v2040
                  %v2042 = vld [vmem:[%s2032 + $0x20] sm:$0xff]
                  %2043 = vst [vmem:[%s2033 + $0x40] sm:$0xff] %v2042
                  %v2044 = vld [vmem:[%s2032 + $0x28] sm:$0xff]
                  %2045 = vst [vmem:[%s2033 + $0x50] sm:$0xff] %v2044
                  %v2046 = vld [vmem:[%s2032 + $0x30] sm:$0xff]
                  %2047 = vst [vmem:[%s2033 + $0x60] sm:$0xff] %v2046
                  %v2048 = vld [vmem:[%s2032 + $0x38] sm:$0xff]
                  %2049 = vst [vmem:[%s2033 + $0x70] sm:$0xff] %v2048
                $region134: #{bsrnn_forward_pallas.4} parent=128 // loop_footer
                  %s2031 = sadd.s32 1, %s2027
                $region135: #{bsrnn_forward_pallas.4} parent=128 // loop_footer_branch
                  %2026 = sbr.rel target = $region131
                $region136: #{bsrnn_forward_pallas.4} parent=128 // loop_exit
                  _
              $region129: #{bsrnn_forward_pallas.4} parent=113 // pred_fallthru
                _
              // Predicated region
              $region137: #{bsrnn_forward_pallas.4} parent=113 // pred_check
                _
              $region138: #{bsrnn_forward_pallas.4} parent=113 // pred_check_branch
                %2051 = sbr.rel target = $region140
              $region139: #{bsrnn_forward_pallas.4} parent=113 // pred_region
                _
              $region140: #{bsrnn_forward_pallas.4} parent=113 // pred_fallthru
                _
            $region114: #{bsrnn_forward_pallas.4} parent=109 // pred_fallthru
              _
            // Predicated region
            $region115: #{bsrnn_forward_pallas.4} parent=109 // pred_check
              _
            $region116: #{bsrnn_forward_pallas.4} parent=109 // pred_check_branch
              %1997 = sbr.rel target = $region118
            $region117: #{bsrnn_forward_pallas.4} parent=109 // pred_region
              %s1999 = ssub.s32 256, 1
              loop: start=0, step=1, limit=1
              $region119: #{bsrnn_forward_pallas.4} parent=117 // loop_pre_header
                _
              $region120: #{bsrnn_forward_pallas.4} parent=117 // loop_header
                %s2001 = sphi 0, %s2005
                %p2002 = scmp.ge.s32.totalorder %s2001, 1
                %s2006 = sphi %s1986, %s1986
                %s2007 = sphi %s1991, %s1991
              $region121: #{bsrnn_forward_pallas.4} parent=117 // loop_header_branch
                %2004 = sbr.rel (%p2002) target = $region125
              $region122: #{bsrnn_forward_pallas.4} parent=117 // loop_body
                %v2008 = vld [vmem:[%s2006] sm:%s1999]
                %2009 = vst [vmem:[%s2007] sm:%s1999] %v2008
                %v2010 = vld [vmem:[%s2006 + $0x8] sm:%s1999]
                %2011 = vst [vmem:[%s2007 + $0x10] sm:%s1999] %v2010
                %v2012 = vld [vmem:[%s2006 + $0x10] sm:%s1999]
                %2013 = vst [vmem:[%s2007 + $0x20] sm:%s1999] %v2012
                %v2014 = vld [vmem:[%s2006 + $0x18] sm:%s1999]
                %2015 = vst [vmem:[%s2007 + $0x30] sm:%s1999] %v2014
                %v2016 = vld [vmem:[%s2006 + $0x20] sm:%s1999]
                %2017 = vst [vmem:[%s2007 + $0x40] sm:%s1999] %v2016
                %v2018 = vld [vmem:[%s2006 + $0x28] sm:%s1999]
                %2019 = vst [vmem:[%s2007 + $0x50] sm:%s1999] %v2018
                %v2020 = vld [vmem:[%s2006 + $0x30] sm:%s1999]
                %2021 = vst [vmem:[%s2007 + $0x60] sm:%s1999] %v2020
                %v2022 = vld [vmem:[%s2006 + $0x38] sm:%s1999]
                %2023 = vst [vmem:[%s2007 + $0x70] sm:%s1999] %v2022
              $region123: #{bsrnn_forward_pallas.4} parent=117 // loop_footer
                %s2005 = sadd.s32 1, %s2001
              $region124: #{bsrnn_forward_pallas.4} parent=117 // loop_footer_branch
                %2000 = sbr.rel target = $region120
              $region125: #{bsrnn_forward_pallas.4} parent=117 // loop_exit
                _
            $region118: #{bsrnn_forward_pallas.4} parent=109 // pred_fallthru
              _
          $region110: #{bsrnn_forward_pallas.4} parent=105 // pred_fallthru
            _
          %2052 = vnop
        $region106: #{bsrnn_forward_pallas.4} parent=97 // pred_fallthru
          _
      $region98: #{bsrnn_forward_pallas.4} parent=5 // pred_fallthru
        _
      %p2053 = scmp.le.s32.totalorder 2, %s17
      // Predicated region
      $region141: #{bsrnn_forward_pallas.4} parent=5 // pred_check
        %p2054 = pneg %p2053
      $region142: #{bsrnn_forward_pallas.4} parent=5 // pred_check_branch
        %2056 = sbr.rel (%p2054) target = $region144
      $region143: #{bsrnn_forward_pallas.4} parent=5 // pred_region
        %s2057 = ssub.s32 %s17, 2
        // Predicated region
        $region145: #{bsrnn_forward_pallas.4} parent=143 // pred_check
          %p2058 = pneg %p282
        $region146: #{bsrnn_forward_pallas.4} parent=143 // pred_check_branch
          %2060 = sbr.rel (%p2058) target = $region148
        $region147: #{bsrnn_forward_pallas.4} parent=143 // pred_region
          %s2061 = sand.u32 %s267, 1
          %s2062 = sand.u32 %s267, 1
          %s2063 = smul.addr %s2062, 64
          %s2064 = scalar_lea.vmem [#allocation6], %s2063
        $region148: #{bsrnn_forward_pallas.4} parent=143 // pred_fallthru
          _
      $region144: #{bsrnn_forward_pallas.4} parent=5 // pred_fallthru
        _
    $region6: #{bsrnn_forward_pallas.4} parent=1 // loop_footer
      %s21 = sadd.s32 1, %s17
    $region7: #{bsrnn_forward_pallas.4} parent=1 // loop_footer_branch
      %16 = sbr.rel target = $region3
    $region8: #{bsrnn_forward_pallas.4} parent=1 // loop_exit
      _

</llo_original>
